<compile_context>
chip_gen: v7x
topology: tpu7x:2x2x1
jax: 0.10.0
libtpu: 0.0.40
codegen_flags: <defaults>
</compile_context>

<pallas_src>
import functools
import math

import jax
import jax.numpy as jnp
import numpy as np
from jax.experimental import pallas as pl
from jax.experimental.pallas import tpu as pltpu

# Safe on v5e/v6e (128 MiB physical) and leaves headroom on v7x (64 MiB physical);
# all kernels below keep working sets well under this.
_VMEM_LIMIT = 48 * 1024 * 1024


# ----------------------------------------------------------------------------
# Tiling helper
# ----------------------------------------------------------------------------
def _tile(n, target, mult):
    """Largest divisor of n that is a multiple of `mult` and <= target; else n."""
    if n <= target:
        return n
    t = (target // mult) * mult
    while t >= mult:
        if n % t == 0:
            return t
        t -= mult
    return n


# ----------------------------------------------------------------------------
# Tiled linear (+ optional fused tanh-GELU epilogue)
# ----------------------------------------------------------------------------
def _linear_kernel(x_ref, w_ref, b_ref, o_ref, acc_ref, *, activation):
    k = pl.program_id(2)

    @pl.when(k == 0)
    def _():
        acc_ref[...] = jnp.zeros_like(acc_ref)

    acc_ref[...] += jnp.dot(x_ref[...], w_ref[...],
                            preferred_element_type=jnp.float32)

    @pl.when(k == pl.num_programs(2) - 1)
    def _():
        y = acc_ref[...] + b_ref[...]          # (tm,tn) + (1,tn), fp32
        if activation == "gelu_tanh":
            c = 0.7978845608028654             # sqrt(2/pi)
            y = 0.5 * y * (1.0 + jnp.tanh(c * (y + 0.044715 * y * y * y)))
        o_ref[...] = y.astype(o_ref.dtype)


def linear_pallas(x, w, b, activation=None, out_dtype=None):
    """x: [..., K], w: [K, N], b: [N]  ->  [..., N]."""
    lead = x.shape[:-1]
    K = x.shape[-1]
    N = w.shape[1]
    M = int(np.prod(lead))
    if out_dtype is None:
        out_dtype = x.dtype

    x2 = x.reshape(M, K).astype(jnp.bfloat16)
    wb = w.astype(jnp.bfloat16)
    b2 = b.reshape(1, N).astype(jnp.float32)

    tm = _tile(M, 512, 16)
    tn = _tile(N, 512, 128)
    tk = _tile(K, 512, 128)

    out = pl.pallas_call(
        functools.partial(_linear_kernel, activation=activation),
        out_shape=jax.ShapeDtypeStruct((M, N), out_dtype),
        grid=(M // tm, N // tn, K // tk),
        in_specs=[
            pl.BlockSpec((tm, tk), lambda i, j, k: (i, k)),
            pl.BlockSpec((tk, tn), lambda i, j, k: (k, j)),
            pl.BlockSpec((1, tn), lambda i, j, k: (0, j)),
        ],
        out_specs=pl.BlockSpec((tm, tn), lambda i, j, k: (i, j)),
        scratch_shapes=[pltpu.VMEM((tm, tn), jnp.float32)],
        compiler_params=pltpu.CompilerParams(
            dimension_semantics=("parallel", "parallel", "arbitrary"),
            vmem_limit_bytes=_VMEM_LIMIT),
    )(x2, wb, b2)
    return out.reshape(*lead, N)


# ----------------------------------------------------------------------------
# Linear with fused RMSNorm epilogue (norm_q / norm_k fused into q/k proj)
# ----------------------------------------------------------------------------
def _linear_rmsnorm_kernel(x_ref, w_ref, b_ref, g_ref, o_ref, acc_ref, *, eps):
    k = pl.program_id(1)

    @pl.when(k == 0)
    def _():
        acc_ref[...] = jnp.zeros_like(acc_ref)

    acc_ref[...] += jnp.dot(x_ref[...], w_ref[...],
                            preferred_element_type=jnp.float32)

    @pl.when(k == pl.num_programs(1) - 1)
    def _():
        y = acc_ref[...] + b_ref[...]                       # (tm, N) fp32
        ms = jnp.mean(y * y, axis=-1, keepdims=True)        # full-N reduction
        o_ref[...] = (y * jax.lax.rsqrt(ms + eps) * g_ref[...]).astype(o_ref.dtype)


def linear_rmsnorm_pallas(x, w, b, g, eps=1e-6, out_dtype=None):
    """RMSNorm(x @ w + b) * g.  Requires the full N (=dim) in one tile."""
    lead = x.shape[:-1]
    K = x.shape[-1]
    N = w.shape[1]
    M = int(np.prod(lead))
    if out_dtype is None:
        out_dtype = x.dtype

    x2 = x.reshape(M, K).astype(jnp.bfloat16)
    wb = w.astype(jnp.bfloat16)
    b2 = b.reshape(1, N).astype(jnp.float32)
    g2 = g.reshape(1, N).astype(jnp.float32)

    # tm kept at 256: full-N acc/out/weight slabs must stay under v7x's 64 MiB VMEM.
    tm = _tile(M, 256, 16)
    tk = _tile(K, 512, 128)

    out = pl.pallas_call(
        functools.partial(_linear_rmsnorm_kernel, eps=eps),
        out_shape=jax.ShapeDtypeStruct((M, N), out_dtype),
        grid=(M // tm, K // tk),
        in_specs=[
            pl.BlockSpec((tm, tk), lambda i, k: (i, k)),
            pl.BlockSpec((tk, N), lambda i, k: (k, 0)),
            pl.BlockSpec((1, N), lambda i, k: (0, 0)),
            pl.BlockSpec((1, N), lambda i, k: (0, 0)),
        ],
        out_specs=pl.BlockSpec((tm, N), lambda i, k: (i, 0)),
        scratch_shapes=[pltpu.VMEM((tm, N), jnp.float32)],
        compiler_params=pltpu.CompilerParams(
            dimension_semantics=("parallel", "arbitrary"),
            vmem_limit_bytes=_VMEM_LIMIT),
    )(x2, wb, b2, g2)
    return out.reshape(*lead, N)


# ----------------------------------------------------------------------------
# Linear with fused "residual + (optional e-scale)" epilogue, N-tiled:
#   out = res + (h @ w + b) [* scale]
# ----------------------------------------------------------------------------
def _linear_residual_kernel(h_ref, w_ref, b_ref, res_ref, *rest, with_scale):
    if with_scale:
        scale_ref, o_ref, acc_ref = rest
    else:
        o_ref, acc_ref = rest
    k = pl.program_id(3)

    @pl.when(k == 0)
    def _():
        acc_ref[...] = jnp.zeros_like(acc_ref)

    acc_ref[...] += jnp.dot(h_ref[0], w_ref[...],
                            preferred_element_type=jnp.float32)

    @pl.when(k == pl.num_programs(3) - 1)
    def _():
        y = acc_ref[...] + b_ref[...]
        if with_scale:
            y = y * scale_ref[0]                 # (tl,tn) * (1,tn)
        o_ref[0] = (res_ref[0].astype(jnp.float32) + y).astype(o_ref.dtype)


def linear_residual_pallas(h, w, b, res, scale=None):
    """h: [B, L, K]; w: [K, N]; b: [N]; res: [B, L, N]; scale: [B, 1, N] or None."""
    B, L, K = h.shape
    N = w.shape[1]
    out_dtype = res.dtype

    hb = h.astype(jnp.bfloat16)
    wb = w.astype(jnp.bfloat16)
    b2 = b.reshape(1, N).astype(jnp.float32)

    tl = _tile(L, 512, 16)
    tn = _tile(N, 512, 128)
    tk = _tile(K, 512, 128)

    in_specs = [
        pl.BlockSpec((1, tl, tk), lambda bb, i, j, k: (bb, i, k)),
        pl.BlockSpec((tk, tn), lambda bb, i, j, k: (k, j)),
        pl.BlockSpec((1, tn), lambda bb, i, j, k: (0, j)),
        pl.BlockSpec((1, tl, tn), lambda bb, i, j, k: (bb, i, j)),
    ]
    args = [hb, wb, b2, res]                    # res in native dtype (cast in-kernel)
    if scale is not None:
        in_specs.append(pl.BlockSpec((1, 1, tn), lambda bb, i, j, k: (bb, 0, j)))
        args.append(scale.astype(jnp.float32))

    return pl.pallas_call(
        functools.partial(_linear_residual_kernel, with_scale=scale is not None),
        out_shape=jax.ShapeDtypeStruct((B, L, N), out_dtype),
        grid=(B, L // tl, N // tn, K // tk),
        in_specs=in_specs,
        out_specs=pl.BlockSpec((1, tl, tn), lambda bb, i, j, k: (bb, i, j)),
        scratch_shapes=[pltpu.VMEM((tl, tn), jnp.float32)],
        compiler_params=pltpu.CompilerParams(
            dimension_semantics=("parallel", "parallel", "parallel", "arbitrary"),
            vmem_limit_bytes=_VMEM_LIMIT),
    )(*args)


# ----------------------------------------------------------------------------
# LayerNorm (no affine) + per-batch modulation: y*(1+scale)+shift ; row-tiled.
# Emits bf16 so downstream matmuls need no XLA cast pass.
# ----------------------------------------------------------------------------
def _ln_mod_kernel(x_ref, scale_ref, shift_ref, o_ref, *, eps):
    x = x_ref[0].astype(jnp.float32)                       # (tl, C)
    mu = jnp.mean(x, axis=-1, keepdims=True)
    var = jnp.mean((x - mu) ** 2, axis=-1, keepdims=True)
    y = (x - mu) * jax.lax.rsqrt(var + eps)
    o_ref[0] = (y * (1.0 + scale_ref[0]) + shift_ref[0]).astype(o_ref.dtype)


def layernorm_modulate_pallas(x, scale, shift, eps=1e-6, out_dtype=jnp.bfloat16):
    """x: [B, L, C]; scale, shift: [B, 1, C]."""
    B, L, C = x.shape
    tl = _tile(L, 512, 16)
    return pl.pallas_call(
        functools.partial(_ln_mod_kernel, eps=eps),
        out_shape=jax.ShapeDtypeStruct((B, L, C), out_dtype),
        grid=(B, L // tl),
        in_specs=[
            pl.BlockSpec((1, tl, C), lambda b, i: (b, i, 0)),
            pl.BlockSpec((1, 1, C), lambda b, i: (b, 0, 0)),
            pl.BlockSpec((1, 1, C), lambda b, i: (b, 0, 0)),
        ],
        out_specs=pl.BlockSpec((1, tl, C), lambda b, i: (b, i, 0)),
        compiler_params=pltpu.CompilerParams(
            dimension_semantics=("parallel", "parallel"),
            vmem_limit_bytes=_VMEM_LIMIT),
    )(x, scale.astype(jnp.float32), shift.astype(jnp.float32))


def _ln_affine_kernel(x_ref, w_ref, b_ref, o_ref, *, eps):
    x = x_ref[0].astype(jnp.float32)                       # (tl, C)
    mu = jnp.mean(x, axis=-1, keepdims=True)
    var = jnp.mean((x - mu) ** 2, axis=-1, keepdims=True)
    y = (x - mu) * jax.lax.rsqrt(var + eps)
    o_ref[0] = (y * w_ref[...] + b_ref[...]).astype(o_ref.dtype)


def layernorm_affine_pallas(x, w, b, eps=1e-6, out_dtype=jnp.bfloat16):
    """LayerNorm with elementwise affine. x: [B, L, C]; w, b: [C]."""
    B, L, C = x.shape
    tl = _tile(L, 512, 16)
    return pl.pallas_call(
        functools.partial(_ln_affine_kernel, eps=eps),
        out_shape=jax.ShapeDtypeStruct((B, L, C), out_dtype),
        grid=(B, L // tl),
        in_specs=[
            pl.BlockSpec((1, tl, C), lambda b, i: (b, i, 0)),
            pl.BlockSpec((1, C), lambda b, i: (0, 0)),
            pl.BlockSpec((1, C), lambda b, i: (0, 0)),
        ],
        out_specs=pl.BlockSpec((1, tl, C), lambda b, i: (b, i, 0)),
        compiler_params=pltpu.CompilerParams(
            dimension_semantics=("parallel", "parallel"),
            vmem_limit_bytes=_VMEM_LIMIT),
    )(x, w.reshape(1, C).astype(jnp.float32), b.reshape(1, C).astype(jnp.float32))


# ----------------------------------------------------------------------------
# Flash-style multi-head attention (online softmax, tiled over Lq and Lk).
# q must already carry the 1/sqrt(D) scale (folded into norm_q gamma upstream).
# ----------------------------------------------------------------------------
def _flash_attn_kernel(q_ref, k_ref, v_ref, o_ref, m_ref, l_ref, acc_ref, *, kv_axis):
    j = pl.program_id(kv_axis)

    @pl.when(j == 0)
    def _():
        m_ref[...] = jnp.full(m_ref.shape, -jnp.inf, jnp.float32)
        l_ref[...] = jnp.zeros_like(l_ref)
        acc_ref[...] = jnp.zeros_like(acc_ref)

    q = q_ref[0]                               # (tq, D) bf16 (pre-scaled)
    kk = k_ref[0]                              # (tk, D)
    vv = v_ref[0]                              # (tk, D)

    # Contract the last dims directly: no XLU transpose of the K tile per step.
    s = jax.lax.dot_general(q, kk, (((1,), (1,)), ((), ())),
                            preferred_element_type=jnp.float32)   # (tq, tk)
    m_prev = m_ref[...]
    m_new = jnp.maximum(m_prev, jnp.max(s, axis=-1, keepdims=True))
    alpha = jnp.exp(m_prev - m_new)
    p = jnp.exp(s - m_new)
    l_ref[...] = alpha * l_ref[...] + jnp.sum(p, axis=-1, keepdims=True)
    acc_ref[...] = alpha * acc_ref[...] + jnp.dot(
        p.astype(vv.dtype), vv, preferred_element_type=jnp.float32)
    m_ref[...] = m_new

    @pl.when(j == pl.num_programs(kv_axis) - 1)
    def _():
        o_ref[0] = (acc_ref[...] * pl.reciprocal(l_ref[...], approx=True)
                    ).astype(o_ref.dtype)


def attention_pallas(q, k, v, heads):
    """Multi-head SDPA (== optimized_attention, no mask).
    q: [B, Lq, C] (already scaled by 1/sqrt(D)); k, v: [B, Lk, C] -> [B, Lq, C]."""
    B, Lq, C = q.shape
    Lk = k.shape[1]
    D = C // heads
    out_dtype = q.dtype

    qh = q.astype(jnp.bfloat16)
    kh = k.astype(jnp.bfloat16)
    vh = v.astype(jnp.bfloat16)

    tq = _tile(Lq, 512, 16)
    tk = _tile(Lk, 512, 16)

    scratch = [
        pltpu.VMEM((tq, 1), jnp.float32),     # m
        pltpu.VMEM((tq, 1), jnp.float32),     # l
        pltpu.VMEM((tq, D), jnp.float32),     # acc
    ]

    if D % 128 == 0:
        # Lane-aligned head slices: index heads directly through the C axis of the
        # [B, L, C] layout — no XLA head split/merge transposes at all.
        out = pl.pallas_call(
            functools.partial(_flash_attn_kernel, kv_axis=3),
            out_shape=jax.ShapeDtypeStruct((B, Lq, C), out_dtype),
            grid=(B, heads, Lq // tq, Lk // tk),
            in_specs=[
                pl.BlockSpec((1, tq, D), lambda b, h, i, j: (b, i, h)),
                pl.BlockSpec((1, tk, D), lambda b, h, i, j: (b, j, h)),
                pl.BlockSpec((1, tk, D), lambda b, h, i, j: (b, j, h)),
            ],
            out_specs=pl.BlockSpec((1, tq, D), lambda b, h, i, j: (b, i, h)),
            scratch_shapes=scratch,
            compiler_params=pltpu.CompilerParams(
                dimension_semantics=("parallel", "parallel", "parallel", "arbitrary"),
                vmem_limit_bytes=_VMEM_LIMIT),
        )(qh, kh, vh)
        return out

    # Fallback for unaligned head_dim (e.g. tiny test shapes): XLA head split/merge.
    def split(t, L):
        return (t.reshape(B, L, heads, D).transpose(0, 2, 1, 3)
                 .reshape(B * heads, L, D))

    qh, kh, vh = split(qh, Lq), split(kh, Lk), split(vh, Lk)

    out = pl.pallas_call(
        functools.partial(_flash_attn_kernel, kv_axis=2),
        out_shape=jax.ShapeDtypeStruct((B * heads, Lq, D), out_dtype),
        grid=(B * heads, Lq // tq, Lk // tk),
        in_specs=[
            pl.BlockSpec((1, tq, D), lambda h, i, j: (h, i, 0)),
            pl.BlockSpec((1, tk, D), lambda h, i, j: (h, j, 0)),
            pl.BlockSpec((1, tk, D), lambda h, i, j: (h, j, 0)),
        ],
        out_specs=pl.BlockSpec((1, tq, D), lambda h, i, j: (h, i, 0)),
        scratch_shapes=scratch,
        compiler_params=pltpu.CompilerParams(
            dimension_semantics=("parallel", "parallel", "arbitrary"),
            vmem_limit_bytes=_VMEM_LIMIT),
    )(qh, kh, vh)
    return (out.reshape(B, heads, Lq, D).transpose(0, 2, 1, 3)
               .reshape(B, Lq, C))


# ----------------------------------------------------------------------------
# JAX glue (RoPE, attention sub-modules, block forward)
# ----------------------------------------------------------------------------
def apply_rope(q, k, freqs):
    """Interleaved complex-pair RoPE. q, k: [B, L, H, D]; freqs: [L, D//2] angles.
    # TODO(synk): fold RoPE into the flash-attention kernel (pltpu.roll rotate-half
    # with permuted cos/sin tables) to remove these extra [B,L,C] HBM passes.
    """
    cos = jnp.cos(freqs)[None, :, None, :]
    sin = jnp.sin(freqs)[None, :, None, :]

    def rot(t):
        B, L, H, D = t.shape
        dt = t.dtype
        tp = t.astype(jnp.float32).reshape(B, L, H, D // 2, 2)
        t0, t1 = tp[..., 0], tp[..., 1]
        r0 = t0 * cos - t1 * sin
        r1 = t0 * sin + t1 * cos
        return jnp.stack([r0, r1], axis=-1).reshape(B, L, H, D).astype(dt)

    return rot(q), rot(k)


def self_attention(p, x, freqs, num_heads, eps):
    B, L, C = x.shape
    D = C // num_heads
    scale = 1.0 / math.sqrt(D)
    # Fold the 1/sqrt(D) query scale into the RMSNorm gain (commutes with RoPE).
    q = linear_rmsnorm_pallas(x, p["q_w"], p["q_b"], p["norm_q_g"] * scale, eps,
                              out_dtype=jnp.bfloat16)
    k = linear_rmsnorm_pallas(x, p["k_w"], p["k_b"], p["norm_k_g"], eps,
                              out_dtype=jnp.bfloat16)
    v = linear_pallas(x, p["v_w"], p["v_b"], out_dtype=jnp.bfloat16)
    q4 = q.reshape(B, L, num_heads, D)
    k4 = k.reshape(B, L, num_heads, D)
    q4, k4 = apply_rope(q4, k4, freqs)
    return attention_pallas(q4.reshape(B, L, C), k4.reshape(B, L, C), v, num_heads)


def t2v_cross_attention(p, x, context, num_heads, eps):
    C = x.shape[-1]
    D = C // num_heads
    scale = 1.0 / math.sqrt(D)
    q = linear_rmsnorm_pallas(x, p["q_w"], p["q_b"], p["norm_q_g"] * scale, eps,
                              out_dtype=jnp.bfloat16)
    k = linear_rmsnorm_pallas(context, p["k_w"], p["k_b"], p["norm_k_g"], eps,
                              out_dtype=jnp.bfloat16)
    v = linear_pallas(context, p["v_w"], p["v_b"], out_dtype=jnp.bfloat16)
    return attention_pallas(q, k, v, num_heads)


def vace_wan_attention_block_forward(params, c, x, e, freqs, context,
                                     num_heads, eps=1e-6, block_id=0):
    """VaceWanAttentionBlock.forward (cross_attn_type='t2v_cross_attn').
    c, x: [B, L, C]; e: [B, 6, C]; freqs: [L, head_dim//2]; context: [B, L2, C].
    Returns (c_skip, c)."""
    if block_id == 0:
        # c = before_proj(c) + x   (residual fused into the matmul epilogue)
        c = linear_residual_pallas(c, params["before_proj_w"],
                                   params["before_proj_b"], res=x)

    # WanAttentionBlock.forward
    e_mod = params["modulation"].astype(jnp.float32) + e      # [B, 6, C]
    e_chunks = [e_mod[:, i:i + 1, :] for i in range(6)]

    # ---- self-attention branch ----
    h = layernorm_modulate_pallas(c, e_chunks[1], e_chunks[0], eps)
    sa = params["self_attn"]
    attn = self_attention(sa, h, freqs, num_heads, eps)
    # c = c + o(attn) * e2   (residual + scale fused into o-projection)
    c = linear_residual_pallas(attn, sa["o_w"], sa["o_b"], res=c,
                               scale=e_chunks[2])

    # ---- cross-attention branch (norm3 affine since cross_attn_norm=True) ----
    h3 = layernorm_affine_pallas(c, params["norm3_w"], params["norm3_b"], eps)
    ca = params["cross_attn"]
    attn_c = t2v_cross_attention(ca, h3, context, num_heads, eps)
    c = linear_residual_pallas(attn_c, ca["o_w"], ca["o_b"], res=c)

    # ---- FFN branch (GELU(tanh) fused into ffn1, residual*e5 into ffn2) ----
    h2 = layernorm_modulate_pallas(c, e_chunks[4], e_chunks[3], eps)
    y = linear_pallas(h2, params["ffn1_w"], params["ffn1_b"],
                      activation="gelu_tanh", out_dtype=jnp.bfloat16)
    c = linear_residual_pallas(y, params["ffn2_w"], params["ffn2_b"], res=c,
                               scale=e_chunks[5])

    c_skip = linear_pallas(c, params["after_proj_w"], params["after_proj_b"])
    return c_skip, c


# ----------------------------------------------------------------------------
# Deterministic parameter init (matmul weights in bf16, the rest in fp32)
# ----------------------------------------------------------------------------
def init_params(key, dim, ffn_dim):
    keys = jax.random.split(key, 32)
    ki = iter(range(32))

    def lin(k_w, k_b, d_in, d_out):
        w = (jax.random.normal(keys[k_w], (d_in, d_out), jnp.float32) * 0.02
             ).astype(jnp.bfloat16)
        b = jax.random.normal(keys[k_b], (d_out,), jnp.float32) * 0.01
        return w, b

    def attn_params():
        p = {}
        for name in ("q", "k", "v", "o"):
            w, b = lin(next(ki), next(ki), dim, dim)
            p[name + "_w"], p[name + "_b"] = w, b
        p["norm_q_g"] = jnp.ones((dim,), jnp.float32)
        p["norm_k_g"] = jnp.ones((dim,), jnp.float32)
        return p

    params = {}
    params["before_proj_w"], params["before_proj_b"] = lin(next(ki), next(ki), dim, dim)
    params["after_proj_w"], params["after_proj_b"] = lin(next(ki), next(ki), dim, dim)
    params["self_attn"] = attn_params()
    params["cross_attn"] = attn_params()
    params["norm3_w"] = jnp.ones((dim,), jnp.float32)
    params["norm3_b"] = jnp.zeros((dim,), jnp.float32)
    params["ffn1_w"], params["ffn1_b"] = lin(next(ki), next(ki), dim, ffn_dim)
    params["ffn2_w"], params["ffn2_b"] = lin(next(ki), next(ki), ffn_dim, dim)
    params["modulation"] = (
        jax.random.normal(keys[next(ki)], (1, 6, dim), jnp.float32) * 0.02)
    return params


# ----------------------------------------------------------------------------
# Main
# ----------------------------------------------------------------------------
if __name__ == "__main__":
    B, L, L2 = 2, 8, 8
    dim, ffn_dim, num_heads = 32, 64, 4
    head_dim = dim // num_heads

    key = jax.random.PRNGKey(0)
    kp, kc, kx, ke, kctx = jax.random.split(key, 5)

    params = init_params(kp, dim, ffn_dim)

    c = jax.random.normal(kc, (B, L, dim), jnp.float32)
    x = jax.random.normal(kx, (B, L, dim), jnp.float32)
    e = jax.random.normal(ke, (B, 6, dim), jnp.float32)
    context = jax.random.normal(kctx, (B, L2, dim), jnp.float32)

    # RoPE angles: [L, head_dim // 2]
    pos = jnp.arange(L, dtype=jnp.float32)[:, None]
    inv_freq = 1.0 / (10000.0 ** (
        jnp.arange(head_dim // 2, dtype=jnp.float32) * 2.0 / head_dim))
    freqs = pos * inv_freq[None, :]

    fwd = jax.jit(
        functools.partial(
            vace_wan_attention_block_forward,
            num_heads=num_heads,
            eps=1e-6,
            block_id=0,
        )
    )
    c_skip, c_out = fwd(params, c, x, e, freqs, context)
    jax.block_until_ready(c_skip)
    jax.block_until_ready(c_out)

    assert c_skip.shape == (B, L, dim) and c_out.shape == (B, L, dim)
    assert bool(jnp.all(jnp.isfinite(c_skip))) and bool(jnp.all(jnp.isfinite(c_out)))

    # --- also exercise the lane-aligned (head_dim % 128 == 0) direct attention path
    # --- and check it against a pure-JAX reference.
    Bd, Ld, Hd, Dd = 1, 128, 2, 128
    Cd = Hd * Dd
    kq, kk2, kv2 = jax.random.split(jax.random.PRNGKey(1), 3)
    qd = jax.random.normal(kq, (Bd, Ld, Cd), jnp.float32) * 0.5
    kd = jax.random.normal(kk2, (Bd, Ld, Cd), jnp.float32) * 0.5
    vd = jax.random.normal(kv2, (Bd, Ld, Cd), jnp.float32) * 0.5
    scale_d = 1.0 / math.sqrt(Dd)
    out_d = attention_pallas((qd * scale_d).astype(jnp.bfloat16),
                             kd.astype(jnp.bfloat16),
                             vd.astype(jnp.bfloat16), Hd)

    def ref_attn(q, k, v, heads):
        Br, Lr, Cr = q.shape
        Dr = Cr // heads
        qh = q.reshape(Br, Lr, heads, Dr).transpose(0, 2, 1, 3)
        kh = k.reshape(Br, Lr, heads, Dr).transpose(0, 2, 1, 3)
        vh = v.reshape(Br, Lr, heads, Dr).transpose(0, 2, 1, 3)
        s = jnp.einsum("bhqd,bhkd->bhqk", qh, kh) / math.sqrt(Dr)
        pr = jax.nn.softmax(s, axis=-1)
        o = jnp.einsum("bhqk,bhkd->bhqd", pr, vh)
        return o.transpose(0, 2, 1, 3).reshape(Br, Lr, Cr)

    ref = ref_attn(qd, kd, vd, Hd)
    err = float(jnp.max(jnp.abs(out_d.astype(jnp.float32) - ref)))
    assert err < 5e-2, f"direct-path attention mismatch: {err}"

    print("KERNEL_OK")
</pallas_src>

<mosaic_0001>
module attributes {stable_mosaic.version = 11 : i64} {
  func.func @_ln_mod_kernel(%arg0: i32, %arg1: i32, %arg2: memref<1x8x32xf32, #tpu.memory_space<vmem>>, %arg3: memref<1x1x32xf32, #tpu.memory_space<vmem>>, %arg4: memref<1x1x32xf32, #tpu.memory_space<vmem>>, %arg5: memref<1x8x32xbf16, #tpu.memory_space<vmem>>) attributes {dimension_semantics = [#tpu.dimension_semantics<parallel>, #tpu.dimension_semantics<parallel>], iteration_bounds = array<i64: 2, 1>, scalar_prefetch = 0 : i64, scratch_operands = 0 : i64, tpu.core_type = #tpu.core_type<tc>, window_params = [{transform_indices = @transform_0, window_bounds = array<i64: 1, 8, 32>}, {transform_indices = @transform_1, window_bounds = array<i64: 1, 1, 32>}, {transform_indices = @transform_2, window_bounds = array<i64: 1, 1, 32>}, {transform_indices = @transform_3, window_bounds = array<i64: 1, 8, 32>}]} {
    %c0 = arith.constant 0 : index
    %c0_0 = arith.constant 0 : index
    %c0_1 = arith.constant 0 : index
    %0 = vector.load %arg2[%c0, %c0_0, %c0_1] : memref<1x8x32xf32, #tpu.memory_space<vmem>>, vector<1x8x32xf32>
    %1 = vector.shape_cast %0 : vector<1x8x32xf32> to vector<8x32xf32>
    %cst = arith.constant dense<0.000000e+00> : vector<8xf32>
    %2 = vector.multi_reduction <add>, %1, %cst [1] : vector<8x32xf32> to vector<8xf32>
    %3 = vector.shape_cast %2 : vector<8xf32> to vector<8x1xf32>
    %cst_2 = arith.constant 3.200000e+01 : f32
    %4 = vector.broadcast %cst_2 : f32 to vector<8x1xf32>
    %5 = arith.divf %3, %4 : vector<8x1xf32>
    %6 = vector.broadcast %5 : vector<8x1xf32> to vector<8x32xf32>
    %7 = arith.subf %1, %6 : vector<8x32xf32>
    %8 = arith.mulf %7, %7 : vector<8x32xf32>
    %cst_3 = arith.constant dense<0.000000e+00> : vector<8xf32>
    %9 = vector.multi_reduction <add>, %8, %cst_3 [1] : vector<8x32xf32> to vector<8xf32>
    %10 = vector.shape_cast %9 : vector<8xf32> to vector<8x1xf32>
    %cst_4 = arith.constant 3.200000e+01 : f32
    %11 = vector.broadcast %cst_4 : f32 to vector<8x1xf32>
    %12 = arith.divf %10, %11 : vector<8x1xf32>
    %13 = vector.broadcast %5 : vector<8x1xf32> to vector<8x32xf32>
    %14 = arith.subf %1, %13 : vector<8x32xf32>
    %cst_5 = arith.constant 9.99999997E-7 : f32
    %15 = vector.broadcast %cst_5 : f32 to vector<8x1xf32>
    %16 = arith.addf %12, %15 : vector<8x1xf32>
    %17 = math.rsqrt %16 : vector<8x1xf32>
    %18 = vector.broadcast %17 : vector<8x1xf32> to vector<8x32xf32>
    %19 = arith.mulf %14, %18 : vector<8x32xf32>
    %c0_6 = arith.constant 0 : index
    %c0_7 = arith.constant 0 : index
    %c0_8 = arith.constant 0 : index
    %20 = vector.load %arg3[%c0_6, %c0_7, %c0_8] : memref<1x1x32xf32, #tpu.memory_space<vmem>>, vector<1x1x32xf32>
    %21 = vector.shape_cast %20 : vector<1x1x32xf32> to vector<1x32xf32>
    %cst_9 = arith.constant 1.000000e+00 : f32
    %22 = vector.broadcast %cst_9 : f32 to vector<1x32xf32>
    %23 = arith.addf %22, %21 : vector<1x32xf32>
    %24 = vector.broadcast %23 : vector<1x32xf32> to vector<8x32xf32>
    %25 = arith.mulf %19, %24 : vector<8x32xf32>
    %c0_10 = arith.constant 0 : index
    %c0_11 = arith.constant 0 : index
    %c0_12 = arith.constant 0 : index
    %26 = vector.load %arg4[%c0_10, %c0_11, %c0_12] : memref<1x1x32xf32, #tpu.memory_space<vmem>>, vector<1x1x32xf32>
    %27 = vector.shape_cast %26 : vector<1x1x32xf32> to vector<1x32xf32>
    %28 = vector.broadcast %27 : vector<1x32xf32> to vector<8x32xf32>
    %29 = arith.addf %25, %28 : vector<8x32xf32>
    %30 = arith.truncf %29 : vector<8x32xf32> to vector<8x32xbf16>
    %c0_13 = arith.constant 0 : index
    %c0_14 = arith.constant 0 : index
    %c0_15 = arith.constant 0 : index
    %31 = vector.load %arg5[%c0_13, %c0_14, %c0_15] : memref<1x8x32xbf16, #tpu.memory_space<vmem>>, vector<1x8x32xbf16>
    %32 = vector.shape_cast %31 : vector<1x8x32xbf16> to vector<8x32xbf16>
    %33 = vector.shape_cast %30 : vector<8x32xbf16> to vector<1x8x32xbf16>
    tpu.vector_store %arg5[%c0_13, %c0_14, %c0_15], %33 {strides = array<i32>} : memref<1x8x32xbf16, #tpu.memory_space<vmem>>, vector<1x8x32xbf16>,
    return
  }
  func.func @transform_0(%arg0: i32, %arg1: i32) -> (i32, i32, i32) {
    %c0_i32 = arith.constant 0 : i32
    %c0_i32_0 = arith.constant 0 : i32
    return %arg0, %arg1, %c0_i32 : i32, i32, i32
  }
  func.func @transform_1(%arg0: i32, %arg1: i32) -> (i32, i32, i32) {
    %c0_i32 = arith.constant 0 : i32
    %c0_i32_0 = arith.constant 0 : i32
    %c0_i32_1 = arith.constant 0 : i32
    return %arg0, %c0_i32, %c0_i32_0 : i32, i32, i32
  }
  func.func @transform_2(%arg0: i32, %arg1: i32) -> (i32, i32, i32) {
    %c0_i32 = arith.constant 0 : i32
    %c0_i32_0 = arith.constant 0 : i32
    %c0_i32_1 = arith.constant 0 : i32
    return %arg0, %c0_i32, %c0_i32_0 : i32, i32, i32
  }
  func.func @transform_3(%arg0: i32, %arg1: i32) -> (i32, i32, i32) {
    %c0_i32 = arith.constant 0 : i32
    %c0_i32_0 = arith.constant 0 : i32
    return %arg0, %arg1, %c0_i32 : i32, i32, i32
  }
}

module attributes {stable_mosaic.version = 11 : i64} {
  func.func @_linear_residual_kernel(%arg0: i32, %arg1: i32, %arg2: i32, %arg3: i32, %arg4: memref<1x8x32xbf16, #tpu.memory_space<vmem>>, %arg5: memref<32x32xbf16, #tpu.memory_space<vmem>>, %arg6: memref<1x32xf32, #tpu.memory_space<vmem>>, %arg7: memref<1x8x32xf32, #tpu.memory_space<vmem>>, %arg8: memref<1x8x32xf32, #tpu.memory_space<vmem>>, %arg9: memref<8x32xf32, #tpu.memory_space<vmem>>) attributes {dimension_semantics = [#tpu.dimension_semantics<parallel>, #tpu.dimension_semantics<parallel>, #tpu.dimension_semantics<parallel>, #tpu.dimension_semantics<arbitrary>], iteration_bounds = array<i64: 2, 1, 1, 1>, scalar_prefetch = 0 : i64, scratch_operands = 1 : i64, tpu.core_type = #tpu.core_type<tc>, window_params = [{transform_indices = @transform_0, window_bounds = array<i64: 1, 8, 32>}, {transform_indices = @transform_1, window_bounds = array<i64: 32, 32>}, {transform_indices = @transform_2, window_bounds = array<i64: 1, 32>}, {transform_indices = @transform_3, window_bounds = array<i64: 1, 8, 32>}, {transform_indices = @transform_4, window_bounds = array<i64: 1, 8, 32>}]} {
    %c0_i32 = arith.constant 0 : i32
    %0 = arith.cmpi eq, %arg3, %c0_i32 : i32
    %1 = arith.extui %0 : i1 to i32
    %c0_i32_0 = arith.constant 0 : i32
    %2 = arith.cmpi ne, %1, %c0_i32_0 : i32
    scf.if %2 {
      %cst_11 = arith.constant 0.000000e+00 : f32
      %13 = vector.broadcast %cst_11 : f32 to vector<8x32xf32>
      %c0_12 = arith.constant 0 : index
      %c0_13 = arith.constant 0 : index
      %14 = vector.load %arg9[%c0_12, %c0_13] : memref<8x32xf32, #tpu.memory_space<vmem>>, vector<8x32xf32>
      tpu.vector_store %arg9[%c0_12, %c0_13], %13 {strides = array<i32>} : memref<8x32xf32, #tpu.memory_space<vmem>>, vector<8x32xf32>,
    } else {
    }
    %c0 = arith.constant 0 : index
    %c0_1 = arith.constant 0 : index
    %3 = vector.load %arg9[%c0, %c0_1] : memref<8x32xf32, #tpu.memory_space<vmem>>, vector<8x32xf32>
    %c0_2 = arith.constant 0 : index
    %c0_3 = arith.constant 0 : index
    %c0_4 = arith.constant 0 : index
    %4 = vector.load %arg4[%c0_2, %c0_3, %c0_4] : memref<1x8x32xbf16, #tpu.memory_space<vmem>>, vector<1x8x32xbf16>
    %5 = vector.shape_cast %4 : vector<1x8x32xbf16> to vector<8x32xbf16>
    %c0_5 = arith.constant 0 : index
    %c0_6 = arith.constant 0 : index
    %6 = vector.load %arg5[%c0_5, %c0_6] : memref<32x32xbf16, #tpu.memory_space<vmem>>, vector<32x32xbf16>
    %cst = arith.constant dense<0.000000e+00> : vector<8x32xf32>
    %7 = tpu.matmul %5, %6, %cst {dimension_numbers = #tpu.dot_dimension_numbers<[1], [0], [0], [1], [0, 0, 1, 1], [], []>} : vector<8x32xbf16>, vector<32x32xbf16>, vector<8x32xf32> -> vector<8x32xf32>
    %8 = arith.addf %3, %7 : vector<8x32xf32>
    %c0_7 = arith.constant 0 : index
    %c0_8 = arith.constant 0 : index
    %9 = vector.load %arg9[%c0_7, %c0_8] : memref<8x32xf32, #tpu.memory_space<vmem>>, vector<8x32xf32>
    tpu.vector_store %arg9[%c0_7, %c0_8], %8 {strides = array<i32>} : memref<8x32xf32, #tpu.memory_space<vmem>>, vector<8x32xf32>,
    %c0_i32_9 = arith.constant 0 : i32
    %10 = arith.cmpi eq, %arg3, %c0_i32_9 : i32
    %11 = arith.extui %10 : i1 to i32
    %c0_i32_10 = arith.constant 0 : i32
    %12 = arith.cmpi ne, %11, %c0_i32_10 : i32
    scf.if %12 {
      %c0_11 = arith.constant 0 : index
      %c0_12 = arith.constant 0 : index
      %13 = vector.load %arg9[%c0_11, %c0_12] : memref<8x32xf32, #tpu.memory_space<vmem>>, vector<8x32xf32>
      %c0_13 = arith.constant 0 : index
      %c0_14 = arith.constant 0 : index
      %14 = vector.load %arg6[%c0_13, %c0_14] : memref<1x32xf32, #tpu.memory_space<vmem>>, vector<1x32xf32>
      %15 = vector.broadcast %14 : vector<1x32xf32> to vector<8x32xf32>
      %16 = arith.addf %13, %15 : vector<8x32xf32>
      %c0_15 = arith.constant 0 : index
      %c0_16 = arith.constant 0 : index
      %c0_17 = arith.constant 0 : index
      %17 = vector.load %arg7[%c0_15, %c0_16, %c0_17] : memref<1x8x32xf32, #tpu.memory_space<vmem>>, vector<1x8x32xf32>
      %18 = vector.shape_cast %17 : vector<1x8x32xf32> to vector<8x32xf32>
      %19 = arith.addf %18, %16 : vector<8x32xf32>
      %c0_18 = arith.constant 0 : index
      %c0_19 = arith.constant 0 : index
      %c0_20 = arith.constant 0 : index
      %20 = vector.load %arg8[%c0_18, %c0_19, %c0_20] : memref<1x8x32xf32, #tpu.memory_space<vmem>>, vector<1x8x32xf32>
      %21 = vector.shape_cast %20 : vector<1x8x32xf32> to vector<8x32xf32>
      %22 = vector.shape_cast %19 : vector<8x32xf32> to vector<1x8x32xf32>
      tpu.vector_store %arg8[%c0_18, %c0_19, %c0_20], %22 {strides = array<i32>} : memref<1x8x32xf32, #tpu.memory_space<vmem>>, vector<1x8x32xf32>,
    } else {
    }
    return
  }
  func.func @transform_0(%arg0: i32, %arg1: i32, %arg2: i32, %arg3: i32) -> (i32, i32, i32) {
    %c0_i32 = arith.constant 0 : i32
    return %arg0, %arg1, %arg3 : i32, i32, i32
  }
  func.func @transform_1(%arg0: i32, %arg1: i32, %arg2: i32, %arg3: i32) -> (i32, i32) {
    %c0_i32 = arith.constant 0 : i32
    return %arg3, %arg2 : i32, i32
  }
  func.func @transform_2(%arg0: i32, %arg1: i32, %arg2: i32, %arg3: i32) -> (i32, i32) {
    %c0_i32 = arith.constant 0 : i32
    %c0_i32_0 = arith.constant 0 : i32
    return %c0_i32, %arg2 : i32, i32
  }
  func.func @transform_3(%arg0: i32, %arg1: i32, %arg2: i32, %arg3: i32) -> (i32, i32, i32) {
    %c0_i32 = arith.constant 0 : i32
    return %arg0, %arg1, %arg2 : i32, i32, i32
  }
  func.func @transform_4(%arg0: i32, %arg1: i32, %arg2: i32, %arg3: i32) -> (i32, i32, i32) {
    %c0_i32 = arith.constant 0 : i32
    return %arg0, %arg1, %arg2 : i32, i32, i32
  }
}

module attributes {stable_mosaic.version = 11 : i64} {
  func.func @_linear_rmsnorm_kernel(%arg0: i32, %arg1: i32, %arg2: memref<16x32xbf16, #tpu.memory_space<vmem>>, %arg3: memref<32x32xbf16, #tpu.memory_space<vmem>>, %arg4: memref<1x32xf32, #tpu.memory_space<vmem>>, %arg5: memref<1x32xf32, #tpu.memory_space<vmem>>, %arg6: memref<16x32xbf16, #tpu.memory_space<vmem>>, %arg7: memref<16x32xf32, #tpu.memory_space<vmem>>) attributes {dimension_semantics = [#tpu.dimension_semantics<parallel>, #tpu.dimension_semantics<arbitrary>], iteration_bounds = array<i64: 1, 1>, scalar_prefetch = 0 : i64, scratch_operands = 1 : i64, tpu.core_type = #tpu.core_type<tc>, window_params = [{transform_indices = @transform_0, window_bounds = array<i64: 16, 32>}, {transform_indices = @transform_1, window_bounds = array<i64: 32, 32>}, {pipeline_mode = #tpu.pipeline_mode<synchronous>, transform_indices = @transform_2, window_bounds = array<i64: 1, 32>}, {pipeline_mode = #tpu.pipeline_mode<synchronous>, transform_indices = @transform_3, window_bounds = array<i64: 1, 32>}, {transform_indices = @transform_4, window_bounds = array<i64: 16, 32>}]} {
    %c0_i32 = arith.constant 0 : i32
    %0 = arith.cmpi eq, %arg1, %c0_i32 : i32
    %1 = arith.extui %0 : i1 to i32
    %c0_i32_0 = arith.constant 0 : i32
    %2 = arith.cmpi ne, %1, %c0_i32_0 : i32
    scf.if %2 {
      %cst_10 = arith.constant 0.000000e+00 : f32
      %12 = vector.broadcast %cst_10 : f32 to vector<16x32xf32>
      %c0_11 = arith.constant 0 : index
      %c0_12 = arith.constant 0 : index
      %13 = vector.load %arg7[%c0_11, %c0_12] : memref<16x32xf32, #tpu.memory_space<vmem>>, vector<16x32xf32>
      tpu.vector_store %arg7[%c0_11, %c0_12], %12 {strides = array<i32>} : memref<16x32xf32, #tpu.memory_space<vmem>>, vector<16x32xf32>,
    } else {
    }
    %c0 = arith.constant 0 : index
    %c0_1 = arith.constant 0 : index
    %3 = vector.load %arg7[%c0, %c0_1] : memref<16x32xf32, #tpu.memory_space<vmem>>, vector<16x32xf32>
    %c0_2 = arith.constant 0 : index
    %c0_3 = arith.constant 0 : index
    %4 = vector.load %arg2[%c0_2, %c0_3] : memref<16x32xbf16, #tpu.memory_space<vmem>>, vector<16x32xbf16>
    %c0_4 = arith.constant 0 : index
    %c0_5 = arith.constant 0 : index
    %5 = vector.load %arg3[%c0_4, %c0_5] : memref<32x32xbf16, #tpu.memory_space<vmem>>, vector<32x32xbf16>
    %cst = arith.constant dense<0.000000e+00> : vector<16x32xf32>
    %6 = tpu.matmul %4, %5, %cst {dimension_numbers = #tpu.dot_dimension_numbers<[1], [0], [0], [1], [0, 0, 1, 1], [], []>} : vector<16x32xbf16>, vector<32x32xbf16>, vector<16x32xf32> -> vector<16x32xf32>
    %7 = arith.addf %3, %6 : vector<16x32xf32>
    %c0_6 = arith.constant 0 : index
    %c0_7 = arith.constant 0 : index
    %8 = vector.load %arg7[%c0_6, %c0_7] : memref<16x32xf32, #tpu.memory_space<vmem>>, vector<16x32xf32>
    tpu.vector_store %arg7[%c0_6, %c0_7], %7 {strides = array<i32>} : memref<16x32xf32, #tpu.memory_space<vmem>>, vector<16x32xf32>,
    %c0_i32_8 = arith.constant 0 : i32
    %9 = arith.cmpi eq, %arg1, %c0_i32_8 : i32
    %10 = arith.extui %9 : i1 to i32
    %c0_i32_9 = arith.constant 0 : i32
    %11 = arith.cmpi ne, %10, %c0_i32_9 : i32
    scf.if %11 {
      %c0_10 = arith.constant 0 : index
      %c0_11 = arith.constant 0 : index
      %12 = vector.load %arg7[%c0_10, %c0_11] : memref<16x32xf32, #tpu.memory_space<vmem>>, vector<16x32xf32>
      %c0_12 = arith.constant 0 : index
      %c0_13 = arith.constant 0 : index
      %13 = vector.load %arg4[%c0_12, %c0_13] : memref<1x32xf32, #tpu.memory_space<vmem>>, vector<1x32xf32>
      %14 = vector.broadcast %13 : vector<1x32xf32> to vector<16x32xf32>
      %15 = arith.addf %12, %14 : vector<16x32xf32>
      %16 = arith.mulf %15, %15 : vector<16x32xf32>
      %cst_14 = arith.constant dense<0.000000e+00> : vector<16xf32>
      %17 = vector.multi_reduction <add>, %16, %cst_14 [1] : vector<16x32xf32> to vector<16xf32>
      %18 = vector.shape_cast %17 : vector<16xf32> to vector<16x1xf32>
      %cst_15 = arith.constant 3.200000e+01 : f32
      %19 = vector.broadcast %cst_15 : f32 to vector<16x1xf32>
      %20 = arith.divf %18, %19 : vector<16x1xf32>
      %cst_16 = arith.constant 9.99999997E-7 : f32
      %21 = vector.broadcast %cst_16 : f32 to vector<16x1xf32>
      %22 = arith.addf %20, %21 : vector<16x1xf32>
      %23 = math.rsqrt %22 : vector<16x1xf32>
      %24 = vector.broadcast %23 : vector<16x1xf32> to vector<16x32xf32>
      %25 = arith.mulf %15, %24 : vector<16x32xf32>
      %c0_17 = arith.constant 0 : index
      %c0_18 = arith.constant 0 : index
      %26 = vector.load %arg5[%c0_17, %c0_18] : memref<1x32xf32, #tpu.memory_space<vmem>>, vector<1x32xf32>
      %27 = vector.broadcast %26 : vector<1x32xf32> to vector<16x32xf32>
      %28 = arith.mulf %25, %27 : vector<16x32xf32>
      %29 = arith.truncf %28 : vector<16x32xf32> to vector<16x32xbf16>
      %c0_19 = arith.constant 0 : index
      %c0_20 = arith.constant 0 : index
      %30 = vector.load %arg6[%c0_19, %c0_20] : memref<16x32xbf16, #tpu.memory_space<vmem>>, vector<16x32xbf16>
      tpu.vector_store %arg6[%c0_19, %c0_20], %29 {strides = array<i32>} : memref<16x32xbf16, #tpu.memory_space<vmem>>, vector<16x32xbf16>,
    } else {
    }
    return
  }
  func.func @transform_0(%arg0: i32, %arg1: i32) -> (i32, i32) {
    %c0_i32 = arith.constant 0 : i32
    return %arg0, %arg1 : i32, i32
  }
  func.func @transform_1(%arg0: i32, %arg1: i32) -> (i32, i32) {
    %c0_i32 = arith.constant 0 : i32
    %c0_i32_0 = arith.constant 0 : i32
    return %arg1, %c0_i32 : i32, i32
  }
  func.func @transform_2(%arg0: i32, %arg1: i32) -> (i32, i32) {
    %c0_i32 = arith.constant 0 : i32
    %c0_i32_0 = arith.constant 0 : i32
    %c0_i32_1 = arith.constant 0 : i32
    return %c0_i32, %c0_i32_0 : i32, i32
  }
  func.func @transform_3(%arg0: i32, %arg1: i32) -> (i32, i32) {
    %c0_i32 = arith.constant 0 : i32
    %c0_i32_0 = arith.constant 0 : i32
    %c0_i32_1 = arith.constant 0 : i32
    return %c0_i32, %c0_i32_0 : i32, i32
  }
  func.func @transform_4(%arg0: i32, %arg1: i32) -> (i32, i32) {
    %c0_i32 = arith.constant 0 : i32
    %c0_i32_0 = arith.constant 0 : i32
    return %arg0, %c0_i32 : i32, i32
  }
}

module attributes {stable_mosaic.version = 11 : i64} {
  func.func @_linear_kernel(%arg0: i32, %arg1: i32, %arg2: i32, %arg3: memref<16x32xbf16, #tpu.memory_space<vmem>>, %arg4: memref<32x32xbf16, #tpu.memory_space<vmem>>, %arg5: memref<1x32xf32, #tpu.memory_space<vmem>>, %arg6: memref<16x32xbf16, #tpu.memory_space<vmem>>, %arg7: memref<16x32xf32, #tpu.memory_space<vmem>>) attributes {dimension_semantics = [#tpu.dimension_semantics<parallel>, #tpu.dimension_semantics<parallel>, #tpu.dimension_semantics<arbitrary>], iteration_bounds = array<i64: 1, 1, 1>, scalar_prefetch = 0 : i64, scratch_operands = 1 : i64, tpu.core_type = #tpu.core_type<tc>, window_params = [{transform_indices = @transform_0, window_bounds = array<i64: 16, 32>}, {transform_indices = @transform_1, window_bounds = array<i64: 32, 32>}, {transform_indices = @transform_2, window_bounds = array<i64: 1, 32>}, {transform_indices = @transform_3, window_bounds = array<i64: 16, 32>}]} {
    %c0_i32 = arith.constant 0 : i32
    %0 = arith.cmpi eq, %arg2, %c0_i32 : i32
    %1 = arith.extui %0 : i1 to i32
    %c0_i32_0 = arith.constant 0 : i32
    %2 = arith.cmpi ne, %1, %c0_i32_0 : i32
    scf.if %2 {
      %cst_10 = arith.constant 0.000000e+00 : f32
      %12 = vector.broadcast %cst_10 : f32 to vector<16x32xf32>
      %c0_11 = arith.constant 0 : index
      %c0_12 = arith.constant 0 : index
      %13 = vector.load %arg7[%c0_11, %c0_12] : memref<16x32xf32, #tpu.memory_space<vmem>>, vector<16x32xf32>
      tpu.vector_store %arg7[%c0_11, %c0_12], %12 {strides = array<i32>} : memref<16x32xf32, #tpu.memory_space<vmem>>, vector<16x32xf32>,
    } else {
    }
    %c0 = arith.constant 0 : index
    %c0_1 = arith.constant 0 : index
    %3 = vector.load %arg7[%c0, %c0_1] : memref<16x32xf32, #tpu.memory_space<vmem>>, vector<16x32xf32>
    %c0_2 = arith.constant 0 : index
    %c0_3 = arith.constant 0 : index
    %4 = vector.load %arg3[%c0_2, %c0_3] : memref<16x32xbf16, #tpu.memory_space<vmem>>, vector<16x32xbf16>
    %c0_4 = arith.constant 0 : index
    %c0_5 = arith.constant 0 : index
    %5 = vector.load %arg4[%c0_4, %c0_5] : memref<32x32xbf16, #tpu.memory_space<vmem>>, vector<32x32xbf16>
    %cst = arith.constant dense<0.000000e+00> : vector<16x32xf32>
    %6 = tpu.matmul %4, %5, %cst {dimension_numbers = #tpu.dot_dimension_numbers<[1], [0], [0], [1], [0, 0, 1, 1], [], []>} : vector<16x32xbf16>, vector<32x32xbf16>, vector<16x32xf32> -> vector<16x32xf32>
    %7 = arith.addf %3, %6 : vector<16x32xf32>
    %c0_6 = arith.constant 0 : index
    %c0_7 = arith.constant 0 : index
    %8 = vector.load %arg7[%c0_6, %c0_7] : memref<16x32xf32, #tpu.memory_space<vmem>>, vector<16x32xf32>
    tpu.vector_store %arg7[%c0_6, %c0_7], %7 {strides = array<i32>} : memref<16x32xf32, #tpu.memory_space<vmem>>, vector<16x32xf32>,
    %c0_i32_8 = arith.constant 0 : i32
    %9 = arith.cmpi eq, %arg2, %c0_i32_8 : i32
    %10 = arith.extui %9 : i1 to i32
    %c0_i32_9 = arith.constant 0 : i32
    %11 = arith.cmpi ne, %10, %c0_i32_9 : i32
    scf.if %11 {
      %c0_10 = arith.constant 0 : index
      %c0_11 = arith.constant 0 : index
      %12 = vector.load %arg7[%c0_10, %c0_11] : memref<16x32xf32, #tpu.memory_space<vmem>>, vector<16x32xf32>
      %c0_12 = arith.constant 0 : index
      %c0_13 = arith.constant 0 : index
      %13 = vector.load %arg5[%c0_12, %c0_13] : memref<1x32xf32, #tpu.memory_space<vmem>>, vector<1x32xf32>
      %14 = vector.broadcast %13 : vector<1x32xf32> to vector<16x32xf32>
      %15 = arith.addf %12, %14 : vector<16x32xf32>
      %16 = arith.truncf %15 : vector<16x32xf32> to vector<16x32xbf16>
      %c0_14 = arith.constant 0 : index
      %c0_15 = arith.constant 0 : index
      %17 = vector.load %arg6[%c0_14, %c0_15] : memref<16x32xbf16, #tpu.memory_space<vmem>>, vector<16x32xbf16>
      tpu.vector_store %arg6[%c0_14, %c0_15], %16 {strides = array<i32>} : memref<16x32xbf16, #tpu.memory_space<vmem>>, vector<16x32xbf16>,
    } else {
    }
    return
  }
  func.func @transform_0(%arg0: i32, %arg1: i32, %arg2: i32) -> (i32, i32) {
    %c0_i32 = arith.constant 0 : i32
    return %arg0, %arg2 : i32, i32
  }
  func.func @transform_1(%arg0: i32, %arg1: i32, %arg2: i32) -> (i32, i32) {
    %c0_i32 = arith.constant 0 : i32
    return %arg2, %arg1 : i32, i32
  }
  func.func @transform_2(%arg0: i32, %arg1: i32, %arg2: i32) -> (i32, i32) {
    %c0_i32 = arith.constant 0 : i32
    %c0_i32_0 = arith.constant 0 : i32
    return %c0_i32, %arg1 : i32, i32
  }
  func.func @transform_3(%arg0: i32, %arg1: i32, %arg2: i32) -> (i32, i32) {
    %c0_i32 = arith.constant 0 : i32
    return %arg0, %arg1 : i32, i32
  }
}

module attributes {stable_mosaic.version = 11 : i64} {
  func.func @_flash_attn_kernel(%arg0: i32, %arg1: i32, %arg2: i32, %arg3: memref<1x8x8xbf16, #tpu.memory_space<vmem>>, %arg4: memref<1x8x8xbf16, #tpu.memory_space<vmem>>, %arg5: memref<1x8x8xbf16, #tpu.memory_space<vmem>>, %arg6: memref<1x8x8xbf16, #tpu.memory_space<vmem>>, %arg7: memref<8x1xf32, #tpu.memory_space<vmem>>, %arg8: memref<8x1xf32, #tpu.memory_space<vmem>>, %arg9: memref<8x8xf32, #tpu.memory_space<vmem>>) attributes {dimension_semantics = [#tpu.dimension_semantics<parallel>, #tpu.dimension_semantics<parallel>, #tpu.dimension_semantics<arbitrary>], iteration_bounds = array<i64: 8, 1, 1>, scalar_prefetch = 0 : i64, scratch_operands = 3 : i64, tpu.core_type = #tpu.core_type<tc>, window_params = [{transform_indices = @transform_0, window_bounds = array<i64: 1, 8, 8>}, {transform_indices = @transform_1, window_bounds = array<i64: 1, 8, 8>}, {transform_indices = @transform_2, window_bounds = array<i64: 1, 8, 8>}, {transform_indices = @transform_3, window_bounds = array<i64: 1, 8, 8>}]} {
    %c0_i32 = arith.constant 0 : i32
    %0 = arith.cmpi eq, %arg2, %c0_i32 : i32
    %1 = arith.extui %0 : i1 to i32
    %c0_i32_0 = arith.constant 0 : i32
    %2 = arith.cmpi ne, %1, %c0_i32_0 : i32
    scf.if %2 {
      %cst_26 = arith.constant 0xFF800000 : f32
      %36 = vector.broadcast %cst_26 : f32 to vector<8x1xf32>
      %c0_27 = arith.constant 0 : index
      %c0_28 = arith.constant 0 : index
      %37 = vector.load %arg7[%c0_27, %c0_28] : memref<8x1xf32, #tpu.memory_space<vmem>>, vector<8x1xf32>
      tpu.vector_store %arg7[%c0_27, %c0_28], %36 {strides = array<i32>} : memref<8x1xf32, #tpu.memory_space<vmem>>, vector<8x1xf32>,
      %cst_29 = arith.constant 0.000000e+00 : f32
      %38 = vector.broadcast %cst_29 : f32 to vector<8x1xf32>
      %c0_30 = arith.constant 0 : index
      %c0_31 = arith.constant 0 : index
      %39 = vector.load %arg8[%c0_30, %c0_31] : memref<8x1xf32, #tpu.memory_space<vmem>>, vector<8x1xf32>
      tpu.vector_store %arg8[%c0_30, %c0_31], %38 {strides = array<i32>} : memref<8x1xf32, #tpu.memory_space<vmem>>, vector<8x1xf32>,
      %cst_32 = arith.constant 0.000000e+00 : f32
      %40 = vector.broadcast %cst_32 : f32 to vector<8x8xf32>
      %c0_33 = arith.constant 0 : index
      %c0_34 = arith.constant 0 : index
      %41 = vector.load %arg9[%c0_33, %c0_34] : memref<8x8xf32, #tpu.memory_space<vmem>>, vector<8x8xf32>
      tpu.vector_store %arg9[%c0_33, %c0_34], %40 {strides = array<i32>} : memref<8x8xf32, #tpu.memory_space<vmem>>, vector<8x8xf32>,
    } else {
    }
    %c0 = arith.constant 0 : index
    %c0_1 = arith.constant 0 : index
    %c0_2 = arith.constant 0 : index
    %3 = vector.load %arg3[%c0, %c0_1, %c0_2] : memref<1x8x8xbf16, #tpu.memory_space<vmem>>, vector<1x8x8xbf16>
    %4 = vector.shape_cast %3 : vector<1x8x8xbf16> to vector<8x8xbf16>
    %c0_3 = arith.constant 0 : index
    %c0_4 = arith.constant 0 : index
    %c0_5 = arith.constant 0 : index
    %5 = vector.load %arg4[%c0_3, %c0_4, %c0_5] : memref<1x8x8xbf16, #tpu.memory_space<vmem>>, vector<1x8x8xbf16>
    %6 = vector.shape_cast %5 : vector<1x8x8xbf16> to vector<8x8xbf16>
    %c0_6 = arith.constant 0 : index
    %c0_7 = arith.constant 0 : index
    %c0_8 = arith.constant 0 : index
    %7 = vector.load %arg5[%c0_6, %c0_7, %c0_8] : memref<1x8x8xbf16, #tpu.memory_space<vmem>>, vector<1x8x8xbf16>
    %8 = vector.shape_cast %7 : vector<1x8x8xbf16> to vector<8x8xbf16>
    %cst = arith.constant dense<0.000000e+00> : vector<8x8xf32>
    %9 = tpu.matmul %4, %6, %cst {dimension_numbers = #tpu.dot_dimension_numbers<[1], [1], [0], [0], [0, 0, 1, 0], [], []>} : vector<8x8xbf16>, vector<8x8xbf16>, vector<8x8xf32> -> vector<8x8xf32>
    %c0_9 = arith.constant 0 : index
    %c0_10 = arith.constant 0 : index
    %10 = vector.load %arg7[%c0_9, %c0_10] : memref<8x1xf32, #tpu.memory_space<vmem>>, vector<8x1xf32>
    %cst_11 = arith.constant dense<0xFF800000> : vector<8xf32>
    %11 = vector.multi_reduction <maximumf>, %9, %cst_11 [1] : vector<8x8xf32> to vector<8xf32>
    %12 = vector.shape_cast %11 : vector<8xf32> to vector<8x1xf32>
    %13 = arith.maximumf %10, %12 : vector<8x1xf32>
    %14 = arith.subf %10, %13 : vector<8x1xf32>
    %15 = math.exp %14 : vector<8x1xf32>
    %16 = vector.broadcast %13 : vector<8x1xf32> to vector<8x8xf32>
    %17 = arith.subf %9, %16 : vector<8x8xf32>
    %18 = math.exp %17 : vector<8x8xf32>
    %c0_12 = arith.constant 0 : index
    %c0_13 = arith.constant 0 : index
    %19 = vector.load %arg8[%c0_12, %c0_13] : memref<8x1xf32, #tpu.memory_space<vmem>>, vector<8x1xf32>
    %20 = arith.mulf %15, %19 : vector<8x1xf32>
    %cst_14 = arith.constant dense<0.000000e+00> : vector<8xf32>
    %21 = vector.multi_reduction <add>, %18, %cst_14 [1] : vector<8x8xf32> to vector<8xf32>
    %22 = vector.shape_cast %21 : vector<8xf32> to vector<8x1xf32>
    %23 = arith.addf %20, %22 : vector<8x1xf32>
    %c0_15 = arith.constant 0 : index
    %c0_16 = arith.constant 0 : index
    %24 = vector.load %arg8[%c0_15, %c0_16] : memref<8x1xf32, #tpu.memory_space<vmem>>, vector<8x1xf32>
    tpu.vector_store %arg8[%c0_15, %c0_16], %23 {strides = array<i32>} : memref<8x1xf32, #tpu.memory_space<vmem>>, vector<8x1xf32>,
    %c0_17 = arith.constant 0 : index
    %c0_18 = arith.constant 0 : index
    %25 = vector.load %arg9[%c0_17, %c0_18] : memref<8x8xf32, #tpu.memory_space<vmem>>, vector<8x8xf32>
    %26 = vector.broadcast %15 : vector<8x1xf32> to vector<8x8xf32>
    %27 = arith.mulf %26, %25 : vector<8x8xf32>
    %28 = arith.truncf %18 : vector<8x8xf32> to vector<8x8xbf16>
    %cst_19 = arith.constant dense<0.000000e+00> : vector<8x8xf32>
    %29 = tpu.matmul %28, %8, %cst_19 {dimension_numbers = #tpu.dot_dimension_numbers<[1], [0], [0], [1], [0, 0, 1, 1], [], []>} : vector<8x8xbf16>, vector<8x8xbf16>, vector<8x8xf32> -> vector<8x8xf32>
    %30 = arith.addf %27, %29 : vector<8x8xf32>
    %c0_20 = arith.constant 0 : index
    %c0_21 = arith.constant 0 : index
    %31 = vector.load %arg9[%c0_20, %c0_21] : memref<8x8xf32, #tpu.memory_space<vmem>>, vector<8x8xf32>
    tpu.vector_store %arg9[%c0_20, %c0_21], %30 {strides = array<i32>} : memref<8x8xf32, #tpu.memory_space<vmem>>, vector<8x8xf32>,
    %c0_22 = arith.constant 0 : index
    %c0_23 = arith.constant 0 : index
    %32 = vector.load %arg7[%c0_22, %c0_23] : memref<8x1xf32, #tpu.memory_space<vmem>>, vector<8x1xf32>
    tpu.vector_store %arg7[%c0_22, %c0_23], %13 {strides = array<i32>} : memref<8x1xf32, #tpu.memory_space<vmem>>, vector<8x1xf32>,
    %c0_i32_24 = arith.constant 0 : i32
    %33 = arith.cmpi eq, %arg2, %c0_i32_24 : i32
    %34 = arith.extui %33 : i1 to i32
    %c0_i32_25 = arith.constant 0 : i32
    %35 = arith.cmpi ne, %34, %c0_i32_25 : i32
    scf.if %35 {
      %c0_26 = arith.constant 0 : index
      %c0_27 = arith.constant 0 : index
      %36 = vector.load %arg9[%c0_26, %c0_27] : memref<8x8xf32, #tpu.memory_space<vmem>>, vector<8x8xf32>
      %c0_28 = arith.constant 0 : index
      %c0_29 = arith.constant 0 : index
      %37 = vector.load %arg8[%c0_28, %c0_29] : memref<8x1xf32, #tpu.memory_space<vmem>>, vector<8x1xf32>
      %38 = tpu.reciprocal %37 {approx = true} : vector<8x1xf32> -> vector<8x1xf32>
      %39 = vector.broadcast %38 : vector<8x1xf32> to vector<8x8xf32>
      %40 = arith.mulf %36, %39 : vector<8x8xf32>
      %41 = arith.truncf %40 : vector<8x8xf32> to vector<8x8xbf16>
      %c0_30 = arith.constant 0 : index
      %c0_31 = arith.constant 0 : index
      %c0_32 = arith.constant 0 : index
      %42 = vector.load %arg6[%c0_30, %c0_31, %c0_32] : memref<1x8x8xbf16, #tpu.memory_space<vmem>>, vector<1x8x8xbf16>
      %43 = vector.shape_cast %42 : vector<1x8x8xbf16> to vector<8x8xbf16>
      %44 = vector.shape_cast %41 : vector<8x8xbf16> to vector<1x8x8xbf16>
      tpu.vector_store %arg6[%c0_30, %c0_31, %c0_32], %44 {strides = array<i32>} : memref<1x8x8xbf16, #tpu.memory_space<vmem>>, vector<1x8x8xbf16>,
    } else {
    }
    return
  }
  func.func @transform_0(%arg0: i32, %arg1: i32, %arg2: i32) -> (i32, i32, i32) {
    %c0_i32 = arith.constant 0 : i32
    %c0_i32_0 = arith.constant 0 : i32
    return %arg0, %arg1, %c0_i32 : i32, i32, i32
  }
  func.func @transform_1(%arg0: i32, %arg1: i32, %arg2: i32) -> (i32, i32, i32) {
    %c0_i32 = arith.constant 0 : i32
    %c0_i32_0 = arith.constant 0 : i32
    return %arg0, %arg2, %c0_i32 : i32, i32, i32
  }
  func.func @transform_2(%arg0: i32, %arg1: i32, %arg2: i32) -> (i32, i32, i32) {
    %c0_i32 = arith.constant 0 : i32
    %c0_i32_0 = arith.constant 0 : i32
    return %arg0, %arg2, %c0_i32 : i32, i32, i32
  }
  func.func @transform_3(%arg0: i32, %arg1: i32, %arg2: i32) -> (i32, i32, i32) {
    %c0_i32 = arith.constant 0 : i32
    %c0_i32_0 = arith.constant 0 : i32
    return %arg0, %arg1, %c0_i32 : i32, i32, i32
  }
}

module attributes {stable_mosaic.version = 11 : i64} {
  func.func @_ln_affine_kernel(%arg0: i32, %arg1: i32, %arg2: memref<1x8x32xf32, #tpu.memory_space<vmem>>, %arg3: memref<1x32xf32, #tpu.memory_space<vmem>>, %arg4: memref<1x32xf32, #tpu.memory_space<vmem>>, %arg5: memref<1x8x32xbf16, #tpu.memory_space<vmem>>) attributes {dimension_semantics = [#tpu.dimension_semantics<parallel>, #tpu.dimension_semantics<parallel>], iteration_bounds = array<i64: 2, 1>, scalar_prefetch = 0 : i64, scratch_operands = 0 : i64, tpu.core_type = #tpu.core_type<tc>, window_params = [{transform_indices = @transform_0, window_bounds = array<i64: 1, 8, 32>}, {pipeline_mode = #tpu.pipeline_mode<synchronous>, transform_indices = @transform_1, window_bounds = array<i64: 1, 32>}, {pipeline_mode = #tpu.pipeline_mode<synchronous>, transform_indices = @transform_2, window_bounds = array<i64: 1, 32>}, {transform_indices = @transform_3, window_bounds = array<i64: 1, 8, 32>}]} {
    %c0 = arith.constant 0 : index
    %c0_0 = arith.constant 0 : index
    %c0_1 = arith.constant 0 : index
    %0 = vector.load %arg2[%c0, %c0_0, %c0_1] : memref<1x8x32xf32, #tpu.memory_space<vmem>>, vector<1x8x32xf32>
    %1 = vector.shape_cast %0 : vector<1x8x32xf32> to vector<8x32xf32>
    %cst = arith.constant dense<0.000000e+00> : vector<8xf32>
    %2 = vector.multi_reduction <add>, %1, %cst [1] : vector<8x32xf32> to vector<8xf32>
    %3 = vector.shape_cast %2 : vector<8xf32> to vector<8x1xf32>
    %cst_2 = arith.constant 3.200000e+01 : f32
    %4 = vector.broadcast %cst_2 : f32 to vector<8x1xf32>
    %5 = arith.divf %3, %4 : vector<8x1xf32>
    %6 = vector.broadcast %5 : vector<8x1xf32> to vector<8x32xf32>
    %7 = arith.subf %1, %6 : vector<8x32xf32>
    %8 = arith.mulf %7, %7 : vector<8x32xf32>
    %cst_3 = arith.constant dense<0.000000e+00> : vector<8xf32>
    %9 = vector.multi_reduction <add>, %8, %cst_3 [1] : vector<8x32xf32> to vector<8xf32>
    %10 = vector.shape_cast %9 : vector<8xf32> to vector<8x1xf32>
    %cst_4 = arith.constant 3.200000e+01 : f32
    %11 = vector.broadcast %cst_4 : f32 to vector<8x1xf32>
    %12 = arith.divf %10, %11 : vector<8x1xf32>
    %13 = vector.broadcast %5 : vector<8x1xf32> to vector<8x32xf32>
    %14 = arith.subf %1, %13 : vector<8x32xf32>
    %cst_5 = arith.constant 9.99999997E-7 : f32
    %15 = vector.broadcast %cst_5 : f32 to vector<8x1xf32>
    %16 = arith.addf %12, %15 : vector<8x1xf32>
    %17 = math.rsqrt %16 : vector<8x1xf32>
    %18 = vector.broadcast %17 : vector<8x1xf32> to vector<8x32xf32>
    %19 = arith.mulf %14, %18 : vector<8x32xf32>
    %c0_6 = arith.constant 0 : index
    %c0_7 = arith.constant 0 : index
    %20 = vector.load %arg3[%c0_6, %c0_7] : memref<1x32xf32, #tpu.memory_space<vmem>>, vector<1x32xf32>
    %21 = vector.broadcast %20 : vector<1x32xf32> to vector<8x32xf32>
    %22 = arith.mulf %19, %21 : vector<8x32xf32>
    %c0_8 = arith.constant 0 : index
    %c0_9 = arith.constant 0 : index
    %23 = vector.load %arg4[%c0_8, %c0_9] : memref<1x32xf32, #tpu.memory_space<vmem>>, vector<1x32xf32>
    %24 = vector.broadcast %23 : vector<1x32xf32> to vector<8x32xf32>
    %25 = arith.addf %22, %24 : vector<8x32xf32>
    %26 = arith.truncf %25 : vector<8x32xf32> to vector<8x32xbf16>
    %c0_10 = arith.constant 0 : index
    %c0_11 = arith.constant 0 : index
    %c0_12 = arith.constant 0 : index
    %27 = vector.load %arg5[%c0_10, %c0_11, %c0_12] : memref<1x8x32xbf16, #tpu.memory_space<vmem>>, vector<1x8x32xbf16>
    %28 = vector.shape_cast %27 : vector<1x8x32xbf16> to vector<8x32xbf16>
    %29 = vector.shape_cast %26 : vector<8x32xbf16> to vector<1x8x32xbf16>
    tpu.vector_store %arg5[%c0_10, %c0_11, %c0_12], %29 {strides = array<i32>} : memref<1x8x32xbf16, #tpu.memory_space<vmem>>, vector<1x8x32xbf16>,
    return
  }
  func.func @transform_0(%arg0: i32, %arg1: i32) -> (i32, i32, i32) {
    %c0_i32 = arith.constant 0 : i32
    %c0_i32_0 = arith.constant 0 : i32
    return %arg0, %arg1, %c0_i32 : i32, i32, i32
  }
  func.func @transform_1(%arg0: i32, %arg1: i32) -> (i32, i32) {
    %c0_i32 = arith.constant 0 : i32
    %c0_i32_0 = arith.constant 0 : i32
    %c0_i32_1 = arith.constant 0 : i32
    return %c0_i32, %c0_i32_0 : i32, i32
  }
  func.func @transform_2(%arg0: i32, %arg1: i32) -> (i32, i32) {
    %c0_i32 = arith.constant 0 : i32
    %c0_i32_0 = arith.constant 0 : i32
    %c0_i32_1 = arith.constant 0 : i32
    return %c0_i32, %c0_i32_0 : i32, i32
  }
  func.func @transform_3(%arg0: i32, %arg1: i32) -> (i32, i32, i32) {
    %c0_i32 = arith.constant 0 : i32
    %c0_i32_0 = arith.constant 0 : i32
    return %arg0, %arg1, %c0_i32 : i32, i32, i32
  }
}

module attributes {stable_mosaic.version = 11 : i64} {
  func.func @_linear_residual_kernel(%arg0: i32, %arg1: i32, %arg2: i32, %arg3: i32, %arg4: memref<1x8x32xbf16, #tpu.memory_space<vmem>>, %arg5: memref<32x32xbf16, #tpu.memory_space<vmem>>, %arg6: memref<1x32xf32, #tpu.memory_space<vmem>>, %arg7: memref<1x8x32xf32, #tpu.memory_space<vmem>>, %arg8: memref<1x1x32xf32, #tpu.memory_space<vmem>>, %arg9: memref<1x8x32xf32, #tpu.memory_space<vmem>>, %arg10: memref<8x32xf32, #tpu.memory_space<vmem>>) attributes {dimension_semantics = [#tpu.dimension_semantics<parallel>, #tpu.dimension_semantics<parallel>, #tpu.dimension_semantics<parallel>, #tpu.dimension_semantics<arbitrary>], iteration_bounds = array<i64: 2, 1, 1, 1>, scalar_prefetch = 0 : i64, scratch_operands = 1 : i64, tpu.core_type = #tpu.core_type<tc>, window_params = [{transform_indices = @transform_0, window_bounds = array<i64: 1, 8, 32>}, {transform_indices = @transform_1, window_bounds = array<i64: 32, 32>}, {transform_indices = @transform_2, window_bounds = array<i64: 1, 32>}, {transform_indices = @transform_3, window_bounds = array<i64: 1, 8, 32>}, {transform_indices = @transform_4, window_bounds = array<i64: 1, 1, 32>}, {transform_indices = @transform_5, window_bounds = array<i64: 1, 8, 32>}]} {
    %c0_i32 = arith.constant 0 : i32
    %0 = arith.cmpi eq, %arg3, %c0_i32 : i32
    %1 = arith.extui %0 : i1 to i32
    %c0_i32_0 = arith.constant 0 : i32
    %2 = arith.cmpi ne, %1, %c0_i32_0 : i32
    scf.if %2 {
      %cst_11 = arith.constant 0.000000e+00 : f32
      %13 = vector.broadcast %cst_11 : f32 to vector<8x32xf32>
      %c0_12 = arith.constant 0 : index
      %c0_13 = arith.constant 0 : index
      %14 = vector.load %arg10[%c0_12, %c0_13] : memref<8x32xf32, #tpu.memory_space<vmem>>, vector<8x32xf32>
      tpu.vector_store %arg10[%c0_12, %c0_13], %13 {strides = array<i32>} : memref<8x32xf32, #tpu.memory_space<vmem>>, vector<8x32xf32>,
    } else {
    }
    %c0 = arith.constant 0 : index
    %c0_1 = arith.constant 0 : index
    %3 = vector.load %arg10[%c0, %c0_1] : memref<8x32xf32, #tpu.memory_space<vmem>>, vector<8x32xf32>
    %c0_2 = arith.constant 0 : index
    %c0_3 = arith.constant 0 : index
    %c0_4 = arith.constant 0 : index
    %4 = vector.load %arg4[%c0_2, %c0_3, %c0_4] : memref<1x8x32xbf16, #tpu.memory_space<vmem>>, vector<1x8x32xbf16>
    %5 = vector.shape_cast %4 : vector<1x8x32xbf16> to vector<8x32xbf16>
    %c0_5 = arith.constant 0 : index
    %c0_6 = arith.constant 0 : index
    %6 = vector.load %arg5[%c0_5, %c0_6] : memref<32x32xbf16, #tpu.memory_space<vmem>>, vector<32x32xbf16>
    %cst = arith.constant dense<0.000000e+00> : vector<8x32xf32>
    %7 = tpu.matmul %5, %6, %cst {dimension_numbers = #tpu.dot_dimension_numbers<[1], [0], [0], [1], [0, 0, 1, 1], [], []>} : vector<8x32xbf16>, vector<32x32xbf16>, vector<8x32xf32> -> vector<8x32xf32>
    %8 = arith.addf %3, %7 : vector<8x32xf32>
    %c0_7 = arith.constant 0 : index
    %c0_8 = arith.constant 0 : index
    %9 = vector.load %arg10[%c0_7, %c0_8] : memref<8x32xf32, #tpu.memory_space<vmem>>, vector<8x32xf32>
    tpu.vector_store %arg10[%c0_7, %c0_8], %8 {strides = array<i32>} : memref<8x32xf32, #tpu.memory_space<vmem>>, vector<8x32xf32>,
    %c0_i32_9 = arith.constant 0 : i32
    %10 = arith.cmpi eq, %arg3, %c0_i32_9 : i32
    %11 = arith.extui %10 : i1 to i32
    %c0_i32_10 = arith.constant 0 : i32
    %12 = arith.cmpi ne, %11, %c0_i32_10 : i32
    scf.if %12 {
      %c0_11 = arith.constant 0 : index
      %c0_12 = arith.constant 0 : index
      %13 = vector.load %arg10[%c0_11, %c0_12] : memref<8x32xf32, #tpu.memory_space<vmem>>, vector<8x32xf32>
      %c0_13 = arith.constant 0 : index
      %c0_14 = arith.constant 0 : index
      %14 = vector.load %arg6[%c0_13, %c0_14] : memref<1x32xf32, #tpu.memory_space<vmem>>, vector<1x32xf32>
      %15 = vector.broadcast %14 : vector<1x32xf32> to vector<8x32xf32>
      %16 = arith.addf %13, %15 : vector<8x32xf32>
      %c0_15 = arith.constant 0 : index
      %c0_16 = arith.constant 0 : index
      %c0_17 = arith.constant 0 : index
      %17 = vector.load %arg8[%c0_15, %c0_16, %c0_17] : memref<1x1x32xf32, #tpu.memory_space<vmem>>, vector<1x1x32xf32>
      %18 = vector.shape_cast %17 : vector<1x1x32xf32> to vector<1x32xf32>
      %19 = vector.broadcast %18 : vector<1x32xf32> to vector<8x32xf32>
      %20 = arith.mulf %16, %19 : vector<8x32xf32>
      %c0_18 = arith.constant 0 : index
      %c0_19 = arith.constant 0 : index
      %c0_20 = arith.constant 0 : index
      %21 = vector.load %arg7[%c0_18, %c0_19, %c0_20] : memref<1x8x32xf32, #tpu.memory_space<vmem>>, vector<1x8x32xf32>
      %22 = vector.shape_cast %21 : vector<1x8x32xf32> to vector<8x32xf32>
      %23 = arith.addf %22, %20 : vector<8x32xf32>
      %c0_21 = arith.constant 0 : index
      %c0_22 = arith.constant 0 : index
      %c0_23 = arith.constant 0 : index
      %24 = vector.load %arg9[%c0_21, %c0_22, %c0_23] : memref<1x8x32xf32, #tpu.memory_space<vmem>>, vector<1x8x32xf32>
      %25 = vector.shape_cast %24 : vector<1x8x32xf32> to vector<8x32xf32>
      %26 = vector.shape_cast %23 : vector<8x32xf32> to vector<1x8x32xf32>
      tpu.vector_store %arg9[%c0_21, %c0_22, %c0_23], %26 {strides = array<i32>} : memref<1x8x32xf32, #tpu.memory_space<vmem>>, vector<1x8x32xf32>,
    } else {
    }
    return
  }
  func.func @transform_0(%arg0: i32, %arg1: i32, %arg2: i32, %arg3: i32) -> (i32, i32, i32) {
    %c0_i32 = arith.constant 0 : i32
    return %arg0, %arg1, %arg3 : i32, i32, i32
  }
  func.func @transform_1(%arg0: i32, %arg1: i32, %arg2: i32, %arg3: i32) -> (i32, i32) {
    %c0_i32 = arith.constant 0 : i32
    return %arg3, %arg2 : i32, i32
  }
  func.func @transform_2(%arg0: i32, %arg1: i32, %arg2: i32, %arg3: i32) -> (i32, i32) {
    %c0_i32 = arith.constant 0 : i32
    %c0_i32_0 = arith.constant 0 : i32
    return %c0_i32, %arg2 : i32, i32
  }
  func.func @transform_3(%arg0: i32, %arg1: i32, %arg2: i32, %arg3: i32) -> (i32, i32, i32) {
    %c0_i32 = arith.constant 0 : i32
    return %arg0, %arg1, %arg2 : i32, i32, i32
  }
  func.func @transform_4(%arg0: i32, %arg1: i32, %arg2: i32, %arg3: i32) -> (i32, i32, i32) {
    %c0_i32 = arith.constant 0 : i32
    %c0_i32_0 = arith.constant 0 : i32
    return %arg0, %c0_i32, %arg2 : i32, i32, i32
  }
  func.func @transform_5(%arg0: i32, %arg1: i32, %arg2: i32, %arg3: i32) -> (i32, i32, i32) {
    %c0_i32 = arith.constant 0 : i32
    return %arg0, %arg1, %arg2 : i32, i32, i32
  }
}

module attributes {stable_mosaic.version = 11 : i64} {
  func.func @_linear_kernel(%arg0: i32, %arg1: i32, %arg2: i32, %arg3: memref<16x32xbf16, #tpu.memory_space<vmem>>, %arg4: memref<32x64xbf16, #tpu.memory_space<vmem>>, %arg5: memref<1x64xf32, #tpu.memory_space<vmem>>, %arg6: memref<16x64xbf16, #tpu.memory_space<vmem>>, %arg7: memref<16x64xf32, #tpu.memory_space<vmem>>) attributes {dimension_semantics = [#tpu.dimension_semantics<parallel>, #tpu.dimension_semantics<parallel>, #tpu.dimension_semantics<arbitrary>], iteration_bounds = array<i64: 1, 1, 1>, scalar_prefetch = 0 : i64, scratch_operands = 1 : i64, tpu.core_type = #tpu.core_type<tc>, window_params = [{transform_indices = @transform_0, window_bounds = array<i64: 16, 32>}, {transform_indices = @transform_1, window_bounds = array<i64: 32, 64>}, {transform_indices = @transform_2, window_bounds = array<i64: 1, 64>}, {transform_indices = @transform_3, window_bounds = array<i64: 16, 64>}]} {
    %c0_i32 = arith.constant 0 : i32
    %0 = arith.cmpi eq, %arg2, %c0_i32 : i32
    %1 = arith.extui %0 : i1 to i32
    %c0_i32_0 = arith.constant 0 : i32
    %2 = arith.cmpi ne, %1, %c0_i32_0 : i32
    scf.if %2 {
      %cst_10 = arith.constant 0.000000e+00 : f32
      %12 = vector.broadcast %cst_10 : f32 to vector<16x64xf32>
      %c0_11 = arith.constant 0 : index
      %c0_12 = arith.constant 0 : index
      %13 = vector.load %arg7[%c0_11, %c0_12] : memref<16x64xf32, #tpu.memory_space<vmem>>, vector<16x64xf32>
      tpu.vector_store %arg7[%c0_11, %c0_12], %12 {strides = array<i32>} : memref<16x64xf32, #tpu.memory_space<vmem>>, vector<16x64xf32>,
    } else {
    }
    %c0 = arith.constant 0 : index
    %c0_1 = arith.constant 0 : index
    %3 = vector.load %arg7[%c0, %c0_1] : memref<16x64xf32, #tpu.memory_space<vmem>>, vector<16x64xf32>
    %c0_2 = arith.constant 0 : index
    %c0_3 = arith.constant 0 : index
    %4 = vector.load %arg3[%c0_2, %c0_3] : memref<16x32xbf16, #tpu.memory_space<vmem>>, vector<16x32xbf16>
    %c0_4 = arith.constant 0 : index
    %c0_5 = arith.constant 0 : index
    %5 = vector.load %arg4[%c0_4, %c0_5] : memref<32x64xbf16, #tpu.memory_space<vmem>>, vector<32x64xbf16>
    %cst = arith.constant dense<0.000000e+00> : vector<16x64xf32>
    %6 = tpu.matmul %4, %5, %cst {dimension_numbers = #tpu.dot_dimension_numbers<[1], [0], [0], [1], [0, 0, 1, 1], [], []>} : vector<16x32xbf16>, vector<32x64xbf16>, vector<16x64xf32> -> vector<16x64xf32>
    %7 = arith.addf %3, %6 : vector<16x64xf32>
    %c0_6 = arith.constant 0 : index
    %c0_7 = arith.constant 0 : index
    %8 = vector.load %arg7[%c0_6, %c0_7] : memref<16x64xf32, #tpu.memory_space<vmem>>, vector<16x64xf32>
    tpu.vector_store %arg7[%c0_6, %c0_7], %7 {strides = array<i32>} : memref<16x64xf32, #tpu.memory_space<vmem>>, vector<16x64xf32>,
    %c0_i32_8 = arith.constant 0 : i32
    %9 = arith.cmpi eq, %arg2, %c0_i32_8 : i32
    %10 = arith.extui %9 : i1 to i32
    %c0_i32_9 = arith.constant 0 : i32
    %11 = arith.cmpi ne, %10, %c0_i32_9 : i32
    scf.if %11 {
      %c0_10 = arith.constant 0 : index
      %c0_11 = arith.constant 0 : index
      %12 = vector.load %arg7[%c0_10, %c0_11] : memref<16x64xf32, #tpu.memory_space<vmem>>, vector<16x64xf32>
      %c0_12 = arith.constant 0 : index
      %c0_13 = arith.constant 0 : index
      %13 = vector.load %arg5[%c0_12, %c0_13] : memref<1x64xf32, #tpu.memory_space<vmem>>, vector<1x64xf32>
      %14 = vector.broadcast %13 : vector<1x64xf32> to vector<16x64xf32>
      %15 = arith.addf %12, %14 : vector<16x64xf32>
      %cst_14 = arith.constant 5.000000e-01 : f32
      %16 = vector.broadcast %cst_14 : f32 to vector<16x64xf32>
      %17 = arith.mulf %16, %15 : vector<16x64xf32>
      %cst_15 = arith.constant 4.471500e-02 : f32
      %18 = vector.broadcast %cst_15 : f32 to vector<16x64xf32>
      %19 = arith.mulf %18, %15 : vector<16x64xf32>
      %20 = arith.mulf %19, %15 : vector<16x64xf32>
      %21 = arith.mulf %20, %15 : vector<16x64xf32>
      %22 = arith.addf %15, %21 : vector<16x64xf32>
      %cst_16 = arith.constant 0.797884583 : f32
      %23 = vector.broadcast %cst_16 : f32 to vector<16x64xf32>
      %24 = arith.mulf %23, %22 : vector<16x64xf32>
      %25 = math.tanh %24 : vector<16x64xf32>
      %cst_17 = arith.constant 1.000000e+00 : f32
      %26 = vector.broadcast %cst_17 : f32 to vector<16x64xf32>
      %27 = arith.addf %26, %25 : vector<16x64xf32>
      %28 = arith.mulf %17, %27 : vector<16x64xf32>
      %29 = arith.truncf %28 : vector<16x64xf32> to vector<16x64xbf16>
      %c0_18 = arith.constant 0 : index
      %c0_19 = arith.constant 0 : index
      %30 = vector.load %arg6[%c0_18, %c0_19] : memref<16x64xbf16, #tpu.memory_space<vmem>>, vector<16x64xbf16>
      tpu.vector_store %arg6[%c0_18, %c0_19], %29 {strides = array<i32>} : memref<16x64xbf16, #tpu.memory_space<vmem>>, vector<16x64xbf16>,
    } else {
    }
    return
  }
  func.func @transform_0(%arg0: i32, %arg1: i32, %arg2: i32) -> (i32, i32) {
    %c0_i32 = arith.constant 0 : i32
    return %arg0, %arg2 : i32, i32
  }
  func.func @transform_1(%arg0: i32, %arg1: i32, %arg2: i32) -> (i32, i32) {
    %c0_i32 = arith.constant 0 : i32
    return %arg2, %arg1 : i32, i32
  }
  func.func @transform_2(%arg0: i32, %arg1: i32, %arg2: i32) -> (i32, i32) {
    %c0_i32 = arith.constant 0 : i32
    %c0_i32_0 = arith.constant 0 : i32
    return %c0_i32, %arg1 : i32, i32
  }
  func.func @transform_3(%arg0: i32, %arg1: i32, %arg2: i32) -> (i32, i32) {
    %c0_i32 = arith.constant 0 : i32
    return %arg0, %arg1 : i32, i32
  }
}

module attributes {stable_mosaic.version = 11 : i64} {
  func.func @_linear_residual_kernel(%arg0: i32, %arg1: i32, %arg2: i32, %arg3: i32, %arg4: memref<1x8x64xbf16, #tpu.memory_space<vmem>>, %arg5: memref<64x32xbf16, #tpu.memory_space<vmem>>, %arg6: memref<1x32xf32, #tpu.memory_space<vmem>>, %arg7: memref<1x8x32xf32, #tpu.memory_space<vmem>>, %arg8: memref<1x1x32xf32, #tpu.memory_space<vmem>>, %arg9: memref<1x8x32xf32, #tpu.memory_space<vmem>>, %arg10: memref<8x32xf32, #tpu.memory_space<vmem>>) attributes {dimension_semantics = [#tpu.dimension_semantics<parallel>, #tpu.dimension_semantics<parallel>, #tpu.dimension_semantics<parallel>, #tpu.dimension_semantics<arbitrary>], iteration_bounds = array<i64: 2, 1, 1, 1>, scalar_prefetch = 0 : i64, scratch_operands = 1 : i64, tpu.core_type = #tpu.core_type<tc>, window_params = [{transform_indices = @transform_0, window_bounds = array<i64: 1, 8, 64>}, {transform_indices = @transform_1, window_bounds = array<i64: 64, 32>}, {transform_indices = @transform_2, window_bounds = array<i64: 1, 32>}, {transform_indices = @transform_3, window_bounds = array<i64: 1, 8, 32>}, {transform_indices = @transform_4, window_bounds = array<i64: 1, 1, 32>}, {transform_indices = @transform_5, window_bounds = array<i64: 1, 8, 32>}]} {
    %c0_i32 = arith.constant 0 : i32
    %0 = arith.cmpi eq, %arg3, %c0_i32 : i32
    %1 = arith.extui %0 : i1 to i32
    %c0_i32_0 = arith.constant 0 : i32
    %2 = arith.cmpi ne, %1, %c0_i32_0 : i32
    scf.if %2 {
      %cst_11 = arith.constant 0.000000e+00 : f32
      %13 = vector.broadcast %cst_11 : f32 to vector<8x32xf32>
      %c0_12 = arith.constant 0 : index
      %c0_13 = arith.constant 0 : index
      %14 = vector.load %arg10[%c0_12, %c0_13] : memref<8x32xf32, #tpu.memory_space<vmem>>, vector<8x32xf32>
      tpu.vector_store %arg10[%c0_12, %c0_13], %13 {strides = array<i32>} : memref<8x32xf32, #tpu.memory_space<vmem>>, vector<8x32xf32>,
    } else {
    }
    %c0 = arith.constant 0 : index
    %c0_1 = arith.constant 0 : index
    %3 = vector.load %arg10[%c0, %c0_1] : memref<8x32xf32, #tpu.memory_space<vmem>>, vector<8x32xf32>
    %c0_2 = arith.constant 0 : index
    %c0_3 = arith.constant 0 : index
    %c0_4 = arith.constant 0 : index
    %4 = vector.load %arg4[%c0_2, %c0_3, %c0_4] : memref<1x8x64xbf16, #tpu.memory_space<vmem>>, vector<1x8x64xbf16>
    %5 = vector.shape_cast %4 : vector<1x8x64xbf16> to vector<8x64xbf16>
    %c0_5 = arith.constant 0 : index
    %c0_6 = arith.constant 0 : index
    %6 = vector.load %arg5[%c0_5, %c0_6] : memref<64x32xbf16, #tpu.memory_space<vmem>>, vector<64x32xbf16>
    %cst = arith.constant dense<0.000000e+00> : vector<8x32xf32>
    %7 = tpu.matmul %5, %6, %cst {dimension_numbers = #tpu.dot_dimension_numbers<[1], [0], [0], [1], [0, 0, 1, 1], [], []>} : vector<8x64xbf16>, vector<64x32xbf16>, vector<8x32xf32> -> vector<8x32xf32>
    %8 = arith.addf %3, %7 : vector<8x32xf32>
    %c0_7 = arith.constant 0 : index
    %c0_8 = arith.constant 0 : index
    %9 = vector.load %arg10[%c0_7, %c0_8] : memref<8x32xf32, #tpu.memory_space<vmem>>, vector<8x32xf32>
    tpu.vector_store %arg10[%c0_7, %c0_8], %8 {strides = array<i32>} : memref<8x32xf32, #tpu.memory_space<vmem>>, vector<8x32xf32>,
    %c0_i32_9 = arith.constant 0 : i32
    %10 = arith.cmpi eq, %arg3, %c0_i32_9 : i32
    %11 = arith.extui %10 : i1 to i32
    %c0_i32_10 = arith.constant 0 : i32
    %12 = arith.cmpi ne, %11, %c0_i32_10 : i32
    scf.if %12 {
      %c0_11 = arith.constant 0 : index
      %c0_12 = arith.constant 0 : index
      %13 = vector.load %arg10[%c0_11, %c0_12] : memref<8x32xf32, #tpu.memory_space<vmem>>, vector<8x32xf32>
      %c0_13 = arith.constant 0 : index
      %c0_14 = arith.constant 0 : index
      %14 = vector.load %arg6[%c0_13, %c0_14] : memref<1x32xf32, #tpu.memory_space<vmem>>, vector<1x32xf32>
      %15 = vector.broadcast %14 : vector<1x32xf32> to vector<8x32xf32>
      %16 = arith.addf %13, %15 : vector<8x32xf32>
      %c0_15 = arith.constant 0 : index
      %c0_16 = arith.constant 0 : index
      %c0_17 = arith.constant 0 : index
      %17 = vector.load %arg8[%c0_15, %c0_16, %c0_17] : memref<1x1x32xf32, #tpu.memory_space<vmem>>, vector<1x1x32xf32>
      %18 = vector.shape_cast %17 : vector<1x1x32xf32> to vector<1x32xf32>
      %19 = vector.broadcast %18 : vector<1x32xf32> to vector<8x32xf32>
      %20 = arith.mulf %16, %19 : vector<8x32xf32>
      %c0_18 = arith.constant 0 : index
      %c0_19 = arith.constant 0 : index
      %c0_20 = arith.constant 0 : index
      %21 = vector.load %arg7[%c0_18, %c0_19, %c0_20] : memref<1x8x32xf32, #tpu.memory_space<vmem>>, vector<1x8x32xf32>
      %22 = vector.shape_cast %21 : vector<1x8x32xf32> to vector<8x32xf32>
      %23 = arith.addf %22, %20 : vector<8x32xf32>
      %c0_21 = arith.constant 0 : index
      %c0_22 = arith.constant 0 : index
      %c0_23 = arith.constant 0 : index
      %24 = vector.load %arg9[%c0_21, %c0_22, %c0_23] : memref<1x8x32xf32, #tpu.memory_space<vmem>>, vector<1x8x32xf32>
      %25 = vector.shape_cast %24 : vector<1x8x32xf32> to vector<8x32xf32>
      %26 = vector.shape_cast %23 : vector<8x32xf32> to vector<1x8x32xf32>
      tpu.vector_store %arg9[%c0_21, %c0_22, %c0_23], %26 {strides = array<i32>} : memref<1x8x32xf32, #tpu.memory_space<vmem>>, vector<1x8x32xf32>,
    } else {
    }
    return
  }
  func.func @transform_0(%arg0: i32, %arg1: i32, %arg2: i32, %arg3: i32) -> (i32, i32, i32) {
    %c0_i32 = arith.constant 0 : i32
    return %arg0, %arg1, %arg3 : i32, i32, i32
  }
  func.func @transform_1(%arg0: i32, %arg1: i32, %arg2: i32, %arg3: i32) -> (i32, i32) {
    %c0_i32 = arith.constant 0 : i32
    return %arg3, %arg2 : i32, i32
  }
  func.func @transform_2(%arg0: i32, %arg1: i32, %arg2: i32, %arg3: i32) -> (i32, i32) {
    %c0_i32 = arith.constant 0 : i32
    %c0_i32_0 = arith.constant 0 : i32
    return %c0_i32, %arg2 : i32, i32
  }
  func.func @transform_3(%arg0: i32, %arg1: i32, %arg2: i32, %arg3: i32) -> (i32, i32, i32) {
    %c0_i32 = arith.constant 0 : i32
    return %arg0, %arg1, %arg2 : i32, i32, i32
  }
  func.func @transform_4(%arg0: i32, %arg1: i32, %arg2: i32, %arg3: i32) -> (i32, i32, i32) {
    %c0_i32 = arith.constant 0 : i32
    %c0_i32_0 = arith.constant 0 : i32
    return %arg0, %c0_i32, %arg2 : i32, i32, i32
  }
  func.func @transform_5(%arg0: i32, %arg1: i32, %arg2: i32, %arg3: i32) -> (i32, i32, i32) {
    %c0_i32 = arith.constant 0 : i32
    return %arg0, %arg1, %arg2 : i32, i32, i32
  }
}

module attributes {stable_mosaic.version = 11 : i64} {
  func.func @_linear_kernel(%arg0: i32, %arg1: i32, %arg2: i32, %arg3: memref<16x32xbf16, #tpu.memory_space<vmem>>, %arg4: memref<32x32xbf16, #tpu.memory_space<vmem>>, %arg5: memref<1x32xf32, #tpu.memory_space<vmem>>, %arg6: memref<16x32xf32, #tpu.memory_space<vmem>>, %arg7: memref<16x32xf32, #tpu.memory_space<vmem>>) attributes {dimension_semantics = [#tpu.dimension_semantics<parallel>, #tpu.dimension_semantics<parallel>, #tpu.dimension_semantics<arbitrary>], iteration_bounds = array<i64: 1, 1, 1>, scalar_prefetch = 0 : i64, scratch_operands = 1 : i64, tpu.core_type = #tpu.core_type<tc>, window_params = [{transform_indices = @transform_0, window_bounds = array<i64: 16, 32>}, {transform_indices = @transform_1, window_bounds = array<i64: 32, 32>}, {transform_indices = @transform_2, window_bounds = array<i64: 1, 32>}, {transform_indices = @transform_3, window_bounds = array<i64: 16, 32>}]} {
    %c0_i32 = arith.constant 0 : i32
    %0 = arith.cmpi eq, %arg2, %c0_i32 : i32
    %1 = arith.extui %0 : i1 to i32
    %c0_i32_0 = arith.constant 0 : i32
    %2 = arith.cmpi ne, %1, %c0_i32_0 : i32
    scf.if %2 {
      %cst_10 = arith.constant 0.000000e+00 : f32
      %12 = vector.broadcast %cst_10 : f32 to vector<16x32xf32>
      %c0_11 = arith.constant 0 : index
      %c0_12 = arith.constant 0 : index
      %13 = vector.load %arg7[%c0_11, %c0_12] : memref<16x32xf32, #tpu.memory_space<vmem>>, vector<16x32xf32>
      tpu.vector_store %arg7[%c0_11, %c0_12], %12 {strides = array<i32>} : memref<16x32xf32, #tpu.memory_space<vmem>>, vector<16x32xf32>,
    } else {
    }
    %c0 = arith.constant 0 : index
    %c0_1 = arith.constant 0 : index
    %3 = vector.load %arg7[%c0, %c0_1] : memref<16x32xf32, #tpu.memory_space<vmem>>, vector<16x32xf32>
    %c0_2 = arith.constant 0 : index
    %c0_3 = arith.constant 0 : index
    %4 = vector.load %arg3[%c0_2, %c0_3] : memref<16x32xbf16, #tpu.memory_space<vmem>>, vector<16x32xbf16>
    %c0_4 = arith.constant 0 : index
    %c0_5 = arith.constant 0 : index
    %5 = vector.load %arg4[%c0_4, %c0_5] : memref<32x32xbf16, #tpu.memory_space<vmem>>, vector<32x32xbf16>
    %cst = arith.constant dense<0.000000e+00> : vector<16x32xf32>
    %6 = tpu.matmul %4, %5, %cst {dimension_numbers = #tpu.dot_dimension_numbers<[1], [0], [0], [1], [0, 0, 1, 1], [], []>} : vector<16x32xbf16>, vector<32x32xbf16>, vector<16x32xf32> -> vector<16x32xf32>
    %7 = arith.addf %3, %6 : vector<16x32xf32>
    %c0_6 = arith.constant 0 : index
    %c0_7 = arith.constant 0 : index
    %8 = vector.load %arg7[%c0_6, %c0_7] : memref<16x32xf32, #tpu.memory_space<vmem>>, vector<16x32xf32>
    tpu.vector_store %arg7[%c0_6, %c0_7], %7 {strides = array<i32>} : memref<16x32xf32, #tpu.memory_space<vmem>>, vector<16x32xf32>,
    %c0_i32_8 = arith.constant 0 : i32
    %9 = arith.cmpi eq, %arg2, %c0_i32_8 : i32
    %10 = arith.extui %9 : i1 to i32
    %c0_i32_9 = arith.constant 0 : i32
    %11 = arith.cmpi ne, %10, %c0_i32_9 : i32
    scf.if %11 {
      %c0_10 = arith.constant 0 : index
      %c0_11 = arith.constant 0 : index
      %12 = vector.load %arg7[%c0_10, %c0_11] : memref<16x32xf32, #tpu.memory_space<vmem>>, vector<16x32xf32>
      %c0_12 = arith.constant 0 : index
      %c0_13 = arith.constant 0 : index
      %13 = vector.load %arg5[%c0_12, %c0_13] : memref<1x32xf32, #tpu.memory_space<vmem>>, vector<1x32xf32>
      %14 = vector.broadcast %13 : vector<1x32xf32> to vector<16x32xf32>
      %15 = arith.addf %12, %14 : vector<16x32xf32>
      %c0_14 = arith.constant 0 : index
      %c0_15 = arith.constant 0 : index
      %16 = vector.load %arg6[%c0_14, %c0_15] : memref<16x32xf32, #tpu.memory_space<vmem>>, vector<16x32xf32>
      tpu.vector_store %arg6[%c0_14, %c0_15], %15 {strides = array<i32>} : memref<16x32xf32, #tpu.memory_space<vmem>>, vector<16x32xf32>,
    } else {
    }
    return
  }
  func.func @transform_0(%arg0: i32, %arg1: i32, %arg2: i32) -> (i32, i32) {
    %c0_i32 = arith.constant 0 : i32
    return %arg0, %arg2 : i32, i32
  }
  func.func @transform_1(%arg0: i32, %arg1: i32, %arg2: i32) -> (i32, i32) {
    %c0_i32 = arith.constant 0 : i32
    return %arg2, %arg1 : i32, i32
  }
  func.func @transform_2(%arg0: i32, %arg1: i32, %arg2: i32) -> (i32, i32) {
    %c0_i32 = arith.constant 0 : i32
    %c0_i32_0 = arith.constant 0 : i32
    return %c0_i32, %arg1 : i32, i32
  }
  func.func @transform_3(%arg0: i32, %arg1: i32, %arg2: i32) -> (i32, i32) {
    %c0_i32 = arith.constant 0 : i32
    return %arg0, %arg1 : i32, i32
  }
}

</mosaic_0001>

<llo_original>
// kernel: vace_wan_attention_block_forward.18
$region0: #{vace_wan_attention_block_forward.18}
  #allocation0 [shape = 'u32[]', space=smem, size = 0x4, offset = 0x4, fixed_abs, tag = 'smem constant byte address 0x4 - core index']
  #allocation1 [shape = 'u32[144,128]{1,0:T(1,128)}', space=vmem, size = 0x12000, scoped, tag = 'internal scratch']
  %s0 = inlined_call_operand.vmem [shape: f32[2,8,32], index: 0, kind: input, shape index: {}]
  %s1 = inlined_call_operand.vmem [shape: f32[2,1,32], index: 1, kind: input, shape index: {}]
  %s2 = inlined_call_operand.vmem [shape: f32[2,1,32], index: 2, kind: input, shape index: {}]
  %s3 = inlined_call_operand.vmem [shape: bf16[2,8,32], index: 3, kind: output, shape index: {}]
  %s4 = sld [smem:[#allocation0]]
  $region45: #{vace_wan_attention_block_forward.18} parent=0
    _
  %s6 = ssub.s32 1, %s4
  %s7 = scalar_select 0, %s6, %s4
  loop: start=0, step=1, limit=4
  $region2: #{vace_wan_attention_block_forward.18} parent=0 // loop_pre_header
    _
  $region3: #{vace_wan_attention_block_forward.18} parent=0 // loop_header
    %s9 = sphi 0, %s13
    %p10 = scmp.ge.s32.totalorder %s9, 4
    %s16 = sphi 0, %s28
    %s17 = sphi 0, %s24
    %s18 = sphi 0, %s16
    %s19 = sphi 0, %s17
    %s20 = sphi 0, %s18
    %s21 = sphi 0, %s19
    %s33 = sphi 0, %s35
    %s36 = sphi 0, %s33
    %s37 = sphi 0, %s36
    %s53 = sphi 0, %s37
    %s59 = sphi 0, %s61
    %s62 = sphi 0, %s59
    %s63 = sphi 0, %s62
    %s79 = sphi 0, %s63
    %s85 = sphi 0, %s87
    %s88 = sphi 0, %s85
    %s89 = sphi 0, %s88
    %s105 = sphi 0, %s89
    %s113 = sphi 0, %s115
    %s116 = sphi 0, %s113
    %s117 = sphi 0, %s116
    %s133 = sphi 0, %s117
  $region4: #{vace_wan_attention_block_forward.18} parent=0 // loop_header_branch
    %12 = sbr.rel (%p10) target = $region8
  $region5: #{vace_wan_attention_block_forward.18} parent=0 // loop_body
    %s14 = ssub.s32 %s9, 1
    %s15 = ssub.s32 %s9, 2
    %s22 = sadd.s32 1, %s17
    %p23 = scmp.ge.s32.totalorder %s22, 1
    %s24 = scalar_select %p23, 0, %s22
    %s25 = sadd.s32 1, %s16
    %s26 = scalar_select %p23, %s25, %s16
    %p27 = scmp.ge.s32.totalorder %s26, 2
    %s28 = scalar_select %p27, 0, %s26
    %s29 = ssub.s32 %s16, %s28
    %s30 = ssub.s32 %s17, %s24
    %s31 = sor.u32 %s29, %s30
    %p32 = scmp.eq.s32.totalorder %s31, 0
    %s34 = sadd.s32 %s33, 1
    %s35 = scalar_select %p32, %s33, %s34
    %p38 = pneg %p32
    %p39 = scmp.eq.s32.totalorder %s9, 1
    %p40 = por %p38, %p39
    %p41 = scmp.ne.s32.totalorder %s33, %s36
    %p42 = scmp.eq.s32.totalorder %s9, 0
    %p43 = por %p41, %p42
    %p44 = scmp.ne.s32.totalorder %s33, %s36
    %p45 = scmp.eq.s32.totalorder %s14, 1
    %p46 = por %p44, %p45
    %p47 = scmp.ne.s32.totalorder %s36, %s37
    %p48 = scmp.eq.s32.totalorder %s14, 0
    %p49 = por %p47, %p48
    %p50 = scmp.ne.s32.totalorder %s36, %s37
    %p51 = scmp.eq.s32.totalorder %s15, 1
    %p52 = por %p50, %p51
    %p54 = scmp.ne.s32.totalorder %s37, %s53
    %p55 = scmp.eq.s32.totalorder %s15, 0
    %p56 = por %p54, %p55
    %s57 = ssub.s32 %s16, %s28
    %p58 = scmp.eq.s32.totalorder %s57, 0
    %s60 = sadd.s32 %s59, 1
    %s61 = scalar_select %p58, %s59, %s60
    %p64 = pneg %p58
    %p65 = scmp.eq.s32.totalorder %s9, 1
    %p66 = por %p64, %p65
    %p67 = scmp.ne.s32.totalorder %s59, %s62
    %p68 = scmp.eq.s32.totalorder %s9, 0
    %p69 = por %p67, %p68
    %p70 = scmp.ne.s32.totalorder %s59, %s62
    %p71 = scmp.eq.s32.totalorder %s14, 1
    %p72 = por %p70, %p71
    %p73 = scmp.ne.s32.totalorder %s62, %s63
    %p74 = scmp.eq.s32.totalorder %s14, 0
    %p75 = por %p73, %p74
    %p76 = scmp.ne.s32.totalorder %s62, %s63
    %p77 = scmp.eq.s32.totalorder %s15, 1
    %p78 = por %p76, %p77
    %p80 = scmp.ne.s32.totalorder %s63, %s79
    %p81 = scmp.eq.s32.totalorder %s15, 0
    %p82 = por %p80, %p81
    %s83 = ssub.s32 %s16, %s28
    %p84 = scmp.eq.s32.totalorder %s83, 0
    %s86 = sadd.s32 %s85, 1
    %s87 = scalar_select %p84, %s85, %s86
    %p90 = pneg %p84
    %p91 = scmp.eq.s32.totalorder %s9, 1
    %p92 = por %p90, %p91
    %p93 = scmp.ne.s32.totalorder %s85, %s88
    %p94 = scmp.eq.s32.totalorder %s9, 0
    %p95 = por %p93, %p94
    %p96 = scmp.ne.s32.totalorder %s85, %s88
    %p97 = scmp.eq.s32.totalorder %s14, 1
    %p98 = por %p96, %p97
    %p99 = scmp.ne.s32.totalorder %s88, %s89
    %p100 = scmp.eq.s32.totalorder %s14, 0
    %p101 = por %p99, %p100
    %p102 = scmp.ne.s32.totalorder %s88, %s89
    %p103 = scmp.eq.s32.totalorder %s15, 1
    %p104 = por %p102, %p103
    %p106 = scmp.ne.s32.totalorder %s89, %s105
    %p107 = scmp.eq.s32.totalorder %s15, 0
    %p108 = por %p106, %p107
    %s109 = ssub.s32 %s16, %s28
    %s110 = ssub.s32 %s17, %s24
    %s111 = sor.u32 %s109, %s110
    %p112 = scmp.eq.s32.totalorder %s111, 0
    %s114 = sadd.s32 %s113, 1
    %s115 = scalar_select %p112, %s113, %s114
    %p118 = pneg %p112
    %p119 = scmp.eq.s32.totalorder %s9, 1
    %p120 = por %p118, %p119
    %p121 = scmp.ne.s32.totalorder %s113, %s116
    %p122 = scmp.eq.s32.totalorder %s9, 0
    %p123 = por %p121, %p122
    %p124 = scmp.ne.s32.totalorder %s113, %s116
    %p125 = scmp.eq.s32.totalorder %s14, 1
    %p126 = por %p124, %p125
    %p127 = scmp.ne.s32.totalorder %s116, %s117
    %p128 = scmp.eq.s32.totalorder %s14, 0
    %p129 = por %p127, %p128
    %p130 = scmp.ne.s32.totalorder %s116, %s117
    %p131 = scmp.eq.s32.totalorder %s15, 1
    %p132 = por %p130, %p131
    %p134 = scmp.ne.s32.totalorder %s117, %s133
    %p135 = scmp.eq.s32.totalorder %s15, 0
    %p136 = por %p134, %p135
    %p137 = scmp.le.s32.totalorder 1, %s9
    %p138 = scmp.lt.s32.totalorder %s9, 3
    %p139 = pnand %p137, %p138
    %p140 = pneg %p139
    // Predicated region
    $region9: #{vace_wan_attention_block_forward.18} parent=5 // pred_check
      _
    $region10: #{vace_wan_attention_block_forward.18} parent=5 // pred_check_branch
      %142 = sbr.rel (%p139) target = $region12
    $region11: #{vace_wan_attention_block_forward.18} parent=5 // pred_region
      %s143 = ssub.s32 %s9, 1
    $region12: #{vace_wan_attention_block_forward.18} parent=5 // pred_fallthru
      _
    %p144 = scmp.lt.s32.totalorder %s9, 2
    // Predicated region
    $region13: #{vace_wan_attention_block_forward.18} parent=5 // pred_check
      %p145 = pneg %p144
    $region14: #{vace_wan_attention_block_forward.18} parent=5 // pred_check_branch
      %147 = sbr.rel (%p145) target = $region16
    $region15: #{vace_wan_attention_block_forward.18} parent=5 // pred_region
      // Predicated region
      $region17: #{vace_wan_attention_block_forward.18} parent=15 // pred_check
        %p148 = pneg %p43
      $region18: #{vace_wan_attention_block_forward.18} parent=15 // pred_check_branch
        %150 = sbr.rel (%p148) target = $region20
      $region19: #{vace_wan_attention_block_forward.18} parent=15 // pred_region
        %p151 = scmp.lt.s32.totalorder %s16, 1
        %s152 = scalar_select %p151, %s16, 1
        %p153 = scmp.lt.s32.totalorder %s17, 0
        %s154 = scalar_select %p153, %s17, 0
        %s155 = sadd.s32 %s154, %s152
        %s156 = smul.addr %s155, 8
        %s157 = scalar_lea.vmem %s0, %s156
      $region20: #{vace_wan_attention_block_forward.18} parent=15 // pred_fallthru
        _
      // Predicated region
      $region21: #{vace_wan_attention_block_forward.18} parent=15 // pred_check
        %p158 = pneg %p69
      $region22: #{vace_wan_attention_block_forward.18} parent=15 // pred_check_branch
        %160 = sbr.rel (%p158) target = $region24
      $region23: #{vace_wan_attention_block_forward.18} parent=15 // pred_region
        %p161 = scmp.lt.s32.totalorder %s16, 1
        %s162 = scalar_select %p161, %s16, 1
        %s163 = scalar_lea.vmem %s1, %s162
      $region24: #{vace_wan_attention_block_forward.18} parent=15 // pred_fallthru
        _
      // Predicated region
      $region25: #{vace_wan_attention_block_forward.18} parent=15 // pred_check
        %p164 = pneg %p95
      $region26: #{vace_wan_attention_block_forward.18} parent=15 // pred_check_branch
        %166 = sbr.rel (%p164) target = $region28
      $region27: #{vace_wan_attention_block_forward.18} parent=15 // pred_region
        %p167 = scmp.lt.s32.totalorder %s16, 1
        %s168 = scalar_select %p167, %s16, 1
        %s169 = scalar_lea.vmem %s2, %s168
      $region28: #{vace_wan_attention_block_forward.18} parent=15 // pred_fallthru
        _
    $region16: #{vace_wan_attention_block_forward.18} parent=5 // pred_fallthru
      _
    %p170 = scmp.le.s32.totalorder 1, %s9
    %p171 = scmp.lt.s32.totalorder %s9, 3
    %p172 = pnand %p170, %p171
    %p173 = pneg %p172
    // Predicated region
    $region29: #{vace_wan_attention_block_forward.18} parent=5 // pred_check
      _
    $region30: #{vace_wan_attention_block_forward.18} parent=5 // pred_check_branch
      %175 = sbr.rel (%p172) target = $region32
    $region31: #{vace_wan_attention_block_forward.18} parent=5 // pred_region
      %s176 = ssub.s32 %s9, 1
      %p177 = scmp.lt.s32.totalorder %s18, 1
      %s178 = scalar_select %p177, %s18, 1
      %p179 = scmp.lt.s32.totalorder %s19, 0
      %s180 = scalar_select %p179, %s19, 0
      %s181 = sadd.s32 %s180, %s178
      %s182 = smul.addr %s181, 8
      %s183 = scalar_lea.vmem %s0, %s182
      %p184 = pneg %p49
      %p185 = pneg %p46
      %p186 = scmp.lt.s32.totalorder %s18, 1
      %s187 = scalar_select %p186, %s18, 1
      %s188 = scalar_lea.vmem %s1, %s187
      %p189 = pneg %p75
      %p190 = pneg %p72
      %p191 = scmp.lt.s32.totalorder %s18, 1
      %s192 = scalar_select %p191, %s18, 1
      %s193 = scalar_lea.vmem %s2, %s192
      %p194 = pneg %p101
      %p195 = pneg %p98
      %p196 = pneg %p129
      %p197 = pneg %p126
      %p198 = scmp.lt.s32.totalorder %s18, 1
      %s199 = scalar_select %p198, %s18, 1
      %p200 = scmp.lt.s32.totalorder %s19, 0
      %s201 = scalar_select %p200, %s19, 0
      %s202 = sadd.s32 %s201, %s199
      %s203 = smul.addr %s202, 4
      %s204 = scalar_lea.vmem %s3, %s203
      %p205 = scmp.lt.s32.totalorder %s18, 1
      %s206 = scalar_select %p205, %s18, 1
      %p207 = scmp.lt.s32.totalorder %s19, 0
      %s208 = scalar_select %p207, %s19, 0
      %s209 = sadd.s32 %s208, %s206
      %s210 = smul.addr %s209, 8
      %s211 = scalar_lea.vmem %s0, %s210
      %p212 = scmp.lt.s32.totalorder %s18, 1
      %s213 = scalar_select %p212, %s18, 1
      %s214 = scalar_lea.vmem %s1, %s213
      %p215 = scmp.lt.s32.totalorder %s18, 1
      %s216 = scalar_select %p215, %s18, 1
      %s217 = scalar_lea.vmem %s2, %s216
      %p218 = scmp.lt.s32.totalorder %s18, 1
      %s219 = scalar_select %p218, %s18, 1
      %p220 = scmp.lt.s32.totalorder %s19, 0
      %s221 = scalar_select %p220, %s19, 0
      %s222 = sadd.s32 %s221, %s219
      %s223 = smul.addr %s222, 4
      %s224 = scalar_lea.vmem %s3, %s223
      %v225 = vld [vmem:[%s211] sm:$0xff]
      %vm226 = vcmask 261120
      %v227 = vsel %vm226, %v225, 0.0
      %228 = vadd.xlane.f32.xlu0 %v227
      %v229 = vpop.xlane.xlu0 %228
      %v230 = vrcp.pop 32.0
      %v231 = vmul.f32 %v229, %v230
      %v232 = vsub.f32 %v225, %v231
      %v233 = vmul.f32 %v232, %v232
      %v234 = vsel %vm226, %v233, 0.0
      %235 = vadd.xlane.f32.xlu0 %v234
      %v236 = vpop.xlane.xlu0 %235
      %v237 = vmul.f32 %v236, %v230
      %v238 = vadd.f32 %v237, 1e-06
      %v239 = vrsqrt.pop %v238
      %v240 = vmul.f32 %v232, %v239
      %v241 = vld [vmem:[%s214] sm:$0x1]
      %v242 = vadd.f32 %v241, 1.0
      %v244 = vlaneseq
      %v245 = vshrl.u32 %v244, 7
      %v246 = vsub.s32 0, %v245
      %v247 = vrot.slane %v242, %v246
      %v249 = vmul.f32 %v240, %v247
      %v250 = vld [vmem:[%s217] sm:$0x1]
      %v252 = vlaneseq
      %v253 = vshrl.u32 %v252, 7
      %v254 = vsub.s32 0, %v253
      %v255 = vrot.slane %v250, %v254
      %v257 = vadd.f32 %v249, %v255
      %v258 = vpack.c.bf16 %v257, %v257
      %vm259 = vcmask 257024
      %260 = vst.msk [vmem:[%s224] sm:$0xf] %vm259, %v258
      %p261 = scmp.lt.s32.totalorder %s18, 1
      %s262 = scalar_select %p261, %s18, 1
      %p263 = scmp.lt.s32.totalorder %s19, 0
      %s264 = scalar_select %p263, %s19, 0
      %s265 = sadd.s32 %s264, %s262
      %s266 = smul.addr %s265, 4
      %s267 = scalar_lea.vmem %s3, %s266
      // Predicated region
      $region33: #{vace_wan_attention_block_forward.18} parent=31 // pred_check
        %p268 = pneg %p126
      $region34: #{vace_wan_attention_block_forward.18} parent=31 // pred_check_branch
        %270 = sbr.rel (%p268) target = $region36
      $region35: #{vace_wan_attention_block_forward.18} parent=31 // pred_region
        _
      $region36: #{vace_wan_attention_block_forward.18} parent=31 // pred_fallthru
        _
    $region32: #{vace_wan_attention_block_forward.18} parent=5 // pred_fallthru
      _
    %p271 = scmp.le.s32.totalorder 2, %s9
    // Predicated region
    $region37: #{vace_wan_attention_block_forward.18} parent=5 // pred_check
      %p272 = pneg %p271
    $region38: #{vace_wan_attention_block_forward.18} parent=5 // pred_check_branch
      %274 = sbr.rel (%p272) target = $region40
    $region39: #{vace_wan_attention_block_forward.18} parent=5 // pred_region
      %s275 = ssub.s32 %s9, 2
      // Predicated region
      $region41: #{vace_wan_attention_block_forward.18} parent=39 // pred_check
        %p276 = pneg %p132
      $region42: #{vace_wan_attention_block_forward.18} parent=39 // pred_check_branch
        %278 = sbr.rel (%p276) target = $region44
      $region43: #{vace_wan_attention_block_forward.18} parent=39 // pred_region
        %p279 = scmp.lt.s32.totalorder %s20, 1
        %s280 = scalar_select %p279, %s20, 1
        %p281 = scmp.lt.s32.totalorder %s21, 0
        %s282 = scalar_select %p281, %s21, 0
        %s283 = sadd.s32 %s282, %s280
        %s284 = smul.addr %s283, 4
        %s285 = scalar_lea.vmem %s3, %s284
      $region44: #{vace_wan_attention_block_forward.18} parent=39 // pred_fallthru
        _
    $region40: #{vace_wan_attention_block_forward.18} parent=5 // pred_fallthru
      _
  $region6: #{vace_wan_attention_block_forward.18} parent=0 // loop_footer
    %s13 = sadd.s32 1, %s9
  $region7: #{vace_wan_attention_block_forward.18} parent=0 // loop_footer_branch
    %8 = sbr.rel target = $region3
  $region8: #{vace_wan_attention_block_forward.18} parent=0 // loop_exit
    _

// kernel: vace_wan_attention_block_forward.17
$region0: #{vace_wan_attention_block_forward.17}
  #allocation0 [shape = 'u32[]', space=smem, size = 0x4, offset = 0x4, fixed_abs, tag = 'smem constant byte address 0x4 - core index']
  #allocation1 [shape = 'u32[144,128]{1,0:T(1,128)}', space=vmem, size = 0x12000, scoped, tag = 'internal scratch']
  #allocation2 [shape = 'f32[8,32]{1,0:T(8,128)}', space=vmem, size = 0x1000, scoped, tag = 'scratch operand']
  %s0 = inlined_call_operand.vmem [shape: bf16[2,8,32], index: 0, kind: input, shape index: {}]
  %s1 = inlined_call_operand.vmem [shape: bf16[32,32], index: 1, kind: input, shape index: {}]
  %s2 = inlined_call_operand.vmem [shape: f32[1,32], index: 2, kind: input, shape index: {}]
  %s3 = inlined_call_operand.vmem [shape: f32[2,8,32], index: 3, kind: input, shape index: {}]
  %s4 = inlined_call_operand.vmem [shape: f32[2,8,32], index: 4, kind: output, shape index: {}]
  %s5 = sld [smem:[#allocation0]]
  $region57: #{vace_wan_attention_block_forward.17} parent=0
    _
  %s7 = ssub.s32 1, %s5
  %s8 = scalar_select 0, %s7, %s5
  loop: start=0, step=1, limit=4
  $region2: #{vace_wan_attention_block_forward.17} parent=0 // loop_pre_header
    _
  $region3: #{vace_wan_attention_block_forward.17} parent=0 // loop_header
    %s10 = sphi 0, %s14
    %p11 = scmp.ge.s32.totalorder %s10, 4
    %s17 = sphi 0, %s43
    %s18 = sphi 0, %s39
    %s19 = sphi 0, %s35
    %s20 = sphi 0, %s31
    %s21 = sphi 0, %s17
    %s22 = sphi 0, %s18
    %s23 = sphi 0, %s19
    %s24 = sphi 0, %s20
    %s25 = sphi 0, %s21
    %s26 = sphi 0, %s22
    %s27 = sphi 0, %s23
    %s28 = sphi 0, %s24
    %s50 = sphi 0, %s52
    %s53 = sphi 0, %s50
    %s54 = sphi 0, %s53
    %s70 = sphi 0, %s54
    %s78 = sphi 0, %s80
    %s81 = sphi 0, %s78
    %s82 = sphi 0, %s81
    %s98 = sphi 0, %s82
    %s104 = sphi 0, %s106
    %s107 = sphi 0, %s104
    %s108 = sphi 0, %s107
    %s124 = sphi 0, %s108
    %s134 = sphi 0, %s136
    %s137 = sphi 0, %s134
    %s138 = sphi 0, %s137
    %s154 = sphi 0, %s138
    %s164 = sphi 0, %s166
    %s167 = sphi 0, %s164
    %s168 = sphi 0, %s167
    %s184 = sphi 0, %s168
  $region4: #{vace_wan_attention_block_forward.17} parent=0 // loop_header_branch
    %13 = sbr.rel (%p11) target = $region8
  $region5: #{vace_wan_attention_block_forward.17} parent=0 // loop_body
    %s15 = ssub.s32 %s10, 1
    %s16 = ssub.s32 %s10, 2
    %s29 = sadd.s32 1, %s20
    %p30 = scmp.ge.s32.totalorder %s29, 1
    %s31 = scalar_select %p30, 0, %s29
    %s32 = sadd.s32 1, %s19
    %s33 = scalar_select %p30, %s32, %s19
    %p34 = scmp.ge.s32.totalorder %s33, 1
    %s35 = scalar_select %p34, 0, %s33
    %s36 = sadd.s32 1, %s18
    %s37 = scalar_select %p34, %s36, %s18
    %p38 = scmp.ge.s32.totalorder %s37, 1
    %s39 = scalar_select %p38, 0, %s37
    %s40 = sadd.s32 1, %s17
    %s41 = scalar_select %p38, %s40, %s17
    %p42 = scmp.ge.s32.totalorder %s41, 2
    %s43 = scalar_select %p42, 0, %s41
    %s44 = ssub.s32 %s17, %s43
    %s45 = ssub.s32 %s18, %s39
    %s46 = sor.u32 %s44, %s45
    %s47 = ssub.s32 %s20, %s31
    %s48 = sor.u32 %s46, %s47
    %p49 = scmp.eq.s32.totalorder %s48, 0
    %s51 = sadd.s32 %s50, 1
    %s52 = scalar_select %p49, %s50, %s51
    %p55 = pneg %p49
    %p56 = scmp.eq.s32.totalorder %s10, 1
    %p57 = por %p55, %p56
    %p58 = scmp.ne.s32.totalorder %s50, %s53
    %p59 = scmp.eq.s32.totalorder %s10, 0
    %p60 = por %p58, %p59
    %p61 = scmp.ne.s32.totalorder %s50, %s53
    %p62 = scmp.eq.s32.totalorder %s15, 1
    %p63 = por %p61, %p62
    %p64 = scmp.ne.s32.totalorder %s53, %s54
    %p65 = scmp.eq.s32.totalorder %s15, 0
    %p66 = por %p64, %p65
    %p67 = scmp.ne.s32.totalorder %s53, %s54
    %p68 = scmp.eq.s32.totalorder %s16, 1
    %p69 = por %p67, %p68
    %p71 = scmp.ne.s32.totalorder %s54, %s70
    %p72 = scmp.eq.s32.totalorder %s16, 0
    %p73 = por %p71, %p72
    %s74 = ssub.s32 %s20, %s31
    %s75 = ssub.s32 %s19, %s35
    %s76 = sor.u32 %s74, %s75
    %p77 = scmp.eq.s32.totalorder %s76, 0
    %s79 = sadd.s32 %s78, 1
    %s80 = scalar_select %p77, %s78, %s79
    %p83 = pneg %p77
    %p84 = scmp.eq.s32.totalorder %s10, 1
    %p85 = por %p83, %p84
    %p86 = scmp.ne.s32.totalorder %s78, %s81
    %p87 = scmp.eq.s32.totalorder %s10, 0
    %p88 = por %p86, %p87
    %p89 = scmp.ne.s32.totalorder %s78, %s81
    %p90 = scmp.eq.s32.totalorder %s15, 1
    %p91 = por %p89, %p90
    %p92 = scmp.ne.s32.totalorder %s81, %s82
    %p93 = scmp.eq.s32.totalorder %s15, 0
    %p94 = por %p92, %p93
    %p95 = scmp.ne.s32.totalorder %s81, %s82
    %p96 = scmp.eq.s32.totalorder %s16, 1
    %p97 = por %p95, %p96
    %p99 = scmp.ne.s32.totalorder %s82, %s98
    %p100 = scmp.eq.s32.totalorder %s16, 0
    %p101 = por %p99, %p100
    %s102 = ssub.s32 %s19, %s35
    %p103 = scmp.eq.s32.totalorder %s102, 0
    %s105 = sadd.s32 %s104, 1
    %s106 = scalar_select %p103, %s104, %s105
    %p109 = pneg %p103
    %p110 = scmp.eq.s32.totalorder %s10, 1
    %p111 = por %p109, %p110
    %p112 = scmp.ne.s32.totalorder %s104, %s107
    %p113 = scmp.eq.s32.totalorder %s10, 0
    %p114 = por %p112, %p113
    %p115 = scmp.ne.s32.totalorder %s104, %s107
    %p116 = scmp.eq.s32.totalorder %s15, 1
    %p117 = por %p115, %p116
    %p118 = scmp.ne.s32.totalorder %s107, %s108
    %p119 = scmp.eq.s32.totalorder %s15, 0
    %p120 = por %p118, %p119
    %p121 = scmp.ne.s32.totalorder %s107, %s108
    %p122 = scmp.eq.s32.totalorder %s16, 1
    %p123 = por %p121, %p122
    %p125 = scmp.ne.s32.totalorder %s108, %s124
    %p126 = scmp.eq.s32.totalorder %s16, 0
    %p127 = por %p125, %p126
    %s128 = ssub.s32 %s17, %s43
    %s129 = ssub.s32 %s18, %s39
    %s130 = sor.u32 %s128, %s129
    %s131 = ssub.s32 %s19, %s35
    %s132 = sor.u32 %s130, %s131
    %p133 = scmp.eq.s32.totalorder %s132, 0
    %s135 = sadd.s32 %s134, 1
    %s136 = scalar_select %p133, %s134, %s135
    %p139 = pneg %p133
    %p140 = scmp.eq.s32.totalorder %s10, 1
    %p141 = por %p139, %p140
    %p142 = scmp.ne.s32.totalorder %s134, %s137
    %p143 = scmp.eq.s32.totalorder %s10, 0
    %p144 = por %p142, %p143
    %p145 = scmp.ne.s32.totalorder %s134, %s137
    %p146 = scmp.eq.s32.totalorder %s15, 1
    %p147 = por %p145, %p146
    %p148 = scmp.ne.s32.totalorder %s137, %s138
    %p149 = scmp.eq.s32.totalorder %s15, 0
    %p150 = por %p148, %p149
    %p151 = scmp.ne.s32.totalorder %s137, %s138
    %p152 = scmp.eq.s32.totalorder %s16, 1
    %p153 = por %p151, %p152
    %p155 = scmp.ne.s32.totalorder %s138, %s154
    %p156 = scmp.eq.s32.totalorder %s16, 0
    %p157 = por %p155, %p156
    %s158 = ssub.s32 %s17, %s43
    %s159 = ssub.s32 %s18, %s39
    %s160 = sor.u32 %s158, %s159
    %s161 = ssub.s32 %s19, %s35
    %s162 = sor.u32 %s160, %s161
    %p163 = scmp.eq.s32.totalorder %s162, 0
    %s165 = sadd.s32 %s164, 1
    %s166 = scalar_select %p163, %s164, %s165
    %p169 = pneg %p163
    %p170 = scmp.eq.s32.totalorder %s10, 1
    %p171 = por %p169, %p170
    %p172 = scmp.ne.s32.totalorder %s164, %s167
    %p173 = scmp.eq.s32.totalorder %s10, 0
    %p174 = por %p172, %p173
    %p175 = scmp.ne.s32.totalorder %s164, %s167
    %p176 = scmp.eq.s32.totalorder %s15, 1
    %p177 = por %p175, %p176
    %p178 = scmp.ne.s32.totalorder %s167, %s168
    %p179 = scmp.eq.s32.totalorder %s15, 0
    %p180 = por %p178, %p179
    %p181 = scmp.ne.s32.totalorder %s167, %s168
    %p182 = scmp.eq.s32.totalorder %s16, 1
    %p183 = por %p181, %p182
    %p185 = scmp.ne.s32.totalorder %s168, %s184
    %p186 = scmp.eq.s32.totalorder %s16, 0
    %p187 = por %p185, %p186
    %p188 = scmp.le.s32.totalorder 1, %s10
    %p189 = scmp.lt.s32.totalorder %s10, 3
    %p190 = pnand %p188, %p189
    %p191 = pneg %p190
    // Predicated region
    $region9: #{vace_wan_attention_block_forward.17} parent=5 // pred_check
      _
    $region10: #{vace_wan_attention_block_forward.17} parent=5 // pred_check_branch
      %193 = sbr.rel (%p190) target = $region12
    $region11: #{vace_wan_attention_block_forward.17} parent=5 // pred_region
      %s194 = ssub.s32 %s10, 1
      // Predicated region
      $region13: #{vace_wan_attention_block_forward.17} parent=11 // pred_check
        %p195 = pneg %p94
      $region14: #{vace_wan_attention_block_forward.17} parent=11 // pred_check_branch
        %197 = sbr.rel (%p195) target = $region16
      $region15: #{vace_wan_attention_block_forward.17} parent=11 // pred_region
        %s198 = smul.u32 4, %s24
        %p199 = scmp.lt.s32.totalorder %s198, 3
        %s200 = scalar_select %p199, %s198, 3
        %p201 = scmp.lt.s32.totalorder %s23, 0
        %s202 = scalar_select %p201, %s23, 0
        %s203 = sadd.s32 %s202, %s200
        %s204 = smul.addr %s203, 4
        %s205 = scalar_lea.vmem %s1, %s204
        %s206 = smul.u32 4, %s24
      $region16: #{vace_wan_attention_block_forward.17} parent=11 // pred_fallthru
        _
      // Predicated region
      $region17: #{vace_wan_attention_block_forward.17} parent=11 // pred_check
        %p207 = pneg %p120
      $region18: #{vace_wan_attention_block_forward.17} parent=11 // pred_check_branch
        %209 = sbr.rel (%p207) target = $region20
      $region19: #{vace_wan_attention_block_forward.17} parent=11 // pred_region
        %p210 = scmp.lt.s32.totalorder %s23, 0
        %s211 = scalar_select %p210, %s23, 0
        %s212 = scalar_lea.vmem %s2, %s211
      $region20: #{vace_wan_attention_block_forward.17} parent=11 // pred_fallthru
        _
    $region12: #{vace_wan_attention_block_forward.17} parent=5 // pred_fallthru
      _
    %p213 = scmp.lt.s32.totalorder %s10, 2
    // Predicated region
    $region21: #{vace_wan_attention_block_forward.17} parent=5 // pred_check
      %p214 = pneg %p213
    $region22: #{vace_wan_attention_block_forward.17} parent=5 // pred_check_branch
      %216 = sbr.rel (%p214) target = $region24
    $region23: #{vace_wan_attention_block_forward.17} parent=5 // pred_region
      // Predicated region
      $region25: #{vace_wan_attention_block_forward.17} parent=23 // pred_check
        %p217 = pneg %p60
      $region26: #{vace_wan_attention_block_forward.17} parent=23 // pred_check_branch
        %219 = sbr.rel (%p217) target = $region28
      $region27: #{vace_wan_attention_block_forward.17} parent=23 // pred_region
        %p220 = scmp.lt.s32.totalorder %s17, 1
        %s221 = scalar_select %p220, %s17, 1
        %p222 = scmp.lt.s32.totalorder %s18, 0
        %s223 = scalar_select %p222, %s18, 0
        %p224 = scmp.lt.s32.totalorder %s20, 0
        %s225 = scalar_select %p224, %s20, 0
        %s226 = sadd.s32 %s225, %s223
        %s227 = sadd.s32 %s226, %s221
        %s228 = smul.addr %s227, 4
        %s229 = scalar_lea.vmem %s0, %s228
      $region28: #{vace_wan_attention_block_forward.17} parent=23 // pred_fallthru
        _
      // Predicated region
      $region29: #{vace_wan_attention_block_forward.17} parent=23 // pred_check
        %p230 = pneg %p144
      $region30: #{vace_wan_attention_block_forward.17} parent=23 // pred_check_branch
        %232 = sbr.rel (%p230) target = $region32
      $region31: #{vace_wan_attention_block_forward.17} parent=23 // pred_region
        %p233 = scmp.lt.s32.totalorder %s17, 1
        %s234 = scalar_select %p233, %s17, 1
        %p235 = scmp.lt.s32.totalorder %s18, 0
        %s236 = scalar_select %p235, %s18, 0
        %p237 = scmp.lt.s32.totalorder %s19, 0
        %s238 = scalar_select %p237, %s19, 0
        %s239 = sadd.s32 %s238, %s236
        %s240 = sadd.s32 %s239, %s234
        %s241 = smul.addr %s240, 8
        %s242 = scalar_lea.vmem %s3, %s241
      $region32: #{vace_wan_attention_block_forward.17} parent=23 // pred_fallthru
        _
    $region24: #{vace_wan_attention_block_forward.17} parent=5 // pred_fallthru
      _
    %p243 = scmp.le.s32.totalorder 1, %s10
    %p244 = scmp.lt.s32.totalorder %s10, 3
    %p245 = pnand %p243, %p244
    %p246 = pneg %p245
    // Predicated region
    $region33: #{vace_wan_attention_block_forward.17} parent=5 // pred_check
      _
    $region34: #{vace_wan_attention_block_forward.17} parent=5 // pred_check_branch
      %248 = sbr.rel (%p245) target = $region36
    $region35: #{vace_wan_attention_block_forward.17} parent=5 // pred_region
      %s249 = ssub.s32 %s10, 1
      %p250 = scmp.lt.s32.totalorder %s21, 1
      %s251 = scalar_select %p250, %s21, 1
      %p252 = scmp.lt.s32.totalorder %s22, 0
      %s253 = scalar_select %p252, %s22, 0
      %p254 = scmp.lt.s32.totalorder %s24, 0
      %s255 = scalar_select %p254, %s24, 0
      %s256 = sadd.s32 %s255, %s253
      %s257 = sadd.s32 %s256, %s251
      %s258 = smul.addr %s257, 4
      %s259 = scalar_lea.vmem %s0, %s258
      %p260 = pneg %p66
      %p261 = pneg %p63
      %s262 = smul.u32 4, %s24
      %p263 = scmp.lt.s32.totalorder %s262, 3
      %s264 = scalar_select %p263, %s262, 3
      %p265 = scmp.lt.s32.totalorder %s23, 0
      %s266 = scalar_select %p265, %s23, 0
      %s267 = sadd.s32 %s266, %s264
      %s268 = smul.addr %s267, 4
      %s269 = scalar_lea.vmem %s1, %s268
      %p270 = pneg %p94
      %p271 = pneg %p91
      %p272 = scmp.lt.s32.totalorder %s23, 0
      %s273 = scalar_select %p272, %s23, 0
      %s274 = scalar_lea.vmem %s2, %s273
      %p275 = pneg %p120
      %p276 = pneg %p117
      %p277 = scmp.lt.s32.totalorder %s21, 1
      %s278 = scalar_select %p277, %s21, 1
      %p279 = scmp.lt.s32.totalorder %s22, 0
      %s280 = scalar_select %p279, %s22, 0
      %p281 = scmp.lt.s32.totalorder %s23, 0
      %s282 = scalar_select %p281, %s23, 0
      %s283 = sadd.s32 %s282, %s280
      %s284 = sadd.s32 %s283, %s278
      %s285 = smul.addr %s284, 8
      %s286 = scalar_lea.vmem %s3, %s285
      %p287 = pneg %p150
      %p288 = pneg %p147
      %p289 = pneg %p180
      %p290 = pneg %p177
      %p291 = scmp.lt.s32.totalorder %s21, 1
      %s292 = scalar_select %p291, %s21, 1
      %p293 = scmp.lt.s32.totalorder %s22, 0
      %s294 = scalar_select %p293, %s22, 0
      %p295 = scmp.lt.s32.totalorder %s23, 0
      %s296 = scalar_select %p295, %s23, 0
      %s297 = sadd.s32 %s296, %s294
      %s298 = sadd.s32 %s297, %s292
      %s299 = smul.addr %s298, 8
      %s300 = scalar_lea.vmem %s4, %s299
      %p301 = scmp.lt.s32.totalorder %s21, 1
      %s302 = scalar_select %p301, %s21, 1
      %p303 = scmp.lt.s32.totalorder %s22, 0
      %s304 = scalar_select %p303, %s22, 0
      %p305 = scmp.lt.s32.totalorder %s24, 0
      %s306 = scalar_select %p305, %s24, 0
      %s307 = sadd.s32 %s306, %s304
      %s308 = sadd.s32 %s307, %s302
      %s309 = smul.addr %s308, 4
      %s310 = scalar_lea.vmem %s0, %s309
      %s311 = smul.u32 4, %s24
      %p312 = scmp.lt.s32.totalorder %s311, 3
      %s313 = scalar_select %p312, %s311, 3
      %p314 = scmp.lt.s32.totalorder %s23, 0
      %s315 = scalar_select %p314, %s23, 0
      %s316 = sadd.s32 %s315, %s313
      %s317 = smul.addr %s316, 4
      %s318 = scalar_lea.vmem %s1, %s317
      %s319 = smul.u32 4, %s24
      %p320 = scmp.lt.s32.totalorder %s23, 0
      %s321 = scalar_select %p320, %s23, 0
      %s322 = scalar_lea.vmem %s2, %s321
      %p323 = scmp.lt.s32.totalorder %s21, 1
      %s324 = scalar_select %p323, %s21, 1
      %p325 = scmp.lt.s32.totalorder %s22, 0
      %s326 = scalar_select %p325, %s22, 0
      %p327 = scmp.lt.s32.totalorder %s23, 0
      %s328 = scalar_select %p327, %s23, 0
      %s329 = sadd.s32 %s328, %s326
      %s330 = sadd.s32 %s329, %s324
      %s331 = smul.addr %s330, 8
      %s332 = scalar_lea.vmem %s3, %s331
      %p333 = scmp.lt.s32.totalorder %s21, 1
      %s334 = scalar_select %p333, %s21, 1
      %p335 = scmp.lt.s32.totalorder %s22, 0
      %s336 = scalar_select %p335, %s22, 0
      %p337 = scmp.lt.s32.totalorder %s23, 0
      %s338 = scalar_select %p337, %s23, 0
      %s339 = sadd.s32 %s338, %s336
      %s340 = sadd.s32 %s339, %s334
      %s341 = smul.addr %s340, 8
      %s342 = scalar_lea.vmem %s4, %s341
      %p344 = scmp.eq.s32.totalorder %s24, 0
      // Predicated region
      $region37: #{vace_wan_attention_block_forward.17} parent=35 // pred_check
        %p345 = pneg %p344
      $region38: #{vace_wan_attention_block_forward.17} parent=35 // pred_check_branch
        %347 = sbr.rel (%p345) target = $region40
      $region39: #{vace_wan_attention_block_forward.17} parent=35 // pred_region
        %vm348 = vcmask 261120
        %349 = vst.msk [vmem:[#allocation2] sm:$0xff] %vm348, 0.0
      $region40: #{vace_wan_attention_block_forward.17} parent=35 // pred_fallthru
        _
      %v350 = vld [vmem:[#allocation2] sm:$0xff]
      %v351 = vld [vmem:[%s310] sm:$0xf]
      %v352 = vld [vmem:[%s318] sm:$0xf]
      %v353 = vld [vmem:[%s318 + $0x4] sm:$0xf]
      %v354 = vld [vmem:[%s318 + $0x8] sm:$0xf]
      %v355 = vld [vmem:[%s318 + $0xc] sm:$0xf]
      %v360 = vunpack.c.l.b16 %v352
      %v361 = vunpack.c.l.b16 %v353
      %v362 = vunpack.c.l.b16 %v354
      %v363 = vunpack.c.l.b16 %v355
      %v364 = vpack.c.b16 %v361, %v360
      %v365 = vpack.c.b16 %v363, %v362
      %vm368 = vcmask 261120
      %v370 = vsel %vm368, %v351, 0
      %372 = vmatprep.subr.bf16.mxu0 0
      %373 = vmatpush1.bf16.msra.mxu0 %v364
      %374 = vmatprep.subr.bf16.mxu0 0
      %375 = vmatpush1.bf16.msra.mxu0 %v365
      %376 = vmatprep.subr.bf16.mxu0 0
      %377 = vmatpush1.bf16.msra.mxu0 0
      %378 = vmatprep.subr.bf16.mxu0 0
      %379 = vmatpush1.bf16.msra.mxu0 0
      %380 = vmatprep.subr.bf16.mxu0 0
      %381 = vmatpush1.bf16.msra.mxu0 0
      %382 = vmatprep.subr.bf16.mxu0 0
      %383 = vmatpush1.bf16.msra.mxu0 0
      %384 = vmatprep.subr.bf16.mxu0 0
      %385 = vmatpush1.bf16.msra.mxu0 0
      %386 = vmatprep.subr.bf16.mxu0 0
      %387 = vmatpush1.bf16.msra.mxu0 0
      %388 = vmatprep.subr.bf16.mxu0 0
      %389 = vmatpush1.bf16.msra.mxu0 0
      %390 = vmatprep.subr.bf16.mxu0 0
      %391 = vmatpush1.bf16.msra.mxu0 0
      %392 = vmatprep.subr.bf16.mxu0 0
      %393 = vmatpush1.bf16.msra.mxu0 0
      %394 = vmatprep.subr.bf16.mxu0 0
      %395 = vmatpush1.bf16.msra.mxu0 0
      %396 = vmatprep.subr.bf16.mxu0 0
      %397 = vmatpush1.bf16.msra.mxu0 0
      %398 = vmatprep.subr.bf16.mxu0 0
      %399 = vmatpush1.bf16.msra.mxu0 0
      %400 = vmatprep.subr.bf16.mxu0 0
      %401 = vmatpush1.bf16.msra.mxu0 0
      %402 = vmatprep.subr.bf16.mxu0 0
      %403 = vmatpush1.bf16.msra.mxu0 0
      %404 = vmatprep.mubr.bf16.mxu0 0
      %405 = vmatmul.mubr.bf16.gmra.mrb[0].mxu0 %v370
      %v406 = vpop.f32.mrb[0].mxu0
      %v407 = vadd.f32 0.0, %v406
      %v408 = vpop.f32.mrb[0].mxu0
      %v409 = vpop.f32.mrb[0].mxu0
      %v410 = vpop.f32.mrb[0].mxu0
      %411 = vdwg.mxu0
      %v412 = vadd.f32 %v350, %v407
      %413 = vst.msk [vmem:[#allocation2] sm:$0xff] %vm368, %v412
      // Predicated region
      $region41: #{vace_wan_attention_block_forward.17} parent=35 // pred_check
        %p414 = pneg %p344
      $region42: #{vace_wan_attention_block_forward.17} parent=35 // pred_check_branch
        %416 = sbr.rel (%p414) target = $region44
      $region43: #{vace_wan_attention_block_forward.17} parent=35 // pred_region
        %v417 = vld [vmem:[#allocation2] sm:$0xff]
        %v418 = vld [vmem:[%s322] sm:$0x1]
        %v420 = vlaneseq
        %v421 = vshrl.u32 %v420, 7
        %v422 = vsub.s32 0, %v421
        %v423 = vrot.slane %v418, %v422
        %v425 = vadd.f32 %v417, %v423
        %v426 = vld [vmem:[%s332] sm:$0xff]
        %v427 = vadd.f32 %v426, %v425
        %428 = vst.msk [vmem:[%s342] sm:$0xff] %vm368, %v427
      $region44: #{vace_wan_attention_block_forward.17} parent=35 // pred_fallthru
        _
      %p429 = scmp.lt.s32.totalorder %s21, 1
      %s430 = scalar_select %p429, %s21, 1
      %p431 = scmp.lt.s32.totalorder %s22, 0
      %s432 = scalar_select %p431, %s22, 0
      %p433 = scmp.lt.s32.totalorder %s23, 0
      %s434 = scalar_select %p433, %s23, 0
      %s435 = sadd.s32 %s434, %s432
      %s436 = sadd.s32 %s435, %s430
      %s437 = smul.addr %s436, 8
      %s438 = scalar_lea.vmem %s4, %s437
      // Predicated region
      $region45: #{vace_wan_attention_block_forward.17} parent=35 // pred_check
        %p439 = pneg %p177
      $region46: #{vace_wan_attention_block_forward.17} parent=35 // pred_check_branch
        %441 = sbr.rel (%p439) target = $region48
      $region47: #{vace_wan_attention_block_forward.17} parent=35 // pred_region
        _
      $region48: #{vace_wan_attention_block_forward.17} parent=35 // pred_fallthru
        _
    $region36: #{vace_wan_attention_block_forward.17} parent=5 // pred_fallthru
      _
    %p442 = scmp.le.s32.totalorder 2, %s10
    // Predicated region
    $region49: #{vace_wan_attention_block_forward.17} parent=5 // pred_check
      %p443 = pneg %p442
    $region50: #{vace_wan_attention_block_forward.17} parent=5 // pred_check_branch
      %445 = sbr.rel (%p443) target = $region52
    $region51: #{vace_wan_attention_block_forward.17} parent=5 // pred_region
      %s446 = ssub.s32 %s10, 2
      // Predicated region
      $region53: #{vace_wan_attention_block_forward.17} parent=51 // pred_check
        %p447 = pneg %p183
      $region54: #{vace_wan_attention_block_forward.17} parent=51 // pred_check_branch
        %449 = sbr.rel (%p447) target = $region56
      $region55: #{vace_wan_attention_block_forward.17} parent=51 // pred_region
        %p450 = scmp.lt.s32.totalorder %s25, 1
        %s451 = scalar_select %p450, %s25, 1
        %p452 = scmp.lt.s32.totalorder %s26, 0
        %s453 = scalar_select %p452, %s26, 0
        %p454 = scmp.lt.s32.totalorder %s27, 0
        %s455 = scalar_select %p454, %s27, 0
        %s456 = sadd.s32 %s455, %s453
        %s457 = sadd.s32 %s456, %s451
        %s458 = smul.addr %s457, 8
        %s459 = scalar_lea.vmem %s4, %s458
      $region56: #{vace_wan_attention_block_forward.17} parent=51 // pred_fallthru
        _
    $region52: #{vace_wan_attention_block_forward.17} parent=5 // pred_fallthru
      _
  $region6: #{vace_wan_attention_block_forward.17} parent=0 // loop_footer
    %s14 = sadd.s32 1, %s10
  $region7: #{vace_wan_attention_block_forward.17} parent=0 // loop_footer_branch
    %9 = sbr.rel target = $region3
  $region8: #{vace_wan_attention_block_forward.17} parent=0 // loop_exit
    _

// kernel: vace_wan_attention_block_forward.19
$region0: #{vace_wan_attention_block_forward.19}
  #allocation0 [shape = 'u32[]', space=smem, size = 0x4, offset = 0x4, fixed_abs, tag = 'smem constant byte address 0x4 - core index']
  #allocation1 [shape = 'u32[144,128]{1,0:T(1,128)}', space=vmem, size = 0x12000, scoped, tag = 'internal scratch']
  #allocation2 [shape = 'f32[16,32]{1,0:T(8,128)}', space=vmem, size = 0x2000, scoped, tag = 'scratch operand']
  %s0 = inlined_call_operand.vmem [shape: bf16[16,32], index: 0, kind: input, shape index: {}]
  %s1 = inlined_call_operand.vmem [shape: bf16[32,32], index: 1, kind: input, shape index: {}]
  %s2 = inlined_call_operand.vmem [shape: f32[1,32], index: 2, kind: input, shape index: {}]
  %s3 = inlined_call_operand.vmem [shape: f32[1,32], index: 3, kind: input, shape index: {}]
  %s4 = inlined_call_operand.vmem [shape: bf16[16,32], index: 4, kind: output, shape index: {}]
  %s5 = sld [smem:[#allocation0]]
  $region34: #{vace_wan_attention_block_forward.19} parent=0
    _
  %s7 = ssub.s32 1, %s5
  %s8 = scalar_select 0, %s7, %s5
  // Predicated region
  $region2: #{vace_wan_attention_block_forward.19} parent=0 // pred_check
    _
  $region3: #{vace_wan_attention_block_forward.19} parent=0 // pred_check_branch
    %10 = sbr.rel (0) target = $region5
  $region4: #{vace_wan_attention_block_forward.19} parent=0 // pred_region
    _
  $region5: #{vace_wan_attention_block_forward.19} parent=0 // pred_fallthru
    _
  // Predicated region
  $region6: #{vace_wan_attention_block_forward.19} parent=0 // pred_check
    _
  $region7: #{vace_wan_attention_block_forward.19} parent=0 // pred_check_branch
    %12 = sbr.rel (0) target = $region9
  $region8: #{vace_wan_attention_block_forward.19} parent=0 // pred_region
    _
  $region9: #{vace_wan_attention_block_forward.19} parent=0 // pred_fallthru
    _
  // Predicated region
  $region10: #{vace_wan_attention_block_forward.19} parent=0 // pred_check
    _
  $region11: #{vace_wan_attention_block_forward.19} parent=0 // pred_check_branch
    %14 = sbr.rel (0) target = $region13
  $region12: #{vace_wan_attention_block_forward.19} parent=0 // pred_region
    _
  $region13: #{vace_wan_attention_block_forward.19} parent=0 // pred_fallthru
    _
  // Predicated region
  $region14: #{vace_wan_attention_block_forward.19} parent=0 // pred_check
    _
  $region15: #{vace_wan_attention_block_forward.19} parent=0 // pred_check_branch
    %16 = sbr.rel (0) target = $region17
  $region16: #{vace_wan_attention_block_forward.19} parent=0 // pred_region
    _
  $region17: #{vace_wan_attention_block_forward.19} parent=0 // pred_fallthru
    _
  %p18 = scmp.eq.s32.totalorder 0, 0
  // Predicated region
  $region18: #{vace_wan_attention_block_forward.19} parent=0 // pred_check
    %p19 = pneg %p18
  $region19: #{vace_wan_attention_block_forward.19} parent=0 // pred_check_branch
    %21 = sbr.rel (%p19) target = $region21
  $region20: #{vace_wan_attention_block_forward.19} parent=0 // pred_region
    %vm22 = vcmask 261120
    %23 = vst.msk [vmem:[#allocation2] sm:$0xff] %vm22, 0.0
    %24 = vst.msk [vmem:[#allocation2 + $0x8] sm:$0xff] %vm22, 0.0
  $region21: #{vace_wan_attention_block_forward.19} parent=0 // pred_fallthru
    _
  %v25 = vld [vmem:[#allocation2] sm:$0xff]
  %v26 = vld [vmem:[#allocation2 + $0x8] sm:$0xff]
  %v27 = vld [vmem:[%s0] sm:$0xf]
  %v28 = vld [vmem:[%s0 + $0x4] sm:$0xf]
  %v29 = vld [vmem:[%s1] sm:$0xf]
  %v30 = vld [vmem:[%s1 + $0x4] sm:$0xf]
  %v31 = vld [vmem:[%s1 + $0x8] sm:$0xf]
  %v32 = vld [vmem:[%s1 + $0xc] sm:$0xf]
  %v35 = vunpack.c.l.b16 %v27
  %v36 = vunpack.c.l.b16 %v28
  %v37 = vpack.c.b16 %v36, %v35
  %v42 = vunpack.c.l.b16 %v29
  %v43 = vunpack.c.l.b16 %v30
  %v44 = vunpack.c.l.b16 %v31
  %v45 = vunpack.c.l.b16 %v32
  %v46 = vpack.c.b16 %v43, %v42
  %v47 = vpack.c.b16 %v45, %v44
  %vm50 = vcmask 261120
  %v52 = vsel %vm50, %v37, 0
  %54 = vmatprep.subr.bf16.mxu0 0
  %55 = vmatpush1.bf16.msra.mxu0 %v46
  %56 = vmatprep.subr.bf16.mxu0 0
  %57 = vmatpush1.bf16.msra.mxu0 %v47
  %58 = vmatprep.subr.bf16.mxu0 0
  %59 = vmatpush1.bf16.msra.mxu0 0
  %60 = vmatprep.subr.bf16.mxu0 0
  %61 = vmatpush1.bf16.msra.mxu0 0
  %62 = vmatprep.subr.bf16.mxu0 0
  %63 = vmatpush1.bf16.msra.mxu0 0
  %64 = vmatprep.subr.bf16.mxu0 0
  %65 = vmatpush1.bf16.msra.mxu0 0
  %66 = vmatprep.subr.bf16.mxu0 0
  %67 = vmatpush1.bf16.msra.mxu0 0
  %68 = vmatprep.subr.bf16.mxu0 0
  %69 = vmatpush1.bf16.msra.mxu0 0
  %70 = vmatprep.subr.bf16.mxu0 0
  %71 = vmatpush1.bf16.msra.mxu0 0
  %72 = vmatprep.subr.bf16.mxu0 0
  %73 = vmatpush1.bf16.msra.mxu0 0
  %74 = vmatprep.subr.bf16.mxu0 0
  %75 = vmatpush1.bf16.msra.mxu0 0
  %76 = vmatprep.subr.bf16.mxu0 0
  %77 = vmatpush1.bf16.msra.mxu0 0
  %78 = vmatprep.subr.bf16.mxu0 0
  %79 = vmatpush1.bf16.msra.mxu0 0
  %80 = vmatprep.subr.bf16.mxu0 0
  %81 = vmatpush1.bf16.msra.mxu0 0
  %82 = vmatprep.subr.bf16.mxu0 0
  %83 = vmatpush1.bf16.msra.mxu0 0
  %84 = vmatprep.subr.bf16.mxu0 0
  %85 = vmatpush1.bf16.msra.mxu0 0
  %86 = vmatprep.mubr.bf16.mxu0 0
  %87 = vmatmul.mubr.bf16.gmra.mrb[0].mxu0 %v52
  %v88 = vpop.f32.mrb[0].mxu0
  %v89 = vadd.f32 0.0, %v88
  %v90 = vpop.f32.mrb[0].mxu0
  %v91 = vpop.f32.mrb[0].mxu0
  %v92 = vadd.f32 0.0, %v91
  %v93 = vpop.f32.mrb[0].mxu0
  %94 = vdwg.mxu0
  %v95 = vadd.f32 %v25, %v89
  %v96 = vadd.f32 %v26, %v92
  %97 = vst.msk [vmem:[#allocation2] sm:$0xff] %vm50, %v95
  %98 = vst.msk [vmem:[#allocation2 + $0x8] sm:$0xff] %vm50, %v96
  // Predicated region
  $region22: #{vace_wan_attention_block_forward.19} parent=0 // pred_check
    %p99 = pneg %p18
  $region23: #{vace_wan_attention_block_forward.19} parent=0 // pred_check_branch
    %101 = sbr.rel (%p99) target = $region25
  $region24: #{vace_wan_attention_block_forward.19} parent=0 // pred_region
    %v102 = vld [vmem:[#allocation2] sm:$0xff]
    %v103 = vld [vmem:[#allocation2 + $0x8] sm:$0xff]
    %v104 = vld [vmem:[%s2] sm:$0x1]
    %v106 = vlaneseq
    %v107 = vshrl.u32 %v106, 7
    %v108 = vsub.s32 0, %v107
    %v109 = vrot.slane %v104, %v108
    %v111 = vadd.f32 %v102, %v109
    %v112 = vadd.f32 %v103, %v109
    %v113 = vmul.f32 %v111, %v111
    %v114 = vmul.f32 %v112, %v112
    %v115 = vsel %vm50, %v113, 0.0
    %116 = vadd.xlane.f32.xlu0 %v115
    %v117 = vpop.xlane.xlu0 %116
    %v118 = vsel %vm50, %v114, 0.0
    %119 = vadd.xlane.f32.xlu0 %v118
    %v120 = vpop.xlane.xlu0 %119
    %v121 = vrcp.pop 32.0
    %v122 = vmul.f32 %v117, %v121
    %v123 = vmul.f32 %v120, %v121
    %v124 = vadd.f32 %v122, 1e-06
    %v125 = vadd.f32 %v123, 1e-06
    %v126 = vrsqrt.pop %v124
    %v127 = vrsqrt.pop %v125
    %v128 = vmul.f32 %v111, %v126
    %v129 = vmul.f32 %v112, %v127
    %v130 = vld [vmem:[%s3] sm:$0x1]
    %v132 = vlaneseq
    %v133 = vshrl.u32 %v132, 7
    %v134 = vsub.s32 0, %v133
    %v135 = vrot.slane %v130, %v134
    %v137 = vmul.f32 %v128, %v135
    %v138 = vmul.f32 %v129, %v135
    %v139 = vpack.c.bf16 %v138, %v137
    %v141 = vunpack.c.l.b16 %v139
    %v142 = vunpack.c.h.b16 %v139
    %v143 = vpack.c.b16 %v141, %v141
    %v144 = vpack.c.b16 %v142, %v142
    %vm147 = vcmask 257024
    %148 = vst.msk [vmem:[%s4] sm:$0xf] %vm147, %v143
    %149 = vst.msk [vmem:[%s4 + $0x4] sm:$0xf] %vm147, %v144
  $region25: #{vace_wan_attention_block_forward.19} parent=0 // pred_fallthru
    _
  // Predicated region
  $region26: #{vace_wan_attention_block_forward.19} parent=0 // pred_check
    _
  $region27: #{vace_wan_attention_block_forward.19} parent=0 // pred_check_branch
    %151 = sbr.rel (0) target = $region29
  $region28: #{vace_wan_attention_block_forward.19} parent=0 // pred_region
    _
  $region29: #{vace_wan_attention_block_forward.19} parent=0 // pred_fallthru
    _
  // Predicated region
  $region30: #{vace_wan_attention_block_forward.19} parent=0 // pred_check
    _
  $region31: #{vace_wan_attention_block_forward.19} parent=0 // pred_check_branch
    %153 = sbr.rel (0) target = $region33
  $region32: #{vace_wan_attention_block_forward.19} parent=0 // pred_region
    _
  $region33: #{vace_wan_attention_block_forward.19} parent=0 // pred_fallthru
    _

// kernel: vace_wan_attention_block_forward.21
$region0: #{vace_wan_attention_block_forward.21}
  #allocation0 [shape = 'u32[]', space=smem, size = 0x4, offset = 0x4, fixed_abs, tag = 'smem constant byte address 0x4 - core index']
  #allocation1 [shape = 'u32[144,128]{1,0:T(1,128)}', space=vmem, size = 0x12000, scoped, tag = 'internal scratch']
  #allocation2 [shape = 'f32[16,32]{1,0:T(8,128)}', space=vmem, size = 0x2000, scoped, tag = 'scratch operand']
  %s0 = inlined_call_operand.vmem [shape: bf16[16,32], index: 0, kind: input, shape index: {}]
  %s1 = inlined_call_operand.vmem [shape: bf16[32,32], index: 1, kind: input, shape index: {}]
  %s2 = inlined_call_operand.vmem [shape: f32[1,32], index: 2, kind: input, shape index: {}]
  %s3 = inlined_call_operand.vmem [shape: bf16[16,32], index: 3, kind: output, shape index: {}]
  %s4 = sld [smem:[#allocation0]]
  $region30: #{vace_wan_attention_block_forward.21} parent=0
    _
  %s6 = ssub.s32 1, %s4
  %s7 = scalar_select 0, %s6, %s4
  // Predicated region
  $region2: #{vace_wan_attention_block_forward.21} parent=0 // pred_check
    _
  $region3: #{vace_wan_attention_block_forward.21} parent=0 // pred_check_branch
    %9 = sbr.rel (0) target = $region5
  $region4: #{vace_wan_attention_block_forward.21} parent=0 // pred_region
    _
  $region5: #{vace_wan_attention_block_forward.21} parent=0 // pred_fallthru
    _
  // Predicated region
  $region6: #{vace_wan_attention_block_forward.21} parent=0 // pred_check
    _
  $region7: #{vace_wan_attention_block_forward.21} parent=0 // pred_check_branch
    %11 = sbr.rel (0) target = $region9
  $region8: #{vace_wan_attention_block_forward.21} parent=0 // pred_region
    _
  $region9: #{vace_wan_attention_block_forward.21} parent=0 // pred_fallthru
    _
  // Predicated region
  $region10: #{vace_wan_attention_block_forward.21} parent=0 // pred_check
    _
  $region11: #{vace_wan_attention_block_forward.21} parent=0 // pred_check_branch
    %13 = sbr.rel (0) target = $region13
  $region12: #{vace_wan_attention_block_forward.21} parent=0 // pred_region
    _
  $region13: #{vace_wan_attention_block_forward.21} parent=0 // pred_fallthru
    _
  %p15 = scmp.eq.s32.totalorder 0, 0
  // Predicated region
  $region14: #{vace_wan_attention_block_forward.21} parent=0 // pred_check
    %p16 = pneg %p15
  $region15: #{vace_wan_attention_block_forward.21} parent=0 // pred_check_branch
    %18 = sbr.rel (%p16) target = $region17
  $region16: #{vace_wan_attention_block_forward.21} parent=0 // pred_region
    %vm19 = vcmask 261120
    %20 = vst.msk [vmem:[#allocation2] sm:$0xff] %vm19, 0.0
    %21 = vst.msk [vmem:[#allocation2 + $0x8] sm:$0xff] %vm19, 0.0
  $region17: #{vace_wan_attention_block_forward.21} parent=0 // pred_fallthru
    _
  %v22 = vld [vmem:[#allocation2] sm:$0xff]
  %v23 = vld [vmem:[#allocation2 + $0x8] sm:$0xff]
  %v24 = vld [vmem:[%s0] sm:$0xf]
  %v25 = vld [vmem:[%s0 + $0x4] sm:$0xf]
  %v26 = vld [vmem:[%s1] sm:$0xf]
  %v27 = vld [vmem:[%s1 + $0x4] sm:$0xf]
  %v28 = vld [vmem:[%s1 + $0x8] sm:$0xf]
  %v29 = vld [vmem:[%s1 + $0xc] sm:$0xf]
  %v32 = vunpack.c.l.b16 %v24
  %v33 = vunpack.c.l.b16 %v25
  %v34 = vpack.c.b16 %v33, %v32
  %v39 = vunpack.c.l.b16 %v26
  %v40 = vunpack.c.l.b16 %v27
  %v41 = vunpack.c.l.b16 %v28
  %v42 = vunpack.c.l.b16 %v29
  %v43 = vpack.c.b16 %v40, %v39
  %v44 = vpack.c.b16 %v42, %v41
  %vm47 = vcmask 261120
  %v49 = vsel %vm47, %v34, 0
  %51 = vmatprep.subr.bf16.mxu0 0
  %52 = vmatpush1.bf16.msra.mxu0 %v43
  %53 = vmatprep.subr.bf16.mxu0 0
  %54 = vmatpush1.bf16.msra.mxu0 %v44
  %55 = vmatprep.subr.bf16.mxu0 0
  %56 = vmatpush1.bf16.msra.mxu0 0
  %57 = vmatprep.subr.bf16.mxu0 0
  %58 = vmatpush1.bf16.msra.mxu0 0
  %59 = vmatprep.subr.bf16.mxu0 0
  %60 = vmatpush1.bf16.msra.mxu0 0
  %61 = vmatprep.subr.bf16.mxu0 0
  %62 = vmatpush1.bf16.msra.mxu0 0
  %63 = vmatprep.subr.bf16.mxu0 0
  %64 = vmatpush1.bf16.msra.mxu0 0
  %65 = vmatprep.subr.bf16.mxu0 0
  %66 = vmatpush1.bf16.msra.mxu0 0
  %67 = vmatprep.subr.bf16.mxu0 0
  %68 = vmatpush1.bf16.msra.mxu0 0
  %69 = vmatprep.subr.bf16.mxu0 0
  %70 = vmatpush1.bf16.msra.mxu0 0
  %71 = vmatprep.subr.bf16.mxu0 0
  %72 = vmatpush1.bf16.msra.mxu0 0
  %73 = vmatprep.subr.bf16.mxu0 0
  %74 = vmatpush1.bf16.msra.mxu0 0
  %75 = vmatprep.subr.bf16.mxu0 0
  %76 = vmatpush1.bf16.msra.mxu0 0
  %77 = vmatprep.subr.bf16.mxu0 0
  %78 = vmatpush1.bf16.msra.mxu0 0
  %79 = vmatprep.subr.bf16.mxu0 0
  %80 = vmatpush1.bf16.msra.mxu0 0
  %81 = vmatprep.subr.bf16.mxu0 0
  %82 = vmatpush1.bf16.msra.mxu0 0
  %83 = vmatprep.mubr.bf16.mxu0 0
  %84 = vmatmul.mubr.bf16.gmra.mrb[0].mxu0 %v49
  %v85 = vpop.f32.mrb[0].mxu0
  %v86 = vadd.f32 0.0, %v85
  %v87 = vpop.f32.mrb[0].mxu0
  %v88 = vpop.f32.mrb[0].mxu0
  %v89 = vadd.f32 0.0, %v88
  %v90 = vpop.f32.mrb[0].mxu0
  %91 = vdwg.mxu0
  %v92 = vadd.f32 %v22, %v86
  %v93 = vadd.f32 %v23, %v89
  %94 = vst.msk [vmem:[#allocation2] sm:$0xff] %vm47, %v92
  %95 = vst.msk [vmem:[#allocation2 + $0x8] sm:$0xff] %vm47, %v93
  // Predicated region
  $region18: #{vace_wan_attention_block_forward.21} parent=0 // pred_check
    %p96 = pneg %p15
  $region19: #{vace_wan_attention_block_forward.21} parent=0 // pred_check_branch
    %98 = sbr.rel (%p96) target = $region21
  $region20: #{vace_wan_attention_block_forward.21} parent=0 // pred_region
    %v99 = vld [vmem:[#allocation2] sm:$0xff]
    %v100 = vld [vmem:[#allocation2 + $0x8] sm:$0xff]
    %v101 = vld [vmem:[%s2] sm:$0x1]
    %v103 = vlaneseq
    %v104 = vshrl.u32 %v103, 7
    %v105 = vsub.s32 0, %v104
    %v106 = vrot.slane %v101, %v105
    %v108 = vadd.f32 %v99, %v106
    %v109 = vadd.f32 %v100, %v106
    %v110 = vpack.c.bf16 %v109, %v108
    %v112 = vunpack.c.l.b16 %v110
    %v113 = vunpack.c.h.b16 %v110
    %v114 = vpack.c.b16 %v112, %v112
    %v115 = vpack.c.b16 %v113, %v113
    %vm118 = vcmask 257024
    %119 = vst.msk [vmem:[%s3] sm:$0xf] %vm118, %v114
    %120 = vst.msk [vmem:[%s3 + $0x4] sm:$0xf] %vm118, %v115
  $region21: #{vace_wan_attention_block_forward.21} parent=0 // pred_fallthru
    _
  // Predicated region
  $region22: #{vace_wan_attention_block_forward.21} parent=0 // pred_check
    _
  $region23: #{vace_wan_attention_block_forward.21} parent=0 // pred_check_branch
    %122 = sbr.rel (0) target = $region25
  $region24: #{vace_wan_attention_block_forward.21} parent=0 // pred_region
    _
  $region25: #{vace_wan_attention_block_forward.21} parent=0 // pred_fallthru
    _
  // Predicated region
  $region26: #{vace_wan_attention_block_forward.21} parent=0 // pred_check
    _
  $region27: #{vace_wan_attention_block_forward.21} parent=0 // pred_check_branch
    %124 = sbr.rel (0) target = $region29
  $region28: #{vace_wan_attention_block_forward.21} parent=0 // pred_region
    _
  $region29: #{vace_wan_attention_block_forward.21} parent=0 // pred_fallthru
    _

// kernel: vace_wan_attention_block_forward.22
$region0: #{vace_wan_attention_block_forward.22}
  #allocation0 [shape = 'u32[]', space=smem, size = 0x4, offset = 0x4, fixed_abs, tag = 'smem constant byte address 0x4 - core index']
  #allocation1 [shape = 'u32[144,128]{1,0:T(1,128)}', space=vmem, size = 0x12000, scoped, tag = 'internal scratch']
  #allocation2 [shape = 'f32[8,1]{1,0:T(8,128)}', space=vmem, size = 0x1000, scoped, tag = 'scratch operand']
  #allocation3 [shape = 'f32[8,1]{1,0:T(8,128)}', space=vmem, size = 0x1000, scoped, tag = 'scratch operand']
  #allocation4 [shape = 'f32[8,8]{1,0:T(8,128)}', space=vmem, size = 0x1000, scoped, tag = 'scratch operand']
  %s0 = inlined_call_operand.vmem [shape: bf16[8,8,8], index: 0, kind: input, shape index: {}]
  %s1 = inlined_call_operand.vmem [shape: bf16[8,8,8], index: 1, kind: input, shape index: {}]
  %s2 = inlined_call_operand.vmem [shape: bf16[8,8,8], index: 2, kind: input, shape index: {}]
  %s3 = inlined_call_operand.vmem [shape: bf16[8,8,8], index: 3, kind: output, shape index: {}]
  %s4 = sld [smem:[#allocation0]]
  $region53: #{vace_wan_attention_block_forward.22} parent=0
    _
  %s6 = ssub.s32 1, %s4
  %s7 = scalar_select 0, %s6, %s4
  loop: start=0, step=1, limit=10
  $region2: #{vace_wan_attention_block_forward.22} parent=0 // loop_pre_header
    _
  $region3: #{vace_wan_attention_block_forward.22} parent=0 // loop_header
    %s9 = sphi 0, %s13
    %p10 = scmp.ge.s32.totalorder %s9, 10
    %s16 = sphi 0, %s35
    %s17 = sphi 0, %s31
    %s18 = sphi 0, %s27
    %s19 = sphi 0, %s16
    %s20 = sphi 0, %s17
    %s21 = sphi 0, %s18
    %s22 = sphi 0, %s19
    %s23 = sphi 0, %s20
    %s24 = sphi 0, %s21
    %s40 = sphi 0, %s42
    %s43 = sphi 0, %s40
    %s44 = sphi 0, %s43
    %s60 = sphi 0, %s44
    %s68 = sphi 0, %s70
    %s71 = sphi 0, %s68
    %s72 = sphi 0, %s71
    %s88 = sphi 0, %s72
    %s96 = sphi 0, %s98
    %s99 = sphi 0, %s96
    %s100 = sphi 0, %s99
    %s116 = sphi 0, %s100
    %s124 = sphi 0, %s126
    %s127 = sphi 0, %s124
    %s128 = sphi 0, %s127
    %s144 = sphi 0, %s128
  $region4: #{vace_wan_attention_block_forward.22} parent=0 // loop_header_branch
    %12 = sbr.rel (%p10) target = $region8
  $region5: #{vace_wan_attention_block_forward.22} parent=0 // loop_body
    %s14 = ssub.s32 %s9, 1
    %s15 = ssub.s32 %s9, 2
    %s25 = sadd.s32 1, %s18
    %p26 = scmp.ge.s32.totalorder %s25, 1
    %s27 = scalar_select %p26, 0, %s25
    %s28 = sadd.s32 1, %s17
    %s29 = scalar_select %p26, %s28, %s17
    %p30 = scmp.ge.s32.totalorder %s29, 1
    %s31 = scalar_select %p30, 0, %s29
    %s32 = sadd.s32 1, %s16
    %s33 = scalar_select %p30, %s32, %s16
    %p34 = scmp.ge.s32.totalorder %s33, 8
    %s35 = scalar_select %p34, 0, %s33
    %s36 = ssub.s32 %s16, %s35
    %s37 = ssub.s32 %s17, %s31
    %s38 = sor.u32 %s36, %s37
    %p39 = scmp.eq.s32.totalorder %s38, 0
    %s41 = sadd.s32 %s40, 1
    %s42 = scalar_select %p39, %s40, %s41
    %p45 = pneg %p39
    %p46 = scmp.eq.s32.totalorder %s9, 7
    %p47 = por %p45, %p46
    %p48 = scmp.ne.s32.totalorder %s40, %s43
    %p49 = scmp.eq.s32.totalorder %s9, 0
    %p50 = por %p48, %p49
    %p51 = scmp.ne.s32.totalorder %s40, %s43
    %p52 = scmp.eq.s32.totalorder %s14, 7
    %p53 = por %p51, %p52
    %p54 = scmp.ne.s32.totalorder %s43, %s44
    %p55 = scmp.eq.s32.totalorder %s14, 0
    %p56 = por %p54, %p55
    %p57 = scmp.ne.s32.totalorder %s43, %s44
    %p58 = scmp.eq.s32.totalorder %s15, 7
    %p59 = por %p57, %p58
    %p61 = scmp.ne.s32.totalorder %s44, %s60
    %p62 = scmp.eq.s32.totalorder %s15, 0
    %p63 = por %p61, %p62
    %s64 = ssub.s32 %s16, %s35
    %s65 = ssub.s32 %s18, %s27
    %s66 = sor.u32 %s64, %s65
    %p67 = scmp.eq.s32.totalorder %s66, 0
    %s69 = sadd.s32 %s68, 1
    %s70 = scalar_select %p67, %s68, %s69
    %p73 = pneg %p67
    %p74 = scmp.eq.s32.totalorder %s9, 7
    %p75 = por %p73, %p74
    %p76 = scmp.ne.s32.totalorder %s68, %s71
    %p77 = scmp.eq.s32.totalorder %s9, 0
    %p78 = por %p76, %p77
    %p79 = scmp.ne.s32.totalorder %s68, %s71
    %p80 = scmp.eq.s32.totalorder %s14, 7
    %p81 = por %p79, %p80
    %p82 = scmp.ne.s32.totalorder %s71, %s72
    %p83 = scmp.eq.s32.totalorder %s14, 0
    %p84 = por %p82, %p83
    %p85 = scmp.ne.s32.totalorder %s71, %s72
    %p86 = scmp.eq.s32.totalorder %s15, 7
    %p87 = por %p85, %p86
    %p89 = scmp.ne.s32.totalorder %s72, %s88
    %p90 = scmp.eq.s32.totalorder %s15, 0
    %p91 = por %p89, %p90
    %s92 = ssub.s32 %s16, %s35
    %s93 = ssub.s32 %s18, %s27
    %s94 = sor.u32 %s92, %s93
    %p95 = scmp.eq.s32.totalorder %s94, 0
    %s97 = sadd.s32 %s96, 1
    %s98 = scalar_select %p95, %s96, %s97
    %p101 = pneg %p95
    %p102 = scmp.eq.s32.totalorder %s9, 7
    %p103 = por %p101, %p102
    %p104 = scmp.ne.s32.totalorder %s96, %s99
    %p105 = scmp.eq.s32.totalorder %s9, 0
    %p106 = por %p104, %p105
    %p107 = scmp.ne.s32.totalorder %s96, %s99
    %p108 = scmp.eq.s32.totalorder %s14, 7
    %p109 = por %p107, %p108
    %p110 = scmp.ne.s32.totalorder %s99, %s100
    %p111 = scmp.eq.s32.totalorder %s14, 0
    %p112 = por %p110, %p111
    %p113 = scmp.ne.s32.totalorder %s99, %s100
    %p114 = scmp.eq.s32.totalorder %s15, 7
    %p115 = por %p113, %p114
    %p117 = scmp.ne.s32.totalorder %s100, %s116
    %p118 = scmp.eq.s32.totalorder %s15, 0
    %p119 = por %p117, %p118
    %s120 = ssub.s32 %s16, %s35
    %s121 = ssub.s32 %s17, %s31
    %s122 = sor.u32 %s120, %s121
    %p123 = scmp.eq.s32.totalorder %s122, 0
    %s125 = sadd.s32 %s124, 1
    %s126 = scalar_select %p123, %s124, %s125
    %p129 = pneg %p123
    %p130 = scmp.eq.s32.totalorder %s9, 7
    %p131 = por %p129, %p130
    %p132 = scmp.ne.s32.totalorder %s124, %s127
    %p133 = scmp.eq.s32.totalorder %s9, 0
    %p134 = por %p132, %p133
    %p135 = scmp.ne.s32.totalorder %s124, %s127
    %p136 = scmp.eq.s32.totalorder %s14, 7
    %p137 = por %p135, %p136
    %p138 = scmp.ne.s32.totalorder %s127, %s128
    %p139 = scmp.eq.s32.totalorder %s14, 0
    %p140 = por %p138, %p139
    %p141 = scmp.ne.s32.totalorder %s127, %s128
    %p142 = scmp.eq.s32.totalorder %s15, 7
    %p143 = por %p141, %p142
    %p145 = scmp.ne.s32.totalorder %s128, %s144
    %p146 = scmp.eq.s32.totalorder %s15, 0
    %p147 = por %p145, %p146
    %p148 = scmp.le.s32.totalorder 1, %s9
    %p149 = scmp.lt.s32.totalorder %s9, 9
    %p150 = pnand %p148, %p149
    %p151 = pneg %p150
    // Predicated region
    $region9: #{vace_wan_attention_block_forward.22} parent=5 // pred_check
      _
    $region10: #{vace_wan_attention_block_forward.22} parent=5 // pred_check_branch
      %153 = sbr.rel (%p150) target = $region12
    $region11: #{vace_wan_attention_block_forward.22} parent=5 // pred_region
      %s154 = ssub.s32 %s9, 1
    $region12: #{vace_wan_attention_block_forward.22} parent=5 // pred_fallthru
      _
    %p155 = scmp.lt.s32.totalorder %s9, 8
    // Predicated region
    $region13: #{vace_wan_attention_block_forward.22} parent=5 // pred_check
      %p156 = pneg %p155
    $region14: #{vace_wan_attention_block_forward.22} parent=5 // pred_check_branch
      %158 = sbr.rel (%p156) target = $region16
    $region15: #{vace_wan_attention_block_forward.22} parent=5 // pred_region
      // Predicated region
      $region17: #{vace_wan_attention_block_forward.22} parent=15 // pred_check
        %p159 = pneg %p50
      $region18: #{vace_wan_attention_block_forward.22} parent=15 // pred_check_branch
        %161 = sbr.rel (%p159) target = $region20
      $region19: #{vace_wan_attention_block_forward.22} parent=15 // pred_region
        %p162 = scmp.lt.s32.totalorder %s16, 7
        %s163 = scalar_select %p162, %s16, 7
        %p164 = scmp.lt.s32.totalorder %s17, 0
        %s165 = scalar_select %p164, %s17, 0
        %s166 = sadd.s32 %s165, %s163
        %s167 = smul.addr %s166, 4
        %s168 = scalar_lea.vmem %s0, %s167
      $region20: #{vace_wan_attention_block_forward.22} parent=15 // pred_fallthru
        _
      // Predicated region
      $region21: #{vace_wan_attention_block_forward.22} parent=15 // pred_check
        %p169 = pneg %p78
      $region22: #{vace_wan_attention_block_forward.22} parent=15 // pred_check_branch
        %171 = sbr.rel (%p169) target = $region24
      $region23: #{vace_wan_attention_block_forward.22} parent=15 // pred_region
        %p172 = scmp.lt.s32.totalorder %s16, 7
        %s173 = scalar_select %p172, %s16, 7
        %p174 = scmp.lt.s32.totalorder %s18, 0
        %s175 = scalar_select %p174, %s18, 0
        %s176 = sadd.s32 %s175, %s173
        %s177 = smul.addr %s176, 4
        %s178 = scalar_lea.vmem %s1, %s177
      $region24: #{vace_wan_attention_block_forward.22} parent=15 // pred_fallthru
        _
      // Predicated region
      $region25: #{vace_wan_attention_block_forward.22} parent=15 // pred_check
        %p179 = pneg %p106
      $region26: #{vace_wan_attention_block_forward.22} parent=15 // pred_check_branch
        %181 = sbr.rel (%p179) target = $region28
      $region27: #{vace_wan_attention_block_forward.22} parent=15 // pred_region
        %p182 = scmp.lt.s32.totalorder %s16, 7
        %s183 = scalar_select %p182, %s16, 7
        %p184 = scmp.lt.s32.totalorder %s18, 0
        %s185 = scalar_select %p184, %s18, 0
        %s186 = sadd.s32 %s185, %s183
        %s187 = smul.addr %s186, 4
        %s188 = scalar_lea.vmem %s2, %s187
      $region28: #{vace_wan_attention_block_forward.22} parent=15 // pred_fallthru
        _
    $region16: #{vace_wan_attention_block_forward.22} parent=5 // pred_fallthru
      _
    %p189 = scmp.le.s32.totalorder 1, %s9
    %p190 = scmp.lt.s32.totalorder %s9, 9
    %p191 = pnand %p189, %p190
    %p192 = pneg %p191
    // Predicated region
    $region29: #{vace_wan_attention_block_forward.22} parent=5 // pred_check
      _
    $region30: #{vace_wan_attention_block_forward.22} parent=5 // pred_check_branch
      %194 = sbr.rel (%p191) target = $region32
    $region31: #{vace_wan_attention_block_forward.22} parent=5 // pred_region
      %s195 = ssub.s32 %s9, 1
      %p196 = scmp.lt.s32.totalorder %s19, 7
      %s197 = scalar_select %p196, %s19, 7
      %p198 = scmp.lt.s32.totalorder %s20, 0
      %s199 = scalar_select %p198, %s20, 0
      %s200 = sadd.s32 %s199, %s197
      %s201 = smul.addr %s200, 4
      %s202 = scalar_lea.vmem %s0, %s201
      %p203 = pneg %p56
      %p204 = pneg %p53
      %p205 = scmp.lt.s32.totalorder %s19, 7
      %s206 = scalar_select %p205, %s19, 7
      %p207 = scmp.lt.s32.totalorder %s21, 0
      %s208 = scalar_select %p207, %s21, 0
      %s209 = sadd.s32 %s208, %s206
      %s210 = smul.addr %s209, 4
      %s211 = scalar_lea.vmem %s1, %s210
      %p212 = pneg %p84
      %p213 = pneg %p81
      %p214 = scmp.lt.s32.totalorder %s19, 7
      %s215 = scalar_select %p214, %s19, 7
      %p216 = scmp.lt.s32.totalorder %s21, 0
      %s217 = scalar_select %p216, %s21, 0
      %s218 = sadd.s32 %s217, %s215
      %s219 = smul.addr %s218, 4
      %s220 = scalar_lea.vmem %s2, %s219
      %p221 = pneg %p112
      %p222 = pneg %p109
      %p223 = pneg %p140
      %p224 = pneg %p137
      %p225 = scmp.lt.s32.totalorder %s19, 7
      %s226 = scalar_select %p225, %s19, 7
      %p227 = scmp.lt.s32.totalorder %s20, 0
      %s228 = scalar_select %p227, %s20, 0
      %s229 = sadd.s32 %s228, %s226
      %s230 = smul.addr %s229, 4
      %s231 = scalar_lea.vmem %s3, %s230
      %p232 = scmp.lt.s32.totalorder %s19, 7
      %s233 = scalar_select %p232, %s19, 7
      %p234 = scmp.lt.s32.totalorder %s20, 0
      %s235 = scalar_select %p234, %s20, 0
      %s236 = sadd.s32 %s235, %s233
      %s237 = smul.addr %s236, 4
      %s238 = scalar_lea.vmem %s0, %s237
      %p239 = scmp.lt.s32.totalorder %s19, 7
      %s240 = scalar_select %p239, %s19, 7
      %p241 = scmp.lt.s32.totalorder %s21, 0
      %s242 = scalar_select %p241, %s21, 0
      %s243 = sadd.s32 %s242, %s240
      %s244 = smul.addr %s243, 4
      %s245 = scalar_lea.vmem %s1, %s244
      %p246 = scmp.lt.s32.totalorder %s19, 7
      %s247 = scalar_select %p246, %s19, 7
      %p248 = scmp.lt.s32.totalorder %s21, 0
      %s249 = scalar_select %p248, %s21, 0
      %s250 = sadd.s32 %s249, %s247
      %s251 = smul.addr %s250, 4
      %s252 = scalar_lea.vmem %s2, %s251
      %p253 = scmp.lt.s32.totalorder %s19, 7
      %s254 = scalar_select %p253, %s19, 7
      %p255 = scmp.lt.s32.totalorder %s20, 0
      %s256 = scalar_select %p255, %s20, 0
      %s257 = sadd.s32 %s256, %s254
      %s258 = smul.addr %s257, 4
      %s259 = scalar_lea.vmem %s3, %s258
      %p261 = scmp.eq.s32.totalorder %s21, 0
      // Predicated region
      $region33: #{vace_wan_attention_block_forward.22} parent=31 // pred_check
        %p262 = pneg %p261
      $region34: #{vace_wan_attention_block_forward.22} parent=31 // pred_check_branch
        %264 = sbr.rel (%p262) target = $region36
      $region35: #{vace_wan_attention_block_forward.22} parent=31 // pred_region
        %vm265 = vcmask 7168
        %266 = vst.msk [vmem:[#allocation2] sm:$0xff] %vm265, -inf
        %267 = vst.msk [vmem:[#allocation3] sm:$0xff] %vm265, 0.0
        %vm268 = vcmask 64512
        %269 = vst.msk [vmem:[#allocation4] sm:$0xff] %vm268, 0.0
      $region36: #{vace_wan_attention_block_forward.22} parent=31 // pred_fallthru
        _
      %v270 = vld [vmem:[%s238] sm:$0xf]
      %v271 = vld [vmem:[%s245] sm:$0xf]
      %v272 = vld [vmem:[%s252] sm:$0xf]
      %vm273 = vcmask 64512
      %v275 = vsel %vm273, %v270, 0
      %v278 = vsel %vm273, %v271, 0
      %280 = vmatprep.subr.bf16.mxu0 0
      %281 = vmatpush1.bf16.xpose.msra.mxu0 %v278
      %282 = vmatprep.subr.bf16.mxu0 0
      %283 = vmatpush1.bf16.xpose.msra.mxu0 0
      %284 = vmatprep.subr.bf16.mxu0 0
      %285 = vmatpush1.bf16.xpose.msra.mxu0 0
      %286 = vmatprep.subr.bf16.mxu0 0
      %287 = vmatpush1.bf16.xpose.msra.mxu0 0
      %288 = vmatprep.subr.bf16.mxu0 0
      %289 = vmatpush1.bf16.xpose.msra.mxu0 0
      %290 = vmatprep.subr.bf16.mxu0 0
      %291 = vmatpush1.bf16.xpose.msra.mxu0 0
      %292 = vmatprep.subr.bf16.mxu0 0
      %293 = vmatpush1.bf16.xpose.msra.mxu0 0
      %294 = vmatprep.subr.bf16.mxu0 0
      %295 = vmatpush1.bf16.xpose.msra.mxu0 0
      %296 = vmatprep.subr.bf16.mxu0 0
      %297 = vmatpush1.bf16.xpose.msra.mxu0 0
      %298 = vmatprep.subr.bf16.mxu0 0
      %299 = vmatpush1.bf16.xpose.msra.mxu0 0
      %300 = vmatprep.subr.bf16.mxu0 0
      %301 = vmatpush1.bf16.xpose.msra.mxu0 0
      %302 = vmatprep.subr.bf16.mxu0 0
      %303 = vmatpush1.bf16.xpose.msra.mxu0 0
      %304 = vmatprep.subr.bf16.mxu0 0
      %305 = vmatpush1.bf16.xpose.msra.mxu0 0
      %306 = vmatprep.subr.bf16.mxu0 0
      %307 = vmatpush1.bf16.xpose.msra.mxu0 0
      %308 = vmatprep.subr.bf16.mxu0 0
      %309 = vmatpush1.bf16.xpose.msra.mxu0 0
      %310 = vmatprep.subr.bf16.mxu0 0
      %311 = vmatpush1.bf16.xpose.msra.mxu0 0
      %312 = vmatprep.mubr.bf16.mxu0 0
      %313 = vmatmul.mubr.bf16.gmra.mrb[0].mxu0 %v275
      %v314 = vpop.f32.mrb[0].mxu0
      %v315 = vadd.f32 0.0, %v314
      %v316 = vpop.f32.mrb[0].mxu0
      %v317 = vpop.f32.mrb[0].mxu0
      %v318 = vpop.f32.mrb[0].mxu0
      %319 = vdwg.mxu0
      %v320 = vld [vmem:[#allocation2] sm:$0xff]
      %v321 = vsel %vm273, %v315, -inf
      %322 = vmax.xlane.f32.xlu0 %v321
      %v323 = vpop.xlane.xlu0 %322
      %v324 = vmax.f32 %v320, %v323
      %v325 = vsub.f32 %v320, %v324
      %v326 = vmul.f32 %v325, 1.442695
      %v327 = vpow.pop %v326
      %329 = vset.pattern.permute.xlu0 0
      %330 = vperm.xlu0 %329, %v324
      %v331 = vpop.permute.xlu0 %330
      %v333 = vsub.f32 %v315, %v331
      %v334 = vmul.f32 %v333, 1.442695
      %v335 = vpow.pop %v334
      %v336 = vld [vmem:[#allocation3] sm:$0xff]
      %v337 = vmul.f32 %v327, %v336
      %v338 = vsel %vm273, %v335, 0.0
      %339 = vadd.xlane.f32.xlu0 %v338
      %v340 = vpop.xlane.xlu0 %339
      %v341 = vadd.f32 %v337, %v340
      %vm342 = vcmask 7168
      %343 = vst.msk [vmem:[#allocation3] sm:$0xff] %vm342, %v341
      %v344 = vld [vmem:[#allocation4] sm:$0xff]
      %346 = vset.pattern.permute.xlu0 0
      %347 = vperm.xlu0 %346, %v327
      %v348 = vpop.permute.xlu0 %347
      %v350 = vmul.f32 %v348, %v344
      %v351 = vpack.c.bf16 %v335, %v335
      %v353 = vsel %vm273, %v351, 0
      %vm355 = vcmask 1043456
      %v357 = vsel %vm355, %v272, 0
      %359 = vmatprep.subr.bf16.mxu0 0
      %360 = vmatpush1.bf16.msra.mxu0 %v357
      %361 = vmatprep.subr.bf16.mxu0 0
      %362 = vmatpush1.bf16.msra.mxu0 0
      %363 = vmatprep.subr.bf16.mxu0 0
      %364 = vmatpush1.bf16.msra.mxu0 0
      %365 = vmatprep.subr.bf16.mxu0 0
      %366 = vmatpush1.bf16.msra.mxu0 0
      %367 = vmatprep.subr.bf16.mxu0 0
      %368 = vmatpush1.bf16.msra.mxu0 0
      %369 = vmatprep.subr.bf16.mxu0 0
      %370 = vmatpush1.bf16.msra.mxu0 0
      %371 = vmatprep.subr.bf16.mxu0 0
      %372 = vmatpush1.bf16.msra.mxu0 0
      %373 = vmatprep.subr.bf16.mxu0 0
      %374 = vmatpush1.bf16.msra.mxu0 0
      %375 = vmatprep.subr.bf16.mxu0 0
      %376 = vmatpush1.bf16.msra.mxu0 0
      %377 = vmatprep.subr.bf16.mxu0 0
      %378 = vmatpush1.bf16.msra.mxu0 0
      %379 = vmatprep.subr.bf16.mxu0 0
      %380 = vmatpush1.bf16.msra.mxu0 0
      %381 = vmatprep.subr.bf16.mxu0 0
      %382 = vmatpush1.bf16.msra.mxu0 0
      %383 = vmatprep.subr.bf16.mxu0 0
      %384 = vmatpush1.bf16.msra.mxu0 0
      %385 = vmatprep.subr.bf16.mxu0 0
      %386 = vmatpush1.bf16.msra.mxu0 0
      %387 = vmatprep.subr.bf16.mxu0 0
      %388 = vmatpush1.bf16.msra.mxu0 0
      %389 = vmatprep.subr.bf16.mxu0 0
      %390 = vmatpush1.bf16.msra.mxu0 0
      %391 = vmatprep.mubr.bf16.mxu0 0
      %392 = vmatmul.mubr.bf16.gmra.mrb[0].mxu0 %v353
      %v393 = vpop.f32.mrb[0].mxu0
      %v394 = vadd.f32 0.0, %v393
      %v395 = vpop.f32.mrb[0].mxu0
      %v396 = vpop.f32.mrb[0].mxu0
      %v397 = vpop.f32.mrb[0].mxu0
      %398 = vdwg.mxu0
      %v399 = vadd.f32 %v350, %v394
      %400 = vst.msk [vmem:[#allocation4] sm:$0xff] %vm273, %v399
      %401 = vst.msk [vmem:[#allocation2] sm:$0xff] %vm342, %v324
      // Predicated region
      $region37: #{vace_wan_attention_block_forward.22} parent=31 // pred_check
        %p402 = pneg %p261
      $region38: #{vace_wan_attention_block_forward.22} parent=31 // pred_check_branch
        %404 = sbr.rel (%p402) target = $region40
      $region39: #{vace_wan_attention_block_forward.22} parent=31 // pred_region
        %v405 = vld [vmem:[#allocation4] sm:$0xff]
        %v406 = vld [vmem:[#allocation3] sm:$0xff]
        %v407 = vrcp.pop %v406
        %409 = vset.pattern.permute.xlu0 0
        %410 = vperm.xlu0 %409, %v407
        %v411 = vpop.permute.xlu0 %410
        %v413 = vmul.f32 %v405, %v411
        %v414 = vpack.c.bf16 %v413, %v413
        %vm415 = vcmask 60416
        %416 = vst.msk [vmem:[%s259] sm:$0xf] %vm415, %v414
      $region40: #{vace_wan_attention_block_forward.22} parent=31 // pred_fallthru
        _
      %p417 = scmp.lt.s32.totalorder %s19, 7
      %s418 = scalar_select %p417, %s19, 7
      %p419 = scmp.lt.s32.totalorder %s20, 0
      %s420 = scalar_select %p419, %s20, 0
      %s421 = sadd.s32 %s420, %s418
      %s422 = smul.addr %s421, 4
      %s423 = scalar_lea.vmem %s3, %s422
      // Predicated region
      $region41: #{vace_wan_attention_block_forward.22} parent=31 // pred_check
        %p424 = pneg %p137
      $region42: #{vace_wan_attention_block_forward.22} parent=31 // pred_check_branch
        %426 = sbr.rel (%p424) target = $region44
      $region43: #{vace_wan_attention_block_forward.22} parent=31 // pred_region
        _
      $region44: #{vace_wan_attention_block_forward.22} parent=31 // pred_fallthru
        _
    $region32: #{vace_wan_attention_block_forward.22} parent=5 // pred_fallthru
      _
    %p427 = scmp.le.s32.totalorder 2, %s9
    // Predicated region
    $region45: #{vace_wan_attention_block_forward.22} parent=5 // pred_check
      %p428 = pneg %p427
    $region46: #{vace_wan_attention_block_forward.22} parent=5 // pred_check_branch
      %430 = sbr.rel (%p428) target = $region48
    $region47: #{vace_wan_attention_block_forward.22} parent=5 // pred_region
      %s431 = ssub.s32 %s9, 2
      // Predicated region
      $region49: #{vace_wan_attention_block_forward.22} parent=47 // pred_check
        %p432 = pneg %p143
      $region50: #{vace_wan_attention_block_forward.22} parent=47 // pred_check_branch
        %434 = sbr.rel (%p432) target = $region52
      $region51: #{vace_wan_attention_block_forward.22} parent=47 // pred_region
        %p435 = scmp.lt.s32.totalorder %s22, 7
        %s436 = scalar_select %p435, %s22, 7
        %p437 = scmp.lt.s32.totalorder %s23, 0
        %s438 = scalar_select %p437, %s23, 0
        %s439 = sadd.s32 %s438, %s436
        %s440 = smul.addr %s439, 4
        %s441 = scalar_lea.vmem %s3, %s440
      $region52: #{vace_wan_attention_block_forward.22} parent=47 // pred_fallthru
        _
    $region48: #{vace_wan_attention_block_forward.22} parent=5 // pred_fallthru
      _
  $region6: #{vace_wan_attention_block_forward.22} parent=0 // loop_footer
    %s13 = sadd.s32 1, %s9
  $region7: #{vace_wan_attention_block_forward.22} parent=0 // loop_footer_branch
    %8 = sbr.rel target = $region3
  $region8: #{vace_wan_attention_block_forward.22} parent=0 // loop_exit
    _

// kernel: vace_wan_attention_block_forward.24
$region0: #{vace_wan_attention_block_forward.24}
  #allocation0 [shape = 'u32[]', space=smem, size = 0x4, offset = 0x4, fixed_abs, tag = 'smem constant byte address 0x4 - core index']
  #allocation1 [shape = 'u32[144,128]{1,0:T(1,128)}', space=vmem, size = 0x12000, scoped, tag = 'internal scratch']
  %s0 = inlined_call_operand.vmem [shape: f32[2,8,32], index: 0, kind: input, shape index: {}]
  %s1 = inlined_call_operand.vmem [shape: f32[1,32], index: 1, kind: input, shape index: {}]
  %s2 = inlined_call_operand.vmem [shape: f32[1,32], index: 2, kind: input, shape index: {}]
  %s3 = inlined_call_operand.vmem [shape: bf16[2,8,32], index: 3, kind: output, shape index: {}]
  %s4 = sld [smem:[#allocation0]]
  $region45: #{vace_wan_attention_block_forward.24} parent=0
    _
  %s6 = ssub.s32 1, %s4
  %s7 = scalar_select 0, %s6, %s4
  loop: start=0, step=1, limit=4
  $region2: #{vace_wan_attention_block_forward.24} parent=0 // loop_pre_header
    _
  $region3: #{vace_wan_attention_block_forward.24} parent=0 // loop_header
    %s9 = sphi 0, %s13
    %p10 = scmp.ge.s32.totalorder %s9, 4
    %s16 = sphi 0, %s28
    %s17 = sphi 0, %s24
    %s18 = sphi 0, %s16
    %s19 = sphi 0, %s17
    %s20 = sphi 0, %s18
    %s21 = sphi 0, %s19
    %s33 = sphi 0, %s35
    %s36 = sphi 0, %s33
    %s37 = sphi 0, %s36
    %s53 = sphi 0, %s37
    %s57 = sphi 0, %s57
    %s59 = sphi 0, %s57
    %s60 = sphi 0, %s59
    %s74 = sphi 0, %s60
    %s78 = sphi 0, %s78
    %s80 = sphi 0, %s78
    %s81 = sphi 0, %s80
    %s95 = sphi 0, %s81
    %s103 = sphi 0, %s105
    %s106 = sphi 0, %s103
    %s107 = sphi 0, %s106
    %s123 = sphi 0, %s107
  $region4: #{vace_wan_attention_block_forward.24} parent=0 // loop_header_branch
    %12 = sbr.rel (%p10) target = $region8
  $region5: #{vace_wan_attention_block_forward.24} parent=0 // loop_body
    %s14 = ssub.s32 %s9, 1
    %s15 = ssub.s32 %s9, 2
    %s22 = sadd.s32 1, %s17
    %p23 = scmp.ge.s32.totalorder %s22, 1
    %s24 = scalar_select %p23, 0, %s22
    %s25 = sadd.s32 1, %s16
    %s26 = scalar_select %p23, %s25, %s16
    %p27 = scmp.ge.s32.totalorder %s26, 2
    %s28 = scalar_select %p27, 0, %s26
    %s29 = ssub.s32 %s16, %s28
    %s30 = ssub.s32 %s17, %s24
    %s31 = sor.u32 %s29, %s30
    %p32 = scmp.eq.s32.totalorder %s31, 0
    %s34 = sadd.s32 %s33, 1
    %s35 = scalar_select %p32, %s33, %s34
    %p38 = pneg %p32
    %p39 = scmp.eq.s32.totalorder %s9, 1
    %p40 = por %p38, %p39
    %p41 = scmp.ne.s32.totalorder %s33, %s36
    %p42 = scmp.eq.s32.totalorder %s9, 0
    %p43 = por %p41, %p42
    %p44 = scmp.ne.s32.totalorder %s33, %s36
    %p45 = scmp.eq.s32.totalorder %s14, 1
    %p46 = por %p44, %p45
    %p47 = scmp.ne.s32.totalorder %s36, %s37
    %p48 = scmp.eq.s32.totalorder %s14, 0
    %p49 = por %p47, %p48
    %p50 = scmp.ne.s32.totalorder %s36, %s37
    %p51 = scmp.eq.s32.totalorder %s15, 1
    %p52 = por %p50, %p51
    %p54 = scmp.ne.s32.totalorder %s37, %s53
    %p55 = scmp.eq.s32.totalorder %s15, 0
    %p56 = por %p54, %p55
    %s58 = sadd.s32 %s57, 1
    %p61 = scmp.eq.s32.totalorder %s9, 1
    %p62 = scmp.ne.s32.totalorder %s57, %s59
    %p63 = scmp.eq.s32.totalorder %s9, 0
    %p64 = por %p62, %p63
    %p65 = scmp.ne.s32.totalorder %s57, %s59
    %p66 = scmp.eq.s32.totalorder %s14, 1
    %p67 = por %p65, %p66
    %p68 = scmp.ne.s32.totalorder %s59, %s60
    %p69 = scmp.eq.s32.totalorder %s14, 0
    %p70 = por %p68, %p69
    %p71 = scmp.ne.s32.totalorder %s59, %s60
    %p72 = scmp.eq.s32.totalorder %s15, 1
    %p73 = por %p71, %p72
    %p75 = scmp.ne.s32.totalorder %s60, %s74
    %p76 = scmp.eq.s32.totalorder %s15, 0
    %p77 = por %p75, %p76
    %s79 = sadd.s32 %s78, 1
    %p82 = scmp.eq.s32.totalorder %s9, 1
    %p83 = scmp.ne.s32.totalorder %s78, %s80
    %p84 = scmp.eq.s32.totalorder %s9, 0
    %p85 = por %p83, %p84
    %p86 = scmp.ne.s32.totalorder %s78, %s80
    %p87 = scmp.eq.s32.totalorder %s14, 1
    %p88 = por %p86, %p87
    %p89 = scmp.ne.s32.totalorder %s80, %s81
    %p90 = scmp.eq.s32.totalorder %s14, 0
    %p91 = por %p89, %p90
    %p92 = scmp.ne.s32.totalorder %s80, %s81
    %p93 = scmp.eq.s32.totalorder %s15, 1
    %p94 = por %p92, %p93
    %p96 = scmp.ne.s32.totalorder %s81, %s95
    %p97 = scmp.eq.s32.totalorder %s15, 0
    %p98 = por %p96, %p97
    %s99 = ssub.s32 %s16, %s28
    %s100 = ssub.s32 %s17, %s24
    %s101 = sor.u32 %s99, %s100
    %p102 = scmp.eq.s32.totalorder %s101, 0
    %s104 = sadd.s32 %s103, 1
    %s105 = scalar_select %p102, %s103, %s104
    %p108 = pneg %p102
    %p109 = scmp.eq.s32.totalorder %s9, 1
    %p110 = por %p108, %p109
    %p111 = scmp.ne.s32.totalorder %s103, %s106
    %p112 = scmp.eq.s32.totalorder %s9, 0
    %p113 = por %p111, %p112
    %p114 = scmp.ne.s32.totalorder %s103, %s106
    %p115 = scmp.eq.s32.totalorder %s14, 1
    %p116 = por %p114, %p115
    %p117 = scmp.ne.s32.totalorder %s106, %s107
    %p118 = scmp.eq.s32.totalorder %s14, 0
    %p119 = por %p117, %p118
    %p120 = scmp.ne.s32.totalorder %s106, %s107
    %p121 = scmp.eq.s32.totalorder %s15, 1
    %p122 = por %p120, %p121
    %p124 = scmp.ne.s32.totalorder %s107, %s123
    %p125 = scmp.eq.s32.totalorder %s15, 0
    %p126 = por %p124, %p125
    %p127 = scmp.le.s32.totalorder 1, %s9
    %p128 = scmp.lt.s32.totalorder %s9, 3
    %p129 = pnand %p127, %p128
    %p130 = pneg %p129
    // Predicated region
    $region9: #{vace_wan_attention_block_forward.24} parent=5 // pred_check
      _
    $region10: #{vace_wan_attention_block_forward.24} parent=5 // pred_check_branch
      %132 = sbr.rel (%p129) target = $region12
    $region11: #{vace_wan_attention_block_forward.24} parent=5 // pred_region
      %s133 = ssub.s32 %s9, 1
      // Predicated region
      $region13: #{vace_wan_attention_block_forward.24} parent=11 // pred_check
        %p134 = pneg %p70
      $region14: #{vace_wan_attention_block_forward.24} parent=11 // pred_check_branch
        %136 = sbr.rel (%p134) target = $region16
      $region15: #{vace_wan_attention_block_forward.24} parent=11 // pred_region
        _
      $region16: #{vace_wan_attention_block_forward.24} parent=11 // pred_fallthru
        _
      // Predicated region
      $region17: #{vace_wan_attention_block_forward.24} parent=11 // pred_check
        %p137 = pneg %p91
      $region18: #{vace_wan_attention_block_forward.24} parent=11 // pred_check_branch
        %139 = sbr.rel (%p137) target = $region20
      $region19: #{vace_wan_attention_block_forward.24} parent=11 // pred_region
        _
      $region20: #{vace_wan_attention_block_forward.24} parent=11 // pred_fallthru
        _
    $region12: #{vace_wan_attention_block_forward.24} parent=5 // pred_fallthru
      _
    %p140 = scmp.lt.s32.totalorder %s9, 2
    // Predicated region
    $region21: #{vace_wan_attention_block_forward.24} parent=5 // pred_check
      %p141 = pneg %p140
    $region22: #{vace_wan_attention_block_forward.24} parent=5 // pred_check_branch
      %143 = sbr.rel (%p141) target = $region24
    $region23: #{vace_wan_attention_block_forward.24} parent=5 // pred_region
      // Predicated region
      $region25: #{vace_wan_attention_block_forward.24} parent=23 // pred_check
        %p144 = pneg %p43
      $region26: #{vace_wan_attention_block_forward.24} parent=23 // pred_check_branch
        %146 = sbr.rel (%p144) target = $region28
      $region27: #{vace_wan_attention_block_forward.24} parent=23 // pred_region
        %p147 = scmp.lt.s32.totalorder %s16, 1
        %s148 = scalar_select %p147, %s16, 1
        %p149 = scmp.lt.s32.totalorder %s17, 0
        %s150 = scalar_select %p149, %s17, 0
        %s151 = sadd.s32 %s150, %s148
        %s152 = smul.addr %s151, 8
        %s153 = scalar_lea.vmem %s0, %s152
      $region28: #{vace_wan_attention_block_forward.24} parent=23 // pred_fallthru
        _
    $region24: #{vace_wan_attention_block_forward.24} parent=5 // pred_fallthru
      _
    %p154 = scmp.le.s32.totalorder 1, %s9
    %p155 = scmp.lt.s32.totalorder %s9, 3
    %p156 = pnand %p154, %p155
    %p157 = pneg %p156
    // Predicated region
    $region29: #{vace_wan_attention_block_forward.24} parent=5 // pred_check
      _
    $region30: #{vace_wan_attention_block_forward.24} parent=5 // pred_check_branch
      %159 = sbr.rel (%p156) target = $region32
    $region31: #{vace_wan_attention_block_forward.24} parent=5 // pred_region
      %s160 = ssub.s32 %s9, 1
      %p161 = scmp.lt.s32.totalorder %s18, 1
      %s162 = scalar_select %p161, %s18, 1
      %p163 = scmp.lt.s32.totalorder %s19, 0
      %s164 = scalar_select %p163, %s19, 0
      %s165 = sadd.s32 %s164, %s162
      %s166 = smul.addr %s165, 8
      %s167 = scalar_lea.vmem %s0, %s166
      %p168 = pneg %p49
      %p169 = pneg %p46
      %p170 = pneg %p70
      %p171 = pneg %p67
      %p172 = pneg %p91
      %p173 = pneg %p88
      %p174 = pneg %p119
      %p175 = pneg %p116
      %p176 = scmp.lt.s32.totalorder %s18, 1
      %s177 = scalar_select %p176, %s18, 1
      %p178 = scmp.lt.s32.totalorder %s19, 0
      %s179 = scalar_select %p178, %s19, 0
      %s180 = sadd.s32 %s179, %s177
      %s181 = smul.addr %s180, 4
      %s182 = scalar_lea.vmem %s3, %s181
      %p183 = scmp.lt.s32.totalorder %s18, 1
      %s184 = scalar_select %p183, %s18, 1
      %p185 = scmp.lt.s32.totalorder %s19, 0
      %s186 = scalar_select %p185, %s19, 0
      %s187 = sadd.s32 %s186, %s184
      %s188 = smul.addr %s187, 8
      %s189 = scalar_lea.vmem %s0, %s188
      %p190 = scmp.lt.s32.totalorder %s18, 1
      %s191 = scalar_select %p190, %s18, 1
      %p192 = scmp.lt.s32.totalorder %s19, 0
      %s193 = scalar_select %p192, %s19, 0
      %s194 = sadd.s32 %s193, %s191
      %s195 = smul.addr %s194, 4
      %s196 = scalar_lea.vmem %s3, %s195
      %v197 = vld [vmem:[%s189] sm:$0xff]
      %vm198 = vcmask 261120
      %v199 = vsel %vm198, %v197, 0.0
      %200 = vadd.xlane.f32.xlu0 %v199
      %v201 = vpop.xlane.xlu0 %200
      %v202 = vrcp.pop 32.0
      %v203 = vmul.f32 %v201, %v202
      %v204 = vsub.f32 %v197, %v203
      %v205 = vmul.f32 %v204, %v204
      %v206 = vsel %vm198, %v205, 0.0
      %207 = vadd.xlane.f32.xlu0 %v206
      %v208 = vpop.xlane.xlu0 %207
      %v209 = vmul.f32 %v208, %v202
      %v210 = vadd.f32 %v209, 1e-06
      %v211 = vrsqrt.pop %v210
      %v212 = vmul.f32 %v204, %v211
      %v213 = vld [vmem:[%s1] sm:$0x1]
      %v215 = vlaneseq
      %v216 = vshrl.u32 %v215, 7
      %v217 = vsub.s32 0, %v216
      %v218 = vrot.slane %v213, %v217
      %v220 = vmul.f32 %v212, %v218
      %v221 = vld [vmem:[%s2] sm:$0x1]
      %v223 = vlaneseq
      %v224 = vshrl.u32 %v223, 7
      %v225 = vsub.s32 0, %v224
      %v226 = vrot.slane %v221, %v225
      %v228 = vadd.f32 %v220, %v226
      %v229 = vpack.c.bf16 %v228, %v228
      %vm230 = vcmask 257024
      %231 = vst.msk [vmem:[%s196] sm:$0xf] %vm230, %v229
      %p232 = scmp.lt.s32.totalorder %s18, 1
      %s233 = scalar_select %p232, %s18, 1
      %p234 = scmp.lt.s32.totalorder %s19, 0
      %s235 = scalar_select %p234, %s19, 0
      %s236 = sadd.s32 %s235, %s233
      %s237 = smul.addr %s236, 4
      %s238 = scalar_lea.vmem %s3, %s237
      // Predicated region
      $region33: #{vace_wan_attention_block_forward.24} parent=31 // pred_check
        %p239 = pneg %p116
      $region34: #{vace_wan_attention_block_forward.24} parent=31 // pred_check_branch
        %241 = sbr.rel (%p239) target = $region36
      $region35: #{vace_wan_attention_block_forward.24} parent=31 // pred_region
        _
      $region36: #{vace_wan_attention_block_forward.24} parent=31 // pred_fallthru
        _
    $region32: #{vace_wan_attention_block_forward.24} parent=5 // pred_fallthru
      _
    %p242 = scmp.le.s32.totalorder 2, %s9
    // Predicated region
    $region37: #{vace_wan_attention_block_forward.24} parent=5 // pred_check
      %p243 = pneg %p242
    $region38: #{vace_wan_attention_block_forward.24} parent=5 // pred_check_branch
      %245 = sbr.rel (%p243) target = $region40
    $region39: #{vace_wan_attention_block_forward.24} parent=5 // pred_region
      %s246 = ssub.s32 %s9, 2
      // Predicated region
      $region41: #{vace_wan_attention_block_forward.24} parent=39 // pred_check
        %p247 = pneg %p122
      $region42: #{vace_wan_attention_block_forward.24} parent=39 // pred_check_branch
        %249 = sbr.rel (%p247) target = $region44
      $region43: #{vace_wan_attention_block_forward.24} parent=39 // pred_region
        %p250 = scmp.lt.s32.totalorder %s20, 1
        %s251 = scalar_select %p250, %s20, 1
        %p252 = scmp.lt.s32.totalorder %s21, 0
        %s253 = scalar_select %p252, %s21, 0
        %s254 = sadd.s32 %s253, %s251
        %s255 = smul.addr %s254, 4
        %s256 = scalar_lea.vmem %s3, %s255
      $region44: #{vace_wan_attention_block_forward.24} parent=39 // pred_fallthru
        _
    $region40: #{vace_wan_attention_block_forward.24} parent=5 // pred_fallthru
      _
  $region6: #{vace_wan_attention_block_forward.24} parent=0 // loop_footer
    %s13 = sadd.s32 1, %s9
  $region7: #{vace_wan_attention_block_forward.24} parent=0 // loop_footer_branch
    %8 = sbr.rel target = $region3
  $region8: #{vace_wan_attention_block_forward.24} parent=0 // loop_exit
    _

// kernel: vace_wan_attention_block_forward.23
$region0: #{vace_wan_attention_block_forward.23}
  #allocation0 [shape = 'u32[]', space=smem, size = 0x4, offset = 0x4, fixed_abs, tag = 'smem constant byte address 0x4 - core index']
  #allocation1 [shape = 'u32[144,128]{1,0:T(1,128)}', space=vmem, size = 0x12000, scoped, tag = 'internal scratch']
  #allocation2 [shape = 'f32[8,32]{1,0:T(8,128)}', space=vmem, size = 0x1000, scoped, tag = 'scratch operand']
  %s0 = inlined_call_operand.vmem [shape: bf16[2,8,32], index: 0, kind: input, shape index: {}]
  %s1 = inlined_call_operand.vmem [shape: bf16[32,32], index: 1, kind: input, shape index: {}]
  %s2 = inlined_call_operand.vmem [shape: f32[1,32], index: 2, kind: input, shape index: {}]
  %s3 = inlined_call_operand.vmem [shape: f32[2,8,32], index: 3, kind: input, shape index: {}]
  %s4 = inlined_call_operand.vmem [shape: f32[2,1,32], index: 4, kind: input, shape index: {}]
  %s5 = inlined_call_operand.vmem [shape: f32[2,8,32], index: 5, kind: output, shape index: {}]
  %s6 = sld [smem:[#allocation0]]
  $region61: #{vace_wan_attention_block_forward.23} parent=0
    _
  %s8 = ssub.s32 1, %s6
  %s9 = scalar_select 0, %s8, %s6
  loop: start=0, step=1, limit=4
  $region2: #{vace_wan_attention_block_forward.23} parent=0 // loop_pre_header
    _
  $region3: #{vace_wan_attention_block_forward.23} parent=0 // loop_header
    %s11 = sphi 0, %s15
    %p12 = scmp.ge.s32.totalorder %s11, 4
    %s18 = sphi 0, %s44
    %s19 = sphi 0, %s40
    %s20 = sphi 0, %s36
    %s21 = sphi 0, %s32
    %s22 = sphi 0, %s18
    %s23 = sphi 0, %s19
    %s24 = sphi 0, %s20
    %s25 = sphi 0, %s21
    %s26 = sphi 0, %s22
    %s27 = sphi 0, %s23
    %s28 = sphi 0, %s24
    %s29 = sphi 0, %s25
    %s51 = sphi 0, %s53
    %s54 = sphi 0, %s51
    %s55 = sphi 0, %s54
    %s71 = sphi 0, %s55
    %s79 = sphi 0, %s81
    %s82 = sphi 0, %s79
    %s83 = sphi 0, %s82
    %s99 = sphi 0, %s83
    %s105 = sphi 0, %s107
    %s108 = sphi 0, %s105
    %s109 = sphi 0, %s108
    %s125 = sphi 0, %s109
    %s135 = sphi 0, %s137
    %s138 = sphi 0, %s135
    %s139 = sphi 0, %s138
    %s155 = sphi 0, %s139
    %s163 = sphi 0, %s165
    %s166 = sphi 0, %s163
    %s167 = sphi 0, %s166
    %s183 = sphi 0, %s167
    %s193 = sphi 0, %s195
    %s196 = sphi 0, %s193
    %s197 = sphi 0, %s196
    %s213 = sphi 0, %s197
  $region4: #{vace_wan_attention_block_forward.23} parent=0 // loop_header_branch
    %14 = sbr.rel (%p12) target = $region8
  $region5: #{vace_wan_attention_block_forward.23} parent=0 // loop_body
    %s16 = ssub.s32 %s11, 1
    %s17 = ssub.s32 %s11, 2
    %s30 = sadd.s32 1, %s21
    %p31 = scmp.ge.s32.totalorder %s30, 1
    %s32 = scalar_select %p31, 0, %s30
    %s33 = sadd.s32 1, %s20
    %s34 = scalar_select %p31, %s33, %s20
    %p35 = scmp.ge.s32.totalorder %s34, 1
    %s36 = scalar_select %p35, 0, %s34
    %s37 = sadd.s32 1, %s19
    %s38 = scalar_select %p35, %s37, %s19
    %p39 = scmp.ge.s32.totalorder %s38, 1
    %s40 = scalar_select %p39, 0, %s38
    %s41 = sadd.s32 1, %s18
    %s42 = scalar_select %p39, %s41, %s18
    %p43 = scmp.ge.s32.totalorder %s42, 2
    %s44 = scalar_select %p43, 0, %s42
    %s45 = ssub.s32 %s18, %s44
    %s46 = ssub.s32 %s19, %s40
    %s47 = sor.u32 %s45, %s46
    %s48 = ssub.s32 %s21, %s32
    %s49 = sor.u32 %s47, %s48
    %p50 = scmp.eq.s32.totalorder %s49, 0
    %s52 = sadd.s32 %s51, 1
    %s53 = scalar_select %p50, %s51, %s52
    %p56 = pneg %p50
    %p57 = scmp.eq.s32.totalorder %s11, 1
    %p58 = por %p56, %p57
    %p59 = scmp.ne.s32.totalorder %s51, %s54
    %p60 = scmp.eq.s32.totalorder %s11, 0
    %p61 = por %p59, %p60
    %p62 = scmp.ne.s32.totalorder %s51, %s54
    %p63 = scmp.eq.s32.totalorder %s16, 1
    %p64 = por %p62, %p63
    %p65 = scmp.ne.s32.totalorder %s54, %s55
    %p66 = scmp.eq.s32.totalorder %s16, 0
    %p67 = por %p65, %p66
    %p68 = scmp.ne.s32.totalorder %s54, %s55
    %p69 = scmp.eq.s32.totalorder %s17, 1
    %p70 = por %p68, %p69
    %p72 = scmp.ne.s32.totalorder %s55, %s71
    %p73 = scmp.eq.s32.totalorder %s17, 0
    %p74 = por %p72, %p73
    %s75 = ssub.s32 %s21, %s32
    %s76 = ssub.s32 %s20, %s36
    %s77 = sor.u32 %s75, %s76
    %p78 = scmp.eq.s32.totalorder %s77, 0
    %s80 = sadd.s32 %s79, 1
    %s81 = scalar_select %p78, %s79, %s80
    %p84 = pneg %p78
    %p85 = scmp.eq.s32.totalorder %s11, 1
    %p86 = por %p84, %p85
    %p87 = scmp.ne.s32.totalorder %s79, %s82
    %p88 = scmp.eq.s32.totalorder %s11, 0
    %p89 = por %p87, %p88
    %p90 = scmp.ne.s32.totalorder %s79, %s82
    %p91 = scmp.eq.s32.totalorder %s16, 1
    %p92 = por %p90, %p91
    %p93 = scmp.ne.s32.totalorder %s82, %s83
    %p94 = scmp.eq.s32.totalorder %s16, 0
    %p95 = por %p93, %p94
    %p96 = scmp.ne.s32.totalorder %s82, %s83
    %p97 = scmp.eq.s32.totalorder %s17, 1
    %p98 = por %p96, %p97
    %p100 = scmp.ne.s32.totalorder %s83, %s99
    %p101 = scmp.eq.s32.totalorder %s17, 0
    %p102 = por %p100, %p101
    %s103 = ssub.s32 %s20, %s36
    %p104 = scmp.eq.s32.totalorder %s103, 0
    %s106 = sadd.s32 %s105, 1
    %s107 = scalar_select %p104, %s105, %s106
    %p110 = pneg %p104
    %p111 = scmp.eq.s32.totalorder %s11, 1
    %p112 = por %p110, %p111
    %p113 = scmp.ne.s32.totalorder %s105, %s108
    %p114 = scmp.eq.s32.totalorder %s11, 0
    %p115 = por %p113, %p114
    %p116 = scmp.ne.s32.totalorder %s105, %s108
    %p117 = scmp.eq.s32.totalorder %s16, 1
    %p118 = por %p116, %p117
    %p119 = scmp.ne.s32.totalorder %s108, %s109
    %p120 = scmp.eq.s32.totalorder %s16, 0
    %p121 = por %p119, %p120
    %p122 = scmp.ne.s32.totalorder %s108, %s109
    %p123 = scmp.eq.s32.totalorder %s17, 1
    %p124 = por %p122, %p123
    %p126 = scmp.ne.s32.totalorder %s109, %s125
    %p127 = scmp.eq.s32.totalorder %s17, 0
    %p128 = por %p126, %p127
    %s129 = ssub.s32 %s18, %s44
    %s130 = ssub.s32 %s19, %s40
    %s131 = sor.u32 %s129, %s130
    %s132 = ssub.s32 %s20, %s36
    %s133 = sor.u32 %s131, %s132
    %p134 = scmp.eq.s32.totalorder %s133, 0
    %s136 = sadd.s32 %s135, 1
    %s137 = scalar_select %p134, %s135, %s136
    %p140 = pneg %p134
    %p141 = scmp.eq.s32.totalorder %s11, 1
    %p142 = por %p140, %p141
    %p143 = scmp.ne.s32.totalorder %s135, %s138
    %p144 = scmp.eq.s32.totalorder %s11, 0
    %p145 = por %p143, %p144
    %p146 = scmp.ne.s32.totalorder %s135, %s138
    %p147 = scmp.eq.s32.totalorder %s16, 1
    %p148 = por %p146, %p147
    %p149 = scmp.ne.s32.totalorder %s138, %s139
    %p150 = scmp.eq.s32.totalorder %s16, 0
    %p151 = por %p149, %p150
    %p152 = scmp.ne.s32.totalorder %s138, %s139
    %p153 = scmp.eq.s32.totalorder %s17, 1
    %p154 = por %p152, %p153
    %p156 = scmp.ne.s32.totalorder %s139, %s155
    %p157 = scmp.eq.s32.totalorder %s17, 0
    %p158 = por %p156, %p157
    %s159 = ssub.s32 %s18, %s44
    %s160 = ssub.s32 %s20, %s36
    %s161 = sor.u32 %s159, %s160
    %p162 = scmp.eq.s32.totalorder %s161, 0
    %s164 = sadd.s32 %s163, 1
    %s165 = scalar_select %p162, %s163, %s164
    %p168 = pneg %p162
    %p169 = scmp.eq.s32.totalorder %s11, 1
    %p170 = por %p168, %p169
    %p171 = scmp.ne.s32.totalorder %s163, %s166
    %p172 = scmp.eq.s32.totalorder %s11, 0
    %p173 = por %p171, %p172
    %p174 = scmp.ne.s32.totalorder %s163, %s166
    %p175 = scmp.eq.s32.totalorder %s16, 1
    %p176 = por %p174, %p175
    %p177 = scmp.ne.s32.totalorder %s166, %s167
    %p178 = scmp.eq.s32.totalorder %s16, 0
    %p179 = por %p177, %p178
    %p180 = scmp.ne.s32.totalorder %s166, %s167
    %p181 = scmp.eq.s32.totalorder %s17, 1
    %p182 = por %p180, %p181
    %p184 = scmp.ne.s32.totalorder %s167, %s183
    %p185 = scmp.eq.s32.totalorder %s17, 0
    %p186 = por %p184, %p185
    %s187 = ssub.s32 %s18, %s44
    %s188 = ssub.s32 %s19, %s40
    %s189 = sor.u32 %s187, %s188
    %s190 = ssub.s32 %s20, %s36
    %s191 = sor.u32 %s189, %s190
    %p192 = scmp.eq.s32.totalorder %s191, 0
    %s194 = sadd.s32 %s193, 1
    %s195 = scalar_select %p192, %s193, %s194
    %p198 = pneg %p192
    %p199 = scmp.eq.s32.totalorder %s11, 1
    %p200 = por %p198, %p199
    %p201 = scmp.ne.s32.totalorder %s193, %s196
    %p202 = scmp.eq.s32.totalorder %s11, 0
    %p203 = por %p201, %p202
    %p204 = scmp.ne.s32.totalorder %s193, %s196
    %p205 = scmp.eq.s32.totalorder %s16, 1
    %p206 = por %p204, %p205
    %p207 = scmp.ne.s32.totalorder %s196, %s197
    %p208 = scmp.eq.s32.totalorder %s16, 0
    %p209 = por %p207, %p208
    %p210 = scmp.ne.s32.totalorder %s196, %s197
    %p211 = scmp.eq.s32.totalorder %s17, 1
    %p212 = por %p210, %p211
    %p214 = scmp.ne.s32.totalorder %s197, %s213
    %p215 = scmp.eq.s32.totalorder %s17, 0
    %p216 = por %p214, %p215
    %p217 = scmp.le.s32.totalorder 1, %s11
    %p218 = scmp.lt.s32.totalorder %s11, 3
    %p219 = pnand %p217, %p218
    %p220 = pneg %p219
    // Predicated region
    $region9: #{vace_wan_attention_block_forward.23} parent=5 // pred_check
      _
    $region10: #{vace_wan_attention_block_forward.23} parent=5 // pred_check_branch
      %222 = sbr.rel (%p219) target = $region12
    $region11: #{vace_wan_attention_block_forward.23} parent=5 // pred_region
      %s223 = ssub.s32 %s11, 1
      // Predicated region
      $region13: #{vace_wan_attention_block_forward.23} parent=11 // pred_check
        %p224 = pneg %p95
      $region14: #{vace_wan_attention_block_forward.23} parent=11 // pred_check_branch
        %226 = sbr.rel (%p224) target = $region16
      $region15: #{vace_wan_attention_block_forward.23} parent=11 // pred_region
        %s227 = smul.u32 4, %s25
        %p228 = scmp.lt.s32.totalorder %s227, 3
        %s229 = scalar_select %p228, %s227, 3
        %p230 = scmp.lt.s32.totalorder %s24, 0
        %s231 = scalar_select %p230, %s24, 0
        %s232 = sadd.s32 %s231, %s229
        %s233 = smul.addr %s232, 4
        %s234 = scalar_lea.vmem %s1, %s233
        %s235 = smul.u32 4, %s25
      $region16: #{vace_wan_attention_block_forward.23} parent=11 // pred_fallthru
        _
      // Predicated region
      $region17: #{vace_wan_attention_block_forward.23} parent=11 // pred_check
        %p236 = pneg %p121
      $region18: #{vace_wan_attention_block_forward.23} parent=11 // pred_check_branch
        %238 = sbr.rel (%p236) target = $region20
      $region19: #{vace_wan_attention_block_forward.23} parent=11 // pred_region
        %p239 = scmp.lt.s32.totalorder %s24, 0
        %s240 = scalar_select %p239, %s24, 0
        %s241 = scalar_lea.vmem %s2, %s240
      $region20: #{vace_wan_attention_block_forward.23} parent=11 // pred_fallthru
        _
    $region12: #{vace_wan_attention_block_forward.23} parent=5 // pred_fallthru
      _
    %p242 = scmp.lt.s32.totalorder %s11, 2
    // Predicated region
    $region21: #{vace_wan_attention_block_forward.23} parent=5 // pred_check
      %p243 = pneg %p242
    $region22: #{vace_wan_attention_block_forward.23} parent=5 // pred_check_branch
      %245 = sbr.rel (%p243) target = $region24
    $region23: #{vace_wan_attention_block_forward.23} parent=5 // pred_region
      // Predicated region
      $region25: #{vace_wan_attention_block_forward.23} parent=23 // pred_check
        %p246 = pneg %p61
      $region26: #{vace_wan_attention_block_forward.23} parent=23 // pred_check_branch
        %248 = sbr.rel (%p246) target = $region28
      $region27: #{vace_wan_attention_block_forward.23} parent=23 // pred_region
        %p249 = scmp.lt.s32.totalorder %s18, 1
        %s250 = scalar_select %p249, %s18, 1
        %p251 = scmp.lt.s32.totalorder %s19, 0
        %s252 = scalar_select %p251, %s19, 0
        %p253 = scmp.lt.s32.totalorder %s21, 0
        %s254 = scalar_select %p253, %s21, 0
        %s255 = sadd.s32 %s254, %s252
        %s256 = sadd.s32 %s255, %s250
        %s257 = smul.addr %s256, 4
        %s258 = scalar_lea.vmem %s0, %s257
      $region28: #{vace_wan_attention_block_forward.23} parent=23 // pred_fallthru
        _
      // Predicated region
      $region29: #{vace_wan_attention_block_forward.23} parent=23 // pred_check
        %p259 = pneg %p145
      $region30: #{vace_wan_attention_block_forward.23} parent=23 // pred_check_branch
        %261 = sbr.rel (%p259) target = $region32
      $region31: #{vace_wan_attention_block_forward.23} parent=23 // pred_region
        %p262 = scmp.lt.s32.totalorder %s18, 1
        %s263 = scalar_select %p262, %s18, 1
        %p264 = scmp.lt.s32.totalorder %s19, 0
        %s265 = scalar_select %p264, %s19, 0
        %p266 = scmp.lt.s32.totalorder %s20, 0
        %s267 = scalar_select %p266, %s20, 0
        %s268 = sadd.s32 %s267, %s265
        %s269 = sadd.s32 %s268, %s263
        %s270 = smul.addr %s269, 8
        %s271 = scalar_lea.vmem %s3, %s270
      $region32: #{vace_wan_attention_block_forward.23} parent=23 // pred_fallthru
        _
      // Predicated region
      $region33: #{vace_wan_attention_block_forward.23} parent=23 // pred_check
        %p272 = pneg %p173
      $region34: #{vace_wan_attention_block_forward.23} parent=23 // pred_check_branch
        %274 = sbr.rel (%p272) target = $region36
      $region35: #{vace_wan_attention_block_forward.23} parent=23 // pred_region
        %p275 = scmp.lt.s32.totalorder %s18, 1
        %s276 = scalar_select %p275, %s18, 1
        %p277 = scmp.lt.s32.totalorder %s20, 0
        %s278 = scalar_select %p277, %s20, 0
        %s279 = sadd.s32 %s278, %s276
        %s280 = scalar_lea.vmem %s4, %s279
      $region36: #{vace_wan_attention_block_forward.23} parent=23 // pred_fallthru
        _
    $region24: #{vace_wan_attention_block_forward.23} parent=5 // pred_fallthru
      _
    %p281 = scmp.le.s32.totalorder 1, %s11
    %p282 = scmp.lt.s32.totalorder %s11, 3
    %p283 = pnand %p281, %p282
    %p284 = pneg %p283
    // Predicated region
    $region37: #{vace_wan_attention_block_forward.23} parent=5 // pred_check
      _
    $region38: #{vace_wan_attention_block_forward.23} parent=5 // pred_check_branch
      %286 = sbr.rel (%p283) target = $region40
    $region39: #{vace_wan_attention_block_forward.23} parent=5 // pred_region
      %s287 = ssub.s32 %s11, 1
      %p288 = scmp.lt.s32.totalorder %s22, 1
      %s289 = scalar_select %p288, %s22, 1
      %p290 = scmp.lt.s32.totalorder %s23, 0
      %s291 = scalar_select %p290, %s23, 0
      %p292 = scmp.lt.s32.totalorder %s25, 0
      %s293 = scalar_select %p292, %s25, 0
      %s294 = sadd.s32 %s293, %s291
      %s295 = sadd.s32 %s294, %s289
      %s296 = smul.addr %s295, 4
      %s297 = scalar_lea.vmem %s0, %s296
      %p298 = pneg %p67
      %p299 = pneg %p64
      %s300 = smul.u32 4, %s25
      %p301 = scmp.lt.s32.totalorder %s300, 3
      %s302 = scalar_select %p301, %s300, 3
      %p303 = scmp.lt.s32.totalorder %s24, 0
      %s304 = scalar_select %p303, %s24, 0
      %s305 = sadd.s32 %s304, %s302
      %s306 = smul.addr %s305, 4
      %s307 = scalar_lea.vmem %s1, %s306
      %p308 = pneg %p95
      %p309 = pneg %p92
      %p310 = scmp.lt.s32.totalorder %s24, 0
      %s311 = scalar_select %p310, %s24, 0
      %s312 = scalar_lea.vmem %s2, %s311
      %p313 = pneg %p121
      %p314 = pneg %p118
      %p315 = scmp.lt.s32.totalorder %s22, 1
      %s316 = scalar_select %p315, %s22, 1
      %p317 = scmp.lt.s32.totalorder %s23, 0
      %s318 = scalar_select %p317, %s23, 0
      %p319 = scmp.lt.s32.totalorder %s24, 0
      %s320 = scalar_select %p319, %s24, 0
      %s321 = sadd.s32 %s320, %s318
      %s322 = sadd.s32 %s321, %s316
      %s323 = smul.addr %s322, 8
      %s324 = scalar_lea.vmem %s3, %s323
      %p325 = pneg %p151
      %p326 = pneg %p148
      %p327 = scmp.lt.s32.totalorder %s22, 1
      %s328 = scalar_select %p327, %s22, 1
      %p329 = scmp.lt.s32.totalorder %s24, 0
      %s330 = scalar_select %p329, %s24, 0
      %s331 = sadd.s32 %s330, %s328
      %s332 = scalar_lea.vmem %s4, %s331
      %p333 = pneg %p179
      %p334 = pneg %p176
      %p335 = pneg %p209
      %p336 = pneg %p206
      %p337 = scmp.lt.s32.totalorder %s22, 1
      %s338 = scalar_select %p337, %s22, 1
      %p339 = scmp.lt.s32.totalorder %s23, 0
      %s340 = scalar_select %p339, %s23, 0
      %p341 = scmp.lt.s32.totalorder %s24, 0
      %s342 = scalar_select %p341, %s24, 0
      %s343 = sadd.s32 %s342, %s340
      %s344 = sadd.s32 %s343, %s338
      %s345 = smul.addr %s344, 8
      %s346 = scalar_lea.vmem %s5, %s345
      %p347 = scmp.lt.s32.totalorder %s22, 1
      %s348 = scalar_select %p347, %s22, 1
      %p349 = scmp.lt.s32.totalorder %s23, 0
      %s350 = scalar_select %p349, %s23, 0
      %p351 = scmp.lt.s32.totalorder %s25, 0
      %s352 = scalar_select %p351, %s25, 0
      %s353 = sadd.s32 %s352, %s350
      %s354 = sadd.s32 %s353, %s348
      %s355 = smul.addr %s354, 4
      %s356 = scalar_lea.vmem %s0, %s355
      %s357 = smul.u32 4, %s25
      %p358 = scmp.lt.s32.totalorder %s357, 3
      %s359 = scalar_select %p358, %s357, 3
      %p360 = scmp.lt.s32.totalorder %s24, 0
      %s361 = scalar_select %p360, %s24, 0
      %s362 = sadd.s32 %s361, %s359
      %s363 = smul.addr %s362, 4
      %s364 = scalar_lea.vmem %s1, %s363
      %s365 = smul.u32 4, %s25
      %p366 = scmp.lt.s32.totalorder %s24, 0
      %s367 = scalar_select %p366, %s24, 0
      %s368 = scalar_lea.vmem %s2, %s367
      %p369 = scmp.lt.s32.totalorder %s22, 1
      %s370 = scalar_select %p369, %s22, 1
      %p371 = scmp.lt.s32.totalorder %s23, 0
      %s372 = scalar_select %p371, %s23, 0
      %p373 = scmp.lt.s32.totalorder %s24, 0
      %s374 = scalar_select %p373, %s24, 0
      %s375 = sadd.s32 %s374, %s372
      %s376 = sadd.s32 %s375, %s370
      %s377 = smul.addr %s376, 8
      %s378 = scalar_lea.vmem %s3, %s377
      %p379 = scmp.lt.s32.totalorder %s22, 1
      %s380 = scalar_select %p379, %s22, 1
      %p381 = scmp.lt.s32.totalorder %s24, 0
      %s382 = scalar_select %p381, %s24, 0
      %s383 = sadd.s32 %s382, %s380
      %s384 = scalar_lea.vmem %s4, %s383
      %p385 = scmp.lt.s32.totalorder %s22, 1
      %s386 = scalar_select %p385, %s22, 1
      %p387 = scmp.lt.s32.totalorder %s23, 0
      %s388 = scalar_select %p387, %s23, 0
      %p389 = scmp.lt.s32.totalorder %s24, 0
      %s390 = scalar_select %p389, %s24, 0
      %s391 = sadd.s32 %s390, %s388
      %s392 = sadd.s32 %s391, %s386
      %s393 = smul.addr %s392, 8
      %s394 = scalar_lea.vmem %s5, %s393
      %p396 = scmp.eq.s32.totalorder %s25, 0
      // Predicated region
      $region41: #{vace_wan_attention_block_forward.23} parent=39 // pred_check
        %p397 = pneg %p396
      $region42: #{vace_wan_attention_block_forward.23} parent=39 // pred_check_branch
        %399 = sbr.rel (%p397) target = $region44
      $region43: #{vace_wan_attention_block_forward.23} parent=39 // pred_region
        %vm400 = vcmask 261120
        %401 = vst.msk [vmem:[#allocation2] sm:$0xff] %vm400, 0.0
      $region44: #{vace_wan_attention_block_forward.23} parent=39 // pred_fallthru
        _
      %v402 = vld [vmem:[#allocation2] sm:$0xff]
      %v403 = vld [vmem:[%s356] sm:$0xf]
      %v404 = vld [vmem:[%s364] sm:$0xf]
      %v405 = vld [vmem:[%s364 + $0x4] sm:$0xf]
      %v406 = vld [vmem:[%s364 + $0x8] sm:$0xf]
      %v407 = vld [vmem:[%s364 + $0xc] sm:$0xf]
      %v412 = vunpack.c.l.b16 %v404
      %v413 = vunpack.c.l.b16 %v405
      %v414 = vunpack.c.l.b16 %v406
      %v415 = vunpack.c.l.b16 %v407
      %v416 = vpack.c.b16 %v413, %v412
      %v417 = vpack.c.b16 %v415, %v414
      %vm420 = vcmask 261120
      %v422 = vsel %vm420, %v403, 0
      %424 = vmatprep.subr.bf16.mxu0 0
      %425 = vmatpush1.bf16.msra.mxu0 %v416
      %426 = vmatprep.subr.bf16.mxu0 0
      %427 = vmatpush1.bf16.msra.mxu0 %v417
      %428 = vmatprep.subr.bf16.mxu0 0
      %429 = vmatpush1.bf16.msra.mxu0 0
      %430 = vmatprep.subr.bf16.mxu0 0
      %431 = vmatpush1.bf16.msra.mxu0 0
      %432 = vmatprep.subr.bf16.mxu0 0
      %433 = vmatpush1.bf16.msra.mxu0 0
      %434 = vmatprep.subr.bf16.mxu0 0
      %435 = vmatpush1.bf16.msra.mxu0 0
      %436 = vmatprep.subr.bf16.mxu0 0
      %437 = vmatpush1.bf16.msra.mxu0 0
      %438 = vmatprep.subr.bf16.mxu0 0
      %439 = vmatpush1.bf16.msra.mxu0 0
      %440 = vmatprep.subr.bf16.mxu0 0
      %441 = vmatpush1.bf16.msra.mxu0 0
      %442 = vmatprep.subr.bf16.mxu0 0
      %443 = vmatpush1.bf16.msra.mxu0 0
      %444 = vmatprep.subr.bf16.mxu0 0
      %445 = vmatpush1.bf16.msra.mxu0 0
      %446 = vmatprep.subr.bf16.mxu0 0
      %447 = vmatpush1.bf16.msra.mxu0 0
      %448 = vmatprep.subr.bf16.mxu0 0
      %449 = vmatpush1.bf16.msra.mxu0 0
      %450 = vmatprep.subr.bf16.mxu0 0
      %451 = vmatpush1.bf16.msra.mxu0 0
      %452 = vmatprep.subr.bf16.mxu0 0
      %453 = vmatpush1.bf16.msra.mxu0 0
      %454 = vmatprep.subr.bf16.mxu0 0
      %455 = vmatpush1.bf16.msra.mxu0 0
      %456 = vmatprep.mubr.bf16.mxu0 0
      %457 = vmatmul.mubr.bf16.gmra.mrb[0].mxu0 %v422
      %v458 = vpop.f32.mrb[0].mxu0
      %v459 = vadd.f32 0.0, %v458
      %v460 = vpop.f32.mrb[0].mxu0
      %v461 = vpop.f32.mrb[0].mxu0
      %v462 = vpop.f32.mrb[0].mxu0
      %463 = vdwg.mxu0
      %v464 = vadd.f32 %v402, %v459
      %465 = vst.msk [vmem:[#allocation2] sm:$0xff] %vm420, %v464
      // Predicated region
      $region45: #{vace_wan_attention_block_forward.23} parent=39 // pred_check
        %p466 = pneg %p396
      $region46: #{vace_wan_attention_block_forward.23} parent=39 // pred_check_branch
        %468 = sbr.rel (%p466) target = $region48
      $region47: #{vace_wan_attention_block_forward.23} parent=39 // pred_region
        %v469 = vld [vmem:[#allocation2] sm:$0xff]
        %v470 = vld [vmem:[%s368] sm:$0x1]
        %v472 = vlaneseq
        %v473 = vshrl.u32 %v472, 7
        %v474 = vsub.s32 0, %v473
        %v475 = vrot.slane %v470, %v474
        %v477 = vadd.f32 %v469, %v475
        %v478 = vld [vmem:[%s384] sm:$0x1]
        %v480 = vlaneseq
        %v481 = vshrl.u32 %v480, 7
        %v482 = vsub.s32 0, %v481
        %v483 = vrot.slane %v478, %v482
        %v485 = vmul.f32 %v477, %v483
        %v486 = vld [vmem:[%s378] sm:$0xff]
        %v487 = vadd.f32 %v486, %v485
        %488 = vst.msk [vmem:[%s394] sm:$0xff] %vm420, %v487
      $region48: #{vace_wan_attention_block_forward.23} parent=39 // pred_fallthru
        _
      %p489 = scmp.lt.s32.totalorder %s22, 1
      %s490 = scalar_select %p489, %s22, 1
      %p491 = scmp.lt.s32.totalorder %s23, 0
      %s492 = scalar_select %p491, %s23, 0
      %p493 = scmp.lt.s32.totalorder %s24, 0
      %s494 = scalar_select %p493, %s24, 0
      %s495 = sadd.s32 %s494, %s492
      %s496 = sadd.s32 %s495, %s490
      %s497 = smul.addr %s496, 8
      %s498 = scalar_lea.vmem %s5, %s497
      // Predicated region
      $region49: #{vace_wan_attention_block_forward.23} parent=39 // pred_check
        %p499 = pneg %p206
      $region50: #{vace_wan_attention_block_forward.23} parent=39 // pred_check_branch
        %501 = sbr.rel (%p499) target = $region52
      $region51: #{vace_wan_attention_block_forward.23} parent=39 // pred_region
        _
      $region52: #{vace_wan_attention_block_forward.23} parent=39 // pred_fallthru
        _
    $region40: #{vace_wan_attention_block_forward.23} parent=5 // pred_fallthru
      _
    %p502 = scmp.le.s32.totalorder 2, %s11
    // Predicated region
    $region53: #{vace_wan_attention_block_forward.23} parent=5 // pred_check
      %p503 = pneg %p502
    $region54: #{vace_wan_attention_block_forward.23} parent=5 // pred_check_branch
      %505 = sbr.rel (%p503) target = $region56
    $region55: #{vace_wan_attention_block_forward.23} parent=5 // pred_region
      %s506 = ssub.s32 %s11, 2
      // Predicated region
      $region57: #{vace_wan_attention_block_forward.23} parent=55 // pred_check
        %p507 = pneg %p212
      $region58: #{vace_wan_attention_block_forward.23} parent=55 // pred_check_branch
        %509 = sbr.rel (%p507) target = $region60
      $region59: #{vace_wan_attention_block_forward.23} parent=55 // pred_region
        %p510 = scmp.lt.s32.totalorder %s26, 1
        %s511 = scalar_select %p510, %s26, 1
        %p512 = scmp.lt.s32.totalorder %s27, 0
        %s513 = scalar_select %p512, %s27, 0
        %p514 = scmp.lt.s32.totalorder %s28, 0
        %s515 = scalar_select %p514, %s28, 0
        %s516 = sadd.s32 %s515, %s513
        %s517 = sadd.s32 %s516, %s511
        %s518 = smul.addr %s517, 8
        %s519 = scalar_lea.vmem %s5, %s518
      $region60: #{vace_wan_attention_block_forward.23} parent=55 // pred_fallthru
        _
    $region56: #{vace_wan_attention_block_forward.23} parent=5 // pred_fallthru
      _
  $region6: #{vace_wan_attention_block_forward.23} parent=0 // loop_footer
    %s15 = sadd.s32 1, %s11
  $region7: #{vace_wan_attention_block_forward.23} parent=0 // loop_footer_branch
    %10 = sbr.rel target = $region3
  $region8: #{vace_wan_attention_block_forward.23} parent=0 // loop_exit
    _

// kernel: vace_wan_attention_block_forward.31
$region0: #{vace_wan_attention_block_forward.31}
  #allocation0 [shape = 'u32[]', space=smem, size = 0x4, offset = 0x4, fixed_abs, tag = 'smem constant byte address 0x4 - core index']
  #allocation1 [shape = 'u32[144,128]{1,0:T(1,128)}', space=vmem, size = 0x12000, scoped, tag = 'internal scratch']
  #allocation2 [shape = 'f32[16,64]{1,0:T(8,128)}', space=vmem, size = 0x2000, scoped, tag = 'scratch operand']
  %s0 = inlined_call_operand.vmem [shape: bf16[16,32], index: 0, kind: input, shape index: {}]
  %s1 = inlined_call_operand.vmem [shape: bf16[32,64], index: 1, kind: input, shape index: {}]
  %s2 = inlined_call_operand.vmem [shape: f32[1,64], index: 2, kind: input, shape index: {}]
  %s3 = inlined_call_operand.vmem [shape: bf16[16,64], index: 3, kind: output, shape index: {}]
  %s4 = sld [smem:[#allocation0]]
  $region30: #{vace_wan_attention_block_forward.31} parent=0
    _
  %s6 = ssub.s32 1, %s4
  %s7 = scalar_select 0, %s6, %s4
  // Predicated region
  $region2: #{vace_wan_attention_block_forward.31} parent=0 // pred_check
    _
  $region3: #{vace_wan_attention_block_forward.31} parent=0 // pred_check_branch
    %9 = sbr.rel (0) target = $region5
  $region4: #{vace_wan_attention_block_forward.31} parent=0 // pred_region
    _
  $region5: #{vace_wan_attention_block_forward.31} parent=0 // pred_fallthru
    _
  // Predicated region
  $region6: #{vace_wan_attention_block_forward.31} parent=0 // pred_check
    _
  $region7: #{vace_wan_attention_block_forward.31} parent=0 // pred_check_branch
    %11 = sbr.rel (0) target = $region9
  $region8: #{vace_wan_attention_block_forward.31} parent=0 // pred_region
    _
  $region9: #{vace_wan_attention_block_forward.31} parent=0 // pred_fallthru
    _
  // Predicated region
  $region10: #{vace_wan_attention_block_forward.31} parent=0 // pred_check
    _
  $region11: #{vace_wan_attention_block_forward.31} parent=0 // pred_check_branch
    %13 = sbr.rel (0) target = $region13
  $region12: #{vace_wan_attention_block_forward.31} parent=0 // pred_region
    _
  $region13: #{vace_wan_attention_block_forward.31} parent=0 // pred_fallthru
    _
  %p15 = scmp.eq.s32.totalorder 0, 0
  // Predicated region
  $region14: #{vace_wan_attention_block_forward.31} parent=0 // pred_check
    %p16 = pneg %p15
  $region15: #{vace_wan_attention_block_forward.31} parent=0 // pred_check_branch
    %18 = sbr.rel (%p16) target = $region17
  $region16: #{vace_wan_attention_block_forward.31} parent=0 // pred_region
    %vm19 = vcmask 523264
    %20 = vst.msk [vmem:[#allocation2] sm:$0xff] %vm19, 0.0
    %21 = vst.msk [vmem:[#allocation2 + $0x8] sm:$0xff] %vm19, 0.0
  $region17: #{vace_wan_attention_block_forward.31} parent=0 // pred_fallthru
    _
  %v22 = vld [vmem:[#allocation2] sm:$0xff]
  %v23 = vld [vmem:[#allocation2 + $0x8] sm:$0xff]
  %v24 = vld [vmem:[%s0] sm:$0xf]
  %v25 = vld [vmem:[%s0 + $0x4] sm:$0xf]
  %v26 = vld [vmem:[%s1] sm:$0xf]
  %v27 = vld [vmem:[%s1 + $0x4] sm:$0xf]
  %v28 = vld [vmem:[%s1 + $0x8] sm:$0xf]
  %v29 = vld [vmem:[%s1 + $0xc] sm:$0xf]
  %v32 = vunpack.c.l.b16 %v24
  %v33 = vunpack.c.l.b16 %v25
  %v34 = vpack.c.b16 %v33, %v32
  %v39 = vunpack.c.l.b16 %v26
  %v40 = vunpack.c.l.b16 %v27
  %v41 = vunpack.c.l.b16 %v28
  %v42 = vunpack.c.l.b16 %v29
  %v43 = vpack.c.b16 %v40, %v39
  %v44 = vpack.c.b16 %v42, %v41
  %vm47 = vcmask 261120
  %v49 = vsel %vm47, %v34, 0
  %51 = vmatprep.subr.bf16.mxu0 0
  %52 = vmatpush1.bf16.msra.mxu0 %v43
  %53 = vmatprep.subr.bf16.mxu0 0
  %54 = vmatpush1.bf16.msra.mxu0 %v44
  %55 = vmatprep.subr.bf16.mxu0 0
  %56 = vmatpush1.bf16.msra.mxu0 0
  %57 = vmatprep.subr.bf16.mxu0 0
  %58 = vmatpush1.bf16.msra.mxu0 0
  %59 = vmatprep.subr.bf16.mxu0 0
  %60 = vmatpush1.bf16.msra.mxu0 0
  %61 = vmatprep.subr.bf16.mxu0 0
  %62 = vmatpush1.bf16.msra.mxu0 0
  %63 = vmatprep.subr.bf16.mxu0 0
  %64 = vmatpush1.bf16.msra.mxu0 0
  %65 = vmatprep.subr.bf16.mxu0 0
  %66 = vmatpush1.bf16.msra.mxu0 0
  %67 = vmatprep.subr.bf16.mxu0 0
  %68 = vmatpush1.bf16.msra.mxu0 0
  %69 = vmatprep.subr.bf16.mxu0 0
  %70 = vmatpush1.bf16.msra.mxu0 0
  %71 = vmatprep.subr.bf16.mxu0 0
  %72 = vmatpush1.bf16.msra.mxu0 0
  %73 = vmatprep.subr.bf16.mxu0 0
  %74 = vmatpush1.bf16.msra.mxu0 0
  %75 = vmatprep.subr.bf16.mxu0 0
  %76 = vmatpush1.bf16.msra.mxu0 0
  %77 = vmatprep.subr.bf16.mxu0 0
  %78 = vmatpush1.bf16.msra.mxu0 0
  %79 = vmatprep.subr.bf16.mxu0 0
  %80 = vmatpush1.bf16.msra.mxu0 0
  %81 = vmatprep.subr.bf16.mxu0 0
  %82 = vmatpush1.bf16.msra.mxu0 0
  %83 = vmatprep.mubr.bf16.mxu0 0
  %84 = vmatmul.mubr.bf16.gmra.mrb[0].mxu0 %v49
  %v85 = vpop.f32.mrb[0].mxu0
  %v86 = vadd.f32 0.0, %v85
  %v87 = vpop.f32.mrb[0].mxu0
  %v88 = vpop.f32.mrb[0].mxu0
  %v89 = vadd.f32 0.0, %v88
  %v90 = vpop.f32.mrb[0].mxu0
  %91 = vdwg.mxu0
  %v92 = vadd.f32 %v22, %v86
  %v93 = vadd.f32 %v23, %v89
  %vm94 = vcmask 523264
  %95 = vst.msk [vmem:[#allocation2] sm:$0xff] %vm94, %v92
  %96 = vst.msk [vmem:[#allocation2 + $0x8] sm:$0xff] %vm94, %v93
  // Predicated region
  $region18: #{vace_wan_attention_block_forward.31} parent=0 // pred_check
    %p97 = pneg %p15
  $region19: #{vace_wan_attention_block_forward.31} parent=0 // pred_check_branch
    %99 = sbr.rel (%p97) target = $region21
  $region20: #{vace_wan_attention_block_forward.31} parent=0 // pred_region
    %v100 = vld [vmem:[#allocation2] sm:$0xff]
    %v101 = vld [vmem:[#allocation2 + $0x8] sm:$0xff]
    %v102 = vld [vmem:[%s2] sm:$0x1]
    %v104 = vlaneseq
    %v105 = vshrl.u32 %v104, 7
    %v106 = vsub.s32 0, %v105
    %v107 = vrot.slane %v102, %v106
    %v109 = vadd.f32 %v100, %v107
    %v110 = vadd.f32 %v101, %v107
    %v111 = vmul.f32 %v109, 0.5
    %v112 = vmul.f32 %v110, 0.5
    %v113 = vmul.f32 %v109, 0.044715
    %v114 = vmul.f32 %v110, 0.044715
    %v115 = vmul.f32 %v113, %v109
    %v116 = vmul.f32 %v114, %v110
    %v117 = vmul.f32 %v115, %v109
    %v118 = vmul.f32 %v116, %v110
    %v119 = vadd.f32 %v109, %v117
    %v120 = vadd.f32 %v110, %v118
    %v121 = vmul.f32 %v119, 0.7978846
    %v122 = vmul.f32 %v120, 0.7978846
    %v123 = vtanh.pop %v121
    %v124 = vtanh.pop %v122
    %v125 = vadd.f32 %v123, 1.0
    %v126 = vadd.f32 %v124, 1.0
    %v127 = vmul.f32 %v111, %v125
    %v128 = vmul.f32 %v112, %v126
    %v129 = vpack.c.bf16 %v128, %v127
    %v131 = vunpack.c.l.b16 %v129
    %v132 = vunpack.c.h.b16 %v129
    %v133 = vpack.c.b16 %v131, %v131
    %v134 = vpack.c.b16 %v132, %v132
    %vm137 = vcmask 519168
    %138 = vst.msk [vmem:[%s3] sm:$0xf] %vm137, %v133
    %139 = vst.msk [vmem:[%s3 + $0x4] sm:$0xf] %vm137, %v134
  $region21: #{vace_wan_attention_block_forward.31} parent=0 // pred_fallthru
    _
  // Predicated region
  $region22: #{vace_wan_attention_block_forward.31} parent=0 // pred_check
    _
  $region23: #{vace_wan_attention_block_forward.31} parent=0 // pred_check_branch
    %141 = sbr.rel (0) target = $region25
  $region24: #{vace_wan_attention_block_forward.31} parent=0 // pred_region
    _
  $region25: #{vace_wan_attention_block_forward.31} parent=0 // pred_fallthru
    _
  // Predicated region
  $region26: #{vace_wan_attention_block_forward.31} parent=0 // pred_check
    _
  $region27: #{vace_wan_attention_block_forward.31} parent=0 // pred_check_branch
    %143 = sbr.rel (0) target = $region29
  $region28: #{vace_wan_attention_block_forward.31} parent=0 // pred_region
    _
  $region29: #{vace_wan_attention_block_forward.31} parent=0 // pred_fallthru
    _

// kernel: vace_wan_attention_block_forward.32
$region0: #{vace_wan_attention_block_forward.32}
  #allocation0 [shape = 'u32[]', space=smem, size = 0x4, offset = 0x4, fixed_abs, tag = 'smem constant byte address 0x4 - core index']
  #allocation1 [shape = 'u32[144,128]{1,0:T(1,128)}', space=vmem, size = 0x12000, scoped, tag = 'internal scratch']
  #allocation2 [shape = 'f32[8,32]{1,0:T(8,128)}', space=vmem, size = 0x1000, scoped, tag = 'scratch operand']
  %s0 = inlined_call_operand.vmem [shape: bf16[2,8,64], index: 0, kind: input, shape index: {}]
  %s1 = inlined_call_operand.vmem [shape: bf16[64,32], index: 1, kind: input, shape index: {}]
  %s2 = inlined_call_operand.vmem [shape: f32[1,32], index: 2, kind: input, shape index: {}]
  %s3 = inlined_call_operand.vmem [shape: f32[2,8,32], index: 3, kind: input, shape index: {}]
  %s4 = inlined_call_operand.vmem [shape: f32[2,1,32], index: 4, kind: input, shape index: {}]
  %s5 = inlined_call_operand.vmem [shape: f32[2,8,32], index: 5, kind: output, shape index: {}]
  %s6 = sld [smem:[#allocation0]]
  $region61: #{vace_wan_attention_block_forward.32} parent=0
    _
  %s8 = ssub.s32 1, %s6
  %s9 = scalar_select 0, %s8, %s6
  loop: start=0, step=1, limit=4
  $region2: #{vace_wan_attention_block_forward.32} parent=0 // loop_pre_header
    _
  $region3: #{vace_wan_attention_block_forward.32} parent=0 // loop_header
    %s11 = sphi 0, %s15
    %p12 = scmp.ge.s32.totalorder %s11, 4
    %s18 = sphi 0, %s44
    %s19 = sphi 0, %s40
    %s20 = sphi 0, %s36
    %s21 = sphi 0, %s32
    %s22 = sphi 0, %s18
    %s23 = sphi 0, %s19
    %s24 = sphi 0, %s20
    %s25 = sphi 0, %s21
    %s26 = sphi 0, %s22
    %s27 = sphi 0, %s23
    %s28 = sphi 0, %s24
    %s29 = sphi 0, %s25
    %s51 = sphi 0, %s53
    %s54 = sphi 0, %s51
    %s55 = sphi 0, %s54
    %s71 = sphi 0, %s55
    %s79 = sphi 0, %s81
    %s82 = sphi 0, %s79
    %s83 = sphi 0, %s82
    %s99 = sphi 0, %s83
    %s105 = sphi 0, %s107
    %s108 = sphi 0, %s105
    %s109 = sphi 0, %s108
    %s125 = sphi 0, %s109
    %s135 = sphi 0, %s137
    %s138 = sphi 0, %s135
    %s139 = sphi 0, %s138
    %s155 = sphi 0, %s139
    %s163 = sphi 0, %s165
    %s166 = sphi 0, %s163
    %s167 = sphi 0, %s166
    %s183 = sphi 0, %s167
    %s193 = sphi 0, %s195
    %s196 = sphi 0, %s193
    %s197 = sphi 0, %s196
    %s213 = sphi 0, %s197
  $region4: #{vace_wan_attention_block_forward.32} parent=0 // loop_header_branch
    %14 = sbr.rel (%p12) target = $region8
  $region5: #{vace_wan_attention_block_forward.32} parent=0 // loop_body
    %s16 = ssub.s32 %s11, 1
    %s17 = ssub.s32 %s11, 2
    %s30 = sadd.s32 1, %s21
    %p31 = scmp.ge.s32.totalorder %s30, 1
    %s32 = scalar_select %p31, 0, %s30
    %s33 = sadd.s32 1, %s20
    %s34 = scalar_select %p31, %s33, %s20
    %p35 = scmp.ge.s32.totalorder %s34, 1
    %s36 = scalar_select %p35, 0, %s34
    %s37 = sadd.s32 1, %s19
    %s38 = scalar_select %p35, %s37, %s19
    %p39 = scmp.ge.s32.totalorder %s38, 1
    %s40 = scalar_select %p39, 0, %s38
    %s41 = sadd.s32 1, %s18
    %s42 = scalar_select %p39, %s41, %s18
    %p43 = scmp.ge.s32.totalorder %s42, 2
    %s44 = scalar_select %p43, 0, %s42
    %s45 = ssub.s32 %s18, %s44
    %s46 = ssub.s32 %s19, %s40
    %s47 = sor.u32 %s45, %s46
    %s48 = ssub.s32 %s21, %s32
    %s49 = sor.u32 %s47, %s48
    %p50 = scmp.eq.s32.totalorder %s49, 0
    %s52 = sadd.s32 %s51, 1
    %s53 = scalar_select %p50, %s51, %s52
    %p56 = pneg %p50
    %p57 = scmp.eq.s32.totalorder %s11, 1
    %p58 = por %p56, %p57
    %p59 = scmp.ne.s32.totalorder %s51, %s54
    %p60 = scmp.eq.s32.totalorder %s11, 0
    %p61 = por %p59, %p60
    %p62 = scmp.ne.s32.totalorder %s51, %s54
    %p63 = scmp.eq.s32.totalorder %s16, 1
    %p64 = por %p62, %p63
    %p65 = scmp.ne.s32.totalorder %s54, %s55
    %p66 = scmp.eq.s32.totalorder %s16, 0
    %p67 = por %p65, %p66
    %p68 = scmp.ne.s32.totalorder %s54, %s55
    %p69 = scmp.eq.s32.totalorder %s17, 1
    %p70 = por %p68, %p69
    %p72 = scmp.ne.s32.totalorder %s55, %s71
    %p73 = scmp.eq.s32.totalorder %s17, 0
    %p74 = por %p72, %p73
    %s75 = ssub.s32 %s21, %s32
    %s76 = ssub.s32 %s20, %s36
    %s77 = sor.u32 %s75, %s76
    %p78 = scmp.eq.s32.totalorder %s77, 0
    %s80 = sadd.s32 %s79, 1
    %s81 = scalar_select %p78, %s79, %s80
    %p84 = pneg %p78
    %p85 = scmp.eq.s32.totalorder %s11, 1
    %p86 = por %p84, %p85
    %p87 = scmp.ne.s32.totalorder %s79, %s82
    %p88 = scmp.eq.s32.totalorder %s11, 0
    %p89 = por %p87, %p88
    %p90 = scmp.ne.s32.totalorder %s79, %s82
    %p91 = scmp.eq.s32.totalorder %s16, 1
    %p92 = por %p90, %p91
    %p93 = scmp.ne.s32.totalorder %s82, %s83
    %p94 = scmp.eq.s32.totalorder %s16, 0
    %p95 = por %p93, %p94
    %p96 = scmp.ne.s32.totalorder %s82, %s83
    %p97 = scmp.eq.s32.totalorder %s17, 1
    %p98 = por %p96, %p97
    %p100 = scmp.ne.s32.totalorder %s83, %s99
    %p101 = scmp.eq.s32.totalorder %s17, 0
    %p102 = por %p100, %p101
    %s103 = ssub.s32 %s20, %s36
    %p104 = scmp.eq.s32.totalorder %s103, 0
    %s106 = sadd.s32 %s105, 1
    %s107 = scalar_select %p104, %s105, %s106
    %p110 = pneg %p104
    %p111 = scmp.eq.s32.totalorder %s11, 1
    %p112 = por %p110, %p111
    %p113 = scmp.ne.s32.totalorder %s105, %s108
    %p114 = scmp.eq.s32.totalorder %s11, 0
    %p115 = por %p113, %p114
    %p116 = scmp.ne.s32.totalorder %s105, %s108
    %p117 = scmp.eq.s32.totalorder %s16, 1
    %p118 = por %p116, %p117
    %p119 = scmp.ne.s32.totalorder %s108, %s109
    %p120 = scmp.eq.s32.totalorder %s16, 0
    %p121 = por %p119, %p120
    %p122 = scmp.ne.s32.totalorder %s108, %s109
    %p123 = scmp.eq.s32.totalorder %s17, 1
    %p124 = por %p122, %p123
    %p126 = scmp.ne.s32.totalorder %s109, %s125
    %p127 = scmp.eq.s32.totalorder %s17, 0
    %p128 = por %p126, %p127
    %s129 = ssub.s32 %s18, %s44
    %s130 = ssub.s32 %s19, %s40
    %s131 = sor.u32 %s129, %s130
    %s132 = ssub.s32 %s20, %s36
    %s133 = sor.u32 %s131, %s132
    %p134 = scmp.eq.s32.totalorder %s133, 0
    %s136 = sadd.s32 %s135, 1
    %s137 = scalar_select %p134, %s135, %s136
    %p140 = pneg %p134
    %p141 = scmp.eq.s32.totalorder %s11, 1
    %p142 = por %p140, %p141
    %p143 = scmp.ne.s32.totalorder %s135, %s138
    %p144 = scmp.eq.s32.totalorder %s11, 0
    %p145 = por %p143, %p144
    %p146 = scmp.ne.s32.totalorder %s135, %s138
    %p147 = scmp.eq.s32.totalorder %s16, 1
    %p148 = por %p146, %p147
    %p149 = scmp.ne.s32.totalorder %s138, %s139
    %p150 = scmp.eq.s32.totalorder %s16, 0
    %p151 = por %p149, %p150
    %p152 = scmp.ne.s32.totalorder %s138, %s139
    %p153 = scmp.eq.s32.totalorder %s17, 1
    %p154 = por %p152, %p153
    %p156 = scmp.ne.s32.totalorder %s139, %s155
    %p157 = scmp.eq.s32.totalorder %s17, 0
    %p158 = por %p156, %p157
    %s159 = ssub.s32 %s18, %s44
    %s160 = ssub.s32 %s20, %s36
    %s161 = sor.u32 %s159, %s160
    %p162 = scmp.eq.s32.totalorder %s161, 0
    %s164 = sadd.s32 %s163, 1
    %s165 = scalar_select %p162, %s163, %s164
    %p168 = pneg %p162
    %p169 = scmp.eq.s32.totalorder %s11, 1
    %p170 = por %p168, %p169
    %p171 = scmp.ne.s32.totalorder %s163, %s166
    %p172 = scmp.eq.s32.totalorder %s11, 0
    %p173 = por %p171, %p172
    %p174 = scmp.ne.s32.totalorder %s163, %s166
    %p175 = scmp.eq.s32.totalorder %s16, 1
    %p176 = por %p174, %p175
    %p177 = scmp.ne.s32.totalorder %s166, %s167
    %p178 = scmp.eq.s32.totalorder %s16, 0
    %p179 = por %p177, %p178
    %p180 = scmp.ne.s32.totalorder %s166, %s167
    %p181 = scmp.eq.s32.totalorder %s17, 1
    %p182 = por %p180, %p181
    %p184 = scmp.ne.s32.totalorder %s167, %s183
    %p185 = scmp.eq.s32.totalorder %s17, 0
    %p186 = por %p184, %p185
    %s187 = ssub.s32 %s18, %s44
    %s188 = ssub.s32 %s19, %s40
    %s189 = sor.u32 %s187, %s188
    %s190 = ssub.s32 %s20, %s36
    %s191 = sor.u32 %s189, %s190
    %p192 = scmp.eq.s32.totalorder %s191, 0
    %s194 = sadd.s32 %s193, 1
    %s195 = scalar_select %p192, %s193, %s194
    %p198 = pneg %p192
    %p199 = scmp.eq.s32.totalorder %s11, 1
    %p200 = por %p198, %p199
    %p201 = scmp.ne.s32.totalorder %s193, %s196
    %p202 = scmp.eq.s32.totalorder %s11, 0
    %p203 = por %p201, %p202
    %p204 = scmp.ne.s32.totalorder %s193, %s196
    %p205 = scmp.eq.s32.totalorder %s16, 1
    %p206 = por %p204, %p205
    %p207 = scmp.ne.s32.totalorder %s196, %s197
    %p208 = scmp.eq.s32.totalorder %s16, 0
    %p209 = por %p207, %p208
    %p210 = scmp.ne.s32.totalorder %s196, %s197
    %p211 = scmp.eq.s32.totalorder %s17, 1
    %p212 = por %p210, %p211
    %p214 = scmp.ne.s32.totalorder %s197, %s213
    %p215 = scmp.eq.s32.totalorder %s17, 0
    %p216 = por %p214, %p215
    %p217 = scmp.le.s32.totalorder 1, %s11
    %p218 = scmp.lt.s32.totalorder %s11, 3
    %p219 = pnand %p217, %p218
    %p220 = pneg %p219
    // Predicated region
    $region9: #{vace_wan_attention_block_forward.32} parent=5 // pred_check
      _
    $region10: #{vace_wan_attention_block_forward.32} parent=5 // pred_check_branch
      %222 = sbr.rel (%p219) target = $region12
    $region11: #{vace_wan_attention_block_forward.32} parent=5 // pred_region
      %s223 = ssub.s32 %s11, 1
      // Predicated region
      $region13: #{vace_wan_attention_block_forward.32} parent=11 // pred_check
        %p224 = pneg %p95
      $region14: #{vace_wan_attention_block_forward.32} parent=11 // pred_check_branch
        %226 = sbr.rel (%p224) target = $region16
      $region15: #{vace_wan_attention_block_forward.32} parent=11 // pred_region
        %s227 = smul.u32 8, %s25
        %p228 = scmp.lt.s32.totalorder %s227, 7
        %s229 = scalar_select %p228, %s227, 7
        %p230 = scmp.lt.s32.totalorder %s24, 0
        %s231 = scalar_select %p230, %s24, 0
        %s232 = sadd.s32 %s231, %s229
        %s233 = smul.addr %s232, 4
        %s234 = scalar_lea.vmem %s1, %s233
        %s235 = smul.u32 8, %s25
      $region16: #{vace_wan_attention_block_forward.32} parent=11 // pred_fallthru
        _
      // Predicated region
      $region17: #{vace_wan_attention_block_forward.32} parent=11 // pred_check
        %p236 = pneg %p121
      $region18: #{vace_wan_attention_block_forward.32} parent=11 // pred_check_branch
        %238 = sbr.rel (%p236) target = $region20
      $region19: #{vace_wan_attention_block_forward.32} parent=11 // pred_region
        %p239 = scmp.lt.s32.totalorder %s24, 0
        %s240 = scalar_select %p239, %s24, 0
        %s241 = scalar_lea.vmem %s2, %s240
      $region20: #{vace_wan_attention_block_forward.32} parent=11 // pred_fallthru
        _
    $region12: #{vace_wan_attention_block_forward.32} parent=5 // pred_fallthru
      _
    %p242 = scmp.lt.s32.totalorder %s11, 2
    // Predicated region
    $region21: #{vace_wan_attention_block_forward.32} parent=5 // pred_check
      %p243 = pneg %p242
    $region22: #{vace_wan_attention_block_forward.32} parent=5 // pred_check_branch
      %245 = sbr.rel (%p243) target = $region24
    $region23: #{vace_wan_attention_block_forward.32} parent=5 // pred_region
      // Predicated region
      $region25: #{vace_wan_attention_block_forward.32} parent=23 // pred_check
        %p246 = pneg %p61
      $region26: #{vace_wan_attention_block_forward.32} parent=23 // pred_check_branch
        %248 = sbr.rel (%p246) target = $region28
      $region27: #{vace_wan_attention_block_forward.32} parent=23 // pred_region
        %p249 = scmp.lt.s32.totalorder %s18, 1
        %s250 = scalar_select %p249, %s18, 1
        %p251 = scmp.lt.s32.totalorder %s19, 0
        %s252 = scalar_select %p251, %s19, 0
        %p253 = scmp.lt.s32.totalorder %s21, 0
        %s254 = scalar_select %p253, %s21, 0
        %s255 = sadd.s32 %s254, %s252
        %s256 = sadd.s32 %s255, %s250
        %s257 = smul.addr %s256, 4
        %s258 = scalar_lea.vmem %s0, %s257
      $region28: #{vace_wan_attention_block_forward.32} parent=23 // pred_fallthru
        _
      // Predicated region
      $region29: #{vace_wan_attention_block_forward.32} parent=23 // pred_check
        %p259 = pneg %p145
      $region30: #{vace_wan_attention_block_forward.32} parent=23 // pred_check_branch
        %261 = sbr.rel (%p259) target = $region32
      $region31: #{vace_wan_attention_block_forward.32} parent=23 // pred_region
        %p262 = scmp.lt.s32.totalorder %s18, 1
        %s263 = scalar_select %p262, %s18, 1
        %p264 = scmp.lt.s32.totalorder %s19, 0
        %s265 = scalar_select %p264, %s19, 0
        %p266 = scmp.lt.s32.totalorder %s20, 0
        %s267 = scalar_select %p266, %s20, 0
        %s268 = sadd.s32 %s267, %s265
        %s269 = sadd.s32 %s268, %s263
        %s270 = smul.addr %s269, 8
        %s271 = scalar_lea.vmem %s3, %s270
      $region32: #{vace_wan_attention_block_forward.32} parent=23 // pred_fallthru
        _
      // Predicated region
      $region33: #{vace_wan_attention_block_forward.32} parent=23 // pred_check
        %p272 = pneg %p173
      $region34: #{vace_wan_attention_block_forward.32} parent=23 // pred_check_branch
        %274 = sbr.rel (%p272) target = $region36
      $region35: #{vace_wan_attention_block_forward.32} parent=23 // pred_region
        %p275 = scmp.lt.s32.totalorder %s18, 1
        %s276 = scalar_select %p275, %s18, 1
        %p277 = scmp.lt.s32.totalorder %s20, 0
        %s278 = scalar_select %p277, %s20, 0
        %s279 = sadd.s32 %s278, %s276
        %s280 = scalar_lea.vmem %s4, %s279
      $region36: #{vace_wan_attention_block_forward.32} parent=23 // pred_fallthru
        _
    $region24: #{vace_wan_attention_block_forward.32} parent=5 // pred_fallthru
      _
    %p281 = scmp.le.s32.totalorder 1, %s11
    %p282 = scmp.lt.s32.totalorder %s11, 3
    %p283 = pnand %p281, %p282
    %p284 = pneg %p283
    // Predicated region
    $region37: #{vace_wan_attention_block_forward.32} parent=5 // pred_check
      _
    $region38: #{vace_wan_attention_block_forward.32} parent=5 // pred_check_branch
      %286 = sbr.rel (%p283) target = $region40
    $region39: #{vace_wan_attention_block_forward.32} parent=5 // pred_region
      %s287 = ssub.s32 %s11, 1
      %p288 = scmp.lt.s32.totalorder %s22, 1
      %s289 = scalar_select %p288, %s22, 1
      %p290 = scmp.lt.s32.totalorder %s23, 0
      %s291 = scalar_select %p290, %s23, 0
      %p292 = scmp.lt.s32.totalorder %s25, 0
      %s293 = scalar_select %p292, %s25, 0
      %s294 = sadd.s32 %s293, %s291
      %s295 = sadd.s32 %s294, %s289
      %s296 = smul.addr %s295, 4
      %s297 = scalar_lea.vmem %s0, %s296
      %p298 = pneg %p67
      %p299 = pneg %p64
      %s300 = smul.u32 8, %s25
      %p301 = scmp.lt.s32.totalorder %s300, 7
      %s302 = scalar_select %p301, %s300, 7
      %p303 = scmp.lt.s32.totalorder %s24, 0
      %s304 = scalar_select %p303, %s24, 0
      %s305 = sadd.s32 %s304, %s302
      %s306 = smul.addr %s305, 4
      %s307 = scalar_lea.vmem %s1, %s306
      %p308 = pneg %p95
      %p309 = pneg %p92
      %p310 = scmp.lt.s32.totalorder %s24, 0
      %s311 = scalar_select %p310, %s24, 0
      %s312 = scalar_lea.vmem %s2, %s311
      %p313 = pneg %p121
      %p314 = pneg %p118
      %p315 = scmp.lt.s32.totalorder %s22, 1
      %s316 = scalar_select %p315, %s22, 1
      %p317 = scmp.lt.s32.totalorder %s23, 0
      %s318 = scalar_select %p317, %s23, 0
      %p319 = scmp.lt.s32.totalorder %s24, 0
      %s320 = scalar_select %p319, %s24, 0
      %s321 = sadd.s32 %s320, %s318
      %s322 = sadd.s32 %s321, %s316
      %s323 = smul.addr %s322, 8
      %s324 = scalar_lea.vmem %s3, %s323
      %p325 = pneg %p151
      %p326 = pneg %p148
      %p327 = scmp.lt.s32.totalorder %s22, 1
      %s328 = scalar_select %p327, %s22, 1
      %p329 = scmp.lt.s32.totalorder %s24, 0
      %s330 = scalar_select %p329, %s24, 0
      %s331 = sadd.s32 %s330, %s328
      %s332 = scalar_lea.vmem %s4, %s331
      %p333 = pneg %p179
      %p334 = pneg %p176
      %p335 = pneg %p209
      %p336 = pneg %p206
      %p337 = scmp.lt.s32.totalorder %s22, 1
      %s338 = scalar_select %p337, %s22, 1
      %p339 = scmp.lt.s32.totalorder %s23, 0
      %s340 = scalar_select %p339, %s23, 0
      %p341 = scmp.lt.s32.totalorder %s24, 0
      %s342 = scalar_select %p341, %s24, 0
      %s343 = sadd.s32 %s342, %s340
      %s344 = sadd.s32 %s343, %s338
      %s345 = smul.addr %s344, 8
      %s346 = scalar_lea.vmem %s5, %s345
      %p347 = scmp.lt.s32.totalorder %s22, 1
      %s348 = scalar_select %p347, %s22, 1
      %p349 = scmp.lt.s32.totalorder %s23, 0
      %s350 = scalar_select %p349, %s23, 0
      %p351 = scmp.lt.s32.totalorder %s25, 0
      %s352 = scalar_select %p351, %s25, 0
      %s353 = sadd.s32 %s352, %s350
      %s354 = sadd.s32 %s353, %s348
      %s355 = smul.addr %s354, 4
      %s356 = scalar_lea.vmem %s0, %s355
      %s357 = smul.u32 8, %s25
      %p358 = scmp.lt.s32.totalorder %s357, 7
      %s359 = scalar_select %p358, %s357, 7
      %p360 = scmp.lt.s32.totalorder %s24, 0
      %s361 = scalar_select %p360, %s24, 0
      %s362 = sadd.s32 %s361, %s359
      %s363 = smul.addr %s362, 4
      %s364 = scalar_lea.vmem %s1, %s363
      %s365 = smul.u32 8, %s25
      %p366 = scmp.lt.s32.totalorder %s24, 0
      %s367 = scalar_select %p366, %s24, 0
      %s368 = scalar_lea.vmem %s2, %s367
      %p369 = scmp.lt.s32.totalorder %s22, 1
      %s370 = scalar_select %p369, %s22, 1
      %p371 = scmp.lt.s32.totalorder %s23, 0
      %s372 = scalar_select %p371, %s23, 0
      %p373 = scmp.lt.s32.totalorder %s24, 0
      %s374 = scalar_select %p373, %s24, 0
      %s375 = sadd.s32 %s374, %s372
      %s376 = sadd.s32 %s375, %s370
      %s377 = smul.addr %s376, 8
      %s378 = scalar_lea.vmem %s3, %s377
      %p379 = scmp.lt.s32.totalorder %s22, 1
      %s380 = scalar_select %p379, %s22, 1
      %p381 = scmp.lt.s32.totalorder %s24, 0
      %s382 = scalar_select %p381, %s24, 0
      %s383 = sadd.s32 %s382, %s380
      %s384 = scalar_lea.vmem %s4, %s383
      %p385 = scmp.lt.s32.totalorder %s22, 1
      %s386 = scalar_select %p385, %s22, 1
      %p387 = scmp.lt.s32.totalorder %s23, 0
      %s388 = scalar_select %p387, %s23, 0
      %p389 = scmp.lt.s32.totalorder %s24, 0
      %s390 = scalar_select %p389, %s24, 0
      %s391 = sadd.s32 %s390, %s388
      %s392 = sadd.s32 %s391, %s386
      %s393 = smul.addr %s392, 8
      %s394 = scalar_lea.vmem %s5, %s393
      %p396 = scmp.eq.s32.totalorder %s25, 0
      // Predicated region
      $region41: #{vace_wan_attention_block_forward.32} parent=39 // pred_check
        %p397 = pneg %p396
      $region42: #{vace_wan_attention_block_forward.32} parent=39 // pred_check_branch
        %399 = sbr.rel (%p397) target = $region44
      $region43: #{vace_wan_attention_block_forward.32} parent=39 // pred_region
        %vm400 = vcmask 261120
        %401 = vst.msk [vmem:[#allocation2] sm:$0xff] %vm400, 0.0
      $region44: #{vace_wan_attention_block_forward.32} parent=39 // pred_fallthru
        _
      %v402 = vld [vmem:[#allocation2] sm:$0xff]
      %v403 = vld [vmem:[%s356] sm:$0xf]
      %v404 = vld [vmem:[%s364] sm:$0xf]
      %v405 = vld [vmem:[%s364 + $0x4] sm:$0xf]
      %v406 = vld [vmem:[%s364 + $0x8] sm:$0xf]
      %v407 = vld [vmem:[%s364 + $0xc] sm:$0xf]
      %v408 = vld [vmem:[%s364 + $0x10] sm:$0xf]
      %v409 = vld [vmem:[%s364 + $0x14] sm:$0xf]
      %v410 = vld [vmem:[%s364 + $0x18] sm:$0xf]
      %v411 = vld [vmem:[%s364 + $0x1c] sm:$0xf]
      %v420 = vunpack.c.l.b16 %v404
      %v421 = vunpack.c.l.b16 %v405
      %v422 = vunpack.c.l.b16 %v406
      %v423 = vunpack.c.l.b16 %v407
      %v424 = vunpack.c.l.b16 %v408
      %v425 = vunpack.c.l.b16 %v409
      %v426 = vunpack.c.l.b16 %v410
      %v427 = vunpack.c.l.b16 %v411
      %v428 = vpack.c.b16 %v421, %v420
      %v429 = vpack.c.b16 %v423, %v422
      %v430 = vpack.c.b16 %v425, %v424
      %v431 = vpack.c.b16 %v427, %v426
      %vm436 = vcmask 523264
      %v438 = vsel %vm436, %v403, 0
      %440 = vmatprep.subr.bf16.mxu0 0
      %441 = vmatpush1.bf16.msra.mxu0 %v428
      %442 = vmatprep.subr.bf16.mxu0 0
      %443 = vmatpush1.bf16.msra.mxu0 %v429
      %444 = vmatprep.subr.bf16.mxu0 0
      %445 = vmatpush1.bf16.msra.mxu0 %v430
      %446 = vmatprep.subr.bf16.mxu0 0
      %447 = vmatpush1.bf16.msra.mxu0 %v431
      %448 = vmatprep.subr.bf16.mxu0 0
      %449 = vmatpush1.bf16.msra.mxu0 0
      %450 = vmatprep.subr.bf16.mxu0 0
      %451 = vmatpush1.bf16.msra.mxu0 0
      %452 = vmatprep.subr.bf16.mxu0 0
      %453 = vmatpush1.bf16.msra.mxu0 0
      %454 = vmatprep.subr.bf16.mxu0 0
      %455 = vmatpush1.bf16.msra.mxu0 0
      %456 = vmatprep.subr.bf16.mxu0 0
      %457 = vmatpush1.bf16.msra.mxu0 0
      %458 = vmatprep.subr.bf16.mxu0 0
      %459 = vmatpush1.bf16.msra.mxu0 0
      %460 = vmatprep.subr.bf16.mxu0 0
      %461 = vmatpush1.bf16.msra.mxu0 0
      %462 = vmatprep.subr.bf16.mxu0 0
      %463 = vmatpush1.bf16.msra.mxu0 0
      %464 = vmatprep.subr.bf16.mxu0 0
      %465 = vmatpush1.bf16.msra.mxu0 0
      %466 = vmatprep.subr.bf16.mxu0 0
      %467 = vmatpush1.bf16.msra.mxu0 0
      %468 = vmatprep.subr.bf16.mxu0 0
      %469 = vmatpush1.bf16.msra.mxu0 0
      %470 = vmatprep.subr.bf16.mxu0 0
      %471 = vmatpush1.bf16.msra.mxu0 0
      %472 = vmatprep.mubr.bf16.mxu0 0
      %473 = vmatmul.mubr.bf16.gmra.mrb[0].mxu0 %v438
      %v474 = vpop.f32.mrb[0].mxu0
      %v475 = vadd.f32 0.0, %v474
      %v476 = vpop.f32.mrb[0].mxu0
      %v477 = vpop.f32.mrb[0].mxu0
      %v478 = vpop.f32.mrb[0].mxu0
      %479 = vdwg.mxu0
      %v480 = vadd.f32 %v402, %v475
      %vm481 = vcmask 261120
      %482 = vst.msk [vmem:[#allocation2] sm:$0xff] %vm481, %v480
      // Predicated region
      $region45: #{vace_wan_attention_block_forward.32} parent=39 // pred_check
        %p483 = pneg %p396
      $region46: #{vace_wan_attention_block_forward.32} parent=39 // pred_check_branch
        %485 = sbr.rel (%p483) target = $region48
      $region47: #{vace_wan_attention_block_forward.32} parent=39 // pred_region
        %v486 = vld [vmem:[#allocation2] sm:$0xff]
        %v487 = vld [vmem:[%s368] sm:$0x1]
        %v489 = vlaneseq
        %v490 = vshrl.u32 %v489, 7
        %v491 = vsub.s32 0, %v490
        %v492 = vrot.slane %v487, %v491
        %v494 = vadd.f32 %v486, %v492
        %v495 = vld [vmem:[%s384] sm:$0x1]
        %v497 = vlaneseq
        %v498 = vshrl.u32 %v497, 7
        %v499 = vsub.s32 0, %v498
        %v500 = vrot.slane %v495, %v499
        %v502 = vmul.f32 %v494, %v500
        %v503 = vld [vmem:[%s378] sm:$0xff]
        %v504 = vadd.f32 %v503, %v502
        %505 = vst.msk [vmem:[%s394] sm:$0xff] %vm481, %v504
      $region48: #{vace_wan_attention_block_forward.32} parent=39 // pred_fallthru
        _
      %p506 = scmp.lt.s32.totalorder %s22, 1
      %s507 = scalar_select %p506, %s22, 1
      %p508 = scmp.lt.s32.totalorder %s23, 0
      %s509 = scalar_select %p508, %s23, 0
      %p510 = scmp.lt.s32.totalorder %s24, 0
      %s511 = scalar_select %p510, %s24, 0
      %s512 = sadd.s32 %s511, %s509
      %s513 = sadd.s32 %s512, %s507
      %s514 = smul.addr %s513, 8
      %s515 = scalar_lea.vmem %s5, %s514
      // Predicated region
      $region49: #{vace_wan_attention_block_forward.32} parent=39 // pred_check
        %p516 = pneg %p206
      $region50: #{vace_wan_attention_block_forward.32} parent=39 // pred_check_branch
        %518 = sbr.rel (%p516) target = $region52
      $region51: #{vace_wan_attention_block_forward.32} parent=39 // pred_region
        _
      $region52: #{vace_wan_attention_block_forward.32} parent=39 // pred_fallthru
        _
    $region40: #{vace_wan_attention_block_forward.32} parent=5 // pred_fallthru
      _
    %p519 = scmp.le.s32.totalorder 2, %s11
    // Predicated region
    $region53: #{vace_wan_attention_block_forward.32} parent=5 // pred_check
      %p520 = pneg %p519
    $region54: #{vace_wan_attention_block_forward.32} parent=5 // pred_check_branch
      %522 = sbr.rel (%p520) target = $region56
    $region55: #{vace_wan_attention_block_forward.32} parent=5 // pred_region
      %s523 = ssub.s32 %s11, 2
      // Predicated region
      $region57: #{vace_wan_attention_block_forward.32} parent=55 // pred_check
        %p524 = pneg %p212
      $region58: #{vace_wan_attention_block_forward.32} parent=55 // pred_check_branch
        %526 = sbr.rel (%p524) target = $region60
      $region59: #{vace_wan_attention_block_forward.32} parent=55 // pred_region
        %p527 = scmp.lt.s32.totalorder %s26, 1
        %s528 = scalar_select %p527, %s26, 1
        %p529 = scmp.lt.s32.totalorder %s27, 0
        %s530 = scalar_select %p529, %s27, 0
        %p531 = scmp.lt.s32.totalorder %s28, 0
        %s532 = scalar_select %p531, %s28, 0
        %s533 = sadd.s32 %s532, %s530
        %s534 = sadd.s32 %s533, %s528
        %s535 = smul.addr %s534, 8
        %s536 = scalar_lea.vmem %s5, %s535
      $region60: #{vace_wan_attention_block_forward.32} parent=55 // pred_fallthru
        _
    $region56: #{vace_wan_attention_block_forward.32} parent=5 // pred_fallthru
      _
  $region6: #{vace_wan_attention_block_forward.32} parent=0 // loop_footer
    %s15 = sadd.s32 1, %s11
  $region7: #{vace_wan_attention_block_forward.32} parent=0 // loop_footer_branch
    %10 = sbr.rel target = $region3
  $region8: #{vace_wan_attention_block_forward.32} parent=0 // loop_exit
    _

// kernel: vace_wan_attention_block_forward.33
$region0: #{vace_wan_attention_block_forward.33}
  #allocation0 [shape = 'u32[]', space=smem, size = 0x4, offset = 0x4, fixed_abs, tag = 'smem constant byte address 0x4 - core index']
  #allocation1 [shape = 'u32[144,128]{1,0:T(1,128)}', space=vmem, size = 0x12000, scoped, tag = 'internal scratch']
  #allocation2 [shape = 'f32[16,32]{1,0:T(8,128)}', space=vmem, size = 0x2000, scoped, tag = 'scratch operand']
  %s0 = inlined_call_operand.vmem [shape: bf16[16,32], index: 0, kind: input, shape index: {}]
  %s1 = inlined_call_operand.vmem [shape: bf16[32,32], index: 1, kind: input, shape index: {}]
  %s2 = inlined_call_operand.vmem [shape: f32[1,32], index: 2, kind: input, shape index: {}]
  %s3 = inlined_call_operand.hbm [shape: f32[16,32], index: 3, kind: output, shape index: {}]
  %s4 = sld [smem:[#allocation0]]
  $region30: #{vace_wan_attention_block_forward.33} parent=0
    _
  %s6 = ssub.s32 1, %s4
  %s7 = scalar_select 0, %s6, %s4
  $region1: #{vace_wan_attention_block_forward.33} parent=0
    #allocation3 [shape = 'u8[8192]{0}', space=vmem, size = 0x2000, scoped, tag = 'output window, operand 0, single buffered']
    #allocation4 [shape = 's32[1]{0}', space=sflag, size = 0x4, scoped, tag = 'scoped memory for vace_wan_attention_block_forward.33']
    %8 = vsyncpa [#allocation4], 0
    // Predicated region
    $region2: #{vace_wan_attention_block_forward.33} parent=1 // pred_check
      _
    $region3: #{vace_wan_attention_block_forward.33} parent=1 // pred_check_branch
      %10 = sbr.rel (0) target = $region5
    $region4: #{vace_wan_attention_block_forward.33} parent=1 // pred_region
      _
    $region5: #{vace_wan_attention_block_forward.33} parent=1 // pred_fallthru
      _
    // Predicated region
    $region6: #{vace_wan_attention_block_forward.33} parent=1 // pred_check
      _
    $region7: #{vace_wan_attention_block_forward.33} parent=1 // pred_check_branch
      %12 = sbr.rel (0) target = $region9
    $region8: #{vace_wan_attention_block_forward.33} parent=1 // pred_region
      _
    $region9: #{vace_wan_attention_block_forward.33} parent=1 // pred_fallthru
      _
    // Predicated region
    $region10: #{vace_wan_attention_block_forward.33} parent=1 // pred_check
      _
    $region11: #{vace_wan_attention_block_forward.33} parent=1 // pred_check_branch
      %14 = sbr.rel (0) target = $region13
    $region12: #{vace_wan_attention_block_forward.33} parent=1 // pred_region
      _
    $region13: #{vace_wan_attention_block_forward.33} parent=1 // pred_fallthru
      _
    %p16 = scmp.eq.s32.totalorder 0, 0
    // Predicated region
    $region14: #{vace_wan_attention_block_forward.33} parent=1 // pred_check
      %p17 = pneg %p16
    $region15: #{vace_wan_attention_block_forward.33} parent=1 // pred_check_branch
      %19 = sbr.rel (%p17) target = $region17
    $region16: #{vace_wan_attention_block_forward.33} parent=1 // pred_region
      %vm20 = vcmask 261120
      %21 = vst.msk [vmem:[#allocation2] sm:$0xff] %vm20, 0.0
      %22 = vst.msk [vmem:[#allocation2 + $0x8] sm:$0xff] %vm20, 0.0
    $region17: #{vace_wan_attention_block_forward.33} parent=1 // pred_fallthru
      _
    %v23 = vld [vmem:[#allocation2] sm:$0xff]
    %v24 = vld [vmem:[#allocation2 + $0x8] sm:$0xff]
    %v25 = vld [vmem:[%s0] sm:$0xf]
    %v26 = vld [vmem:[%s0 + $0x4] sm:$0xf]
    %v27 = vld [vmem:[%s1] sm:$0xf]
    %v28 = vld [vmem:[%s1 + $0x4] sm:$0xf]
    %v29 = vld [vmem:[%s1 + $0x8] sm:$0xf]
    %v30 = vld [vmem:[%s1 + $0xc] sm:$0xf]
    %v33 = vunpack.c.l.b16 %v25
    %v34 = vunpack.c.l.b16 %v26
    %v35 = vpack.c.b16 %v34, %v33
    %v40 = vunpack.c.l.b16 %v27
    %v41 = vunpack.c.l.b16 %v28
    %v42 = vunpack.c.l.b16 %v29
    %v43 = vunpack.c.l.b16 %v30
    %v44 = vpack.c.b16 %v41, %v40
    %v45 = vpack.c.b16 %v43, %v42
    %vm48 = vcmask 261120
    %v50 = vsel %vm48, %v35, 0
    %52 = vmatprep.subr.bf16.mxu0 0
    %53 = vmatpush1.bf16.msra.mxu0 %v44
    %54 = vmatprep.subr.bf16.mxu0 0
    %55 = vmatpush1.bf16.msra.mxu0 %v45
    %56 = vmatprep.subr.bf16.mxu0 0
    %57 = vmatpush1.bf16.msra.mxu0 0
    %58 = vmatprep.subr.bf16.mxu0 0
    %59 = vmatpush1.bf16.msra.mxu0 0
    %60 = vmatprep.subr.bf16.mxu0 0
    %61 = vmatpush1.bf16.msra.mxu0 0
    %62 = vmatprep.subr.bf16.mxu0 0
    %63 = vmatpush1.bf16.msra.mxu0 0
    %64 = vmatprep.subr.bf16.mxu0 0
    %65 = vmatpush1.bf16.msra.mxu0 0
    %66 = vmatprep.subr.bf16.mxu0 0
    %67 = vmatpush1.bf16.msra.mxu0 0
    %68 = vmatprep.subr.bf16.mxu0 0
    %69 = vmatpush1.bf16.msra.mxu0 0
    %70 = vmatprep.subr.bf16.mxu0 0
    %71 = vmatpush1.bf16.msra.mxu0 0
    %72 = vmatprep.subr.bf16.mxu0 0
    %73 = vmatpush1.bf16.msra.mxu0 0
    %74 = vmatprep.subr.bf16.mxu0 0
    %75 = vmatpush1.bf16.msra.mxu0 0
    %76 = vmatprep.subr.bf16.mxu0 0
    %77 = vmatpush1.bf16.msra.mxu0 0
    %78 = vmatprep.subr.bf16.mxu0 0
    %79 = vmatpush1.bf16.msra.mxu0 0
    %80 = vmatprep.subr.bf16.mxu0 0
    %81 = vmatpush1.bf16.msra.mxu0 0
    %82 = vmatprep.subr.bf16.mxu0 0
    %83 = vmatpush1.bf16.msra.mxu0 0
    %84 = vmatprep.mubr.bf16.mxu0 0
    %85 = vmatmul.mubr.bf16.gmra.mrb[0].mxu0 %v50
    %v86 = vpop.f32.mrb[0].mxu0
    %v87 = vadd.f32 0.0, %v86
    %v88 = vpop.f32.mrb[0].mxu0
    %v89 = vpop.f32.mrb[0].mxu0
    %v90 = vadd.f32 0.0, %v89
    %v91 = vpop.f32.mrb[0].mxu0
    %92 = vdwg.mxu0
    %v93 = vadd.f32 %v23, %v87
    %v94 = vadd.f32 %v24, %v90
    %95 = vst.msk [vmem:[#allocation2] sm:$0xff] %vm48, %v93
    %96 = vst.msk [vmem:[#allocation2 + $0x8] sm:$0xff] %vm48, %v94
    // Predicated region
    $region18: #{vace_wan_attention_block_forward.33} parent=1 // pred_check
      %p97 = pneg %p16
    $region19: #{vace_wan_attention_block_forward.33} parent=1 // pred_check_branch
      %99 = sbr.rel (%p97) target = $region21
    $region20: #{vace_wan_attention_block_forward.33} parent=1 // pred_region
      %v100 = vld [vmem:[#allocation2] sm:$0xff]
      %v101 = vld [vmem:[#allocation2 + $0x8] sm:$0xff]
      %v102 = vld [vmem:[%s2] sm:$0x1]
      %v104 = vlaneseq
      %v105 = vshrl.u32 %v104, 7
      %v106 = vsub.s32 0, %v105
      %v107 = vrot.slane %v102, %v106
      %v109 = vadd.f32 %v100, %v107
      %v110 = vadd.f32 %v101, %v107
      %111 = vst.msk [vmem:[#allocation3] sm:$0xff] %vm48, %v109
      %112 = vst.msk [vmem:[#allocation3 + $0x8] sm:$0xff] %vm48, %v110
    $region21: #{vace_wan_attention_block_forward.33} parent=1 // pred_fallthru
      _
    // Predicated region
    $region22: #{vace_wan_attention_block_forward.33} parent=1 // pred_check
      _
    $region23: #{vace_wan_attention_block_forward.33} parent=1 // pred_check_branch
      %114 = sbr.rel (0) target = $region25
    $region24: #{vace_wan_attention_block_forward.33} parent=1 // pred_region
      %s116 = ssub.s32 256, 256
      %117 = vsyncadd [#allocation4], %s116
      %s118 = sshll.u32 [#allocation3], 4
      %s119 = int_to_ptr.vmem [resolvable:$true] %s118
      %124 = dma.vmem_to_hbm [thread:$0]  %s119, 256, %s3, [#allocation4], 128, 128, 8
    $region25: #{vace_wan_attention_block_forward.33} parent=1 // pred_fallthru
      _
    // Predicated region
    $region26: #{vace_wan_attention_block_forward.33} parent=1 // pred_check
      _
    $region27: #{vace_wan_attention_block_forward.33} parent=1 // pred_check_branch
      %126 = sbr.rel (0) target = $region29
    $region28: #{vace_wan_attention_block_forward.33} parent=1 // pred_region
      %127 = dma.done [#allocation4], 256
    $region29: #{vace_wan_attention_block_forward.33} parent=1 // pred_fallthru
      _
    %128 = vsyncpa [#allocation4], 1

</llo_original>
